<compile_context>
chip_gen: v7x
topology: tpu7x:2x2x1
jax: 0.10.0
libtpu: 0.0.40
codegen_flags: <defaults>
</compile_context>

<pallas_src>
import functools

import jax
import jax.numpy as jnp
from jax import lax
from jax.experimental import pallas as pl
from jax.experimental.pallas import tpu as pltpu


def _round_up(x, m):
    return (x + m - 1) // m * m


def _make_conv_relu_kernel(th, ch, wp2):
    """Build the kernel body for tile height `th`, chunk height `ch` and
    padded row width `wp2` (= W_pad + 2, a multiple of 8)."""
    rows_in = (th + 2) * wp2          # flat input rows DMA'd per H-tile
    row_stride = th * wp2             # flat-row stride between H-tiles

    def kernel(x_hbm, w_ref, b_ref, o_ref, xbuf, sem):
        # x_hbm : (N, (Hp+2)*wp2, Cin_p) bf16, HBM (pl.ANY) — flat padded rows
        # w_ref : (3, 3, Cin_p, Cout_p)  bf16, VMEM (constant index map)
        # b_ref : (1, Cout_p)            f32,  VMEM
        # o_ref : (1, TH*wp2, Cout_p)    bf16, VMEM (auto-pipelined out block)
        # xbuf  : (2, rows_in + 8, Cin_p) bf16 VMEM scratch (manual dbl buffer)
        # sem   : (2,) DMA semaphores
        n = pl.program_id(0)
        j = pl.program_id(1)
        num_j = pl.num_programs(1)
        cin_p = xbuf.shape[-1]

        def fetch(jj, slot):
            start = pl.multiple_of(jj * row_stride, 8)
            pltpu.make_async_copy(
                x_hbm.at[n, pl.ds(start, rows_in)],
                xbuf.at[slot, pl.ds(0, rows_in)],
                sem.at[slot],
            ).start()

        def wait(slot):
            # Shape-matched descriptor; only the semaphore/byte-count matter.
            pltpu.make_async_copy(
                x_hbm.at[n, pl.ds(0, rows_in)],
                xbuf.at[slot, pl.ds(0, rows_in)],
                sem.at[slot],
            ).wait()

        slot = j & 1

        @pl.when(j == 0)
        def _():
            # The 8 alignment-pad rows above rows_in are never DMA'd; they only
            # ever feed junk output columns, but zero them once for hygiene.
            zeros = jnp.zeros((8, cin_p), xbuf.dtype)
            xbuf[0, pl.ds(rows_in, 8), :] = zeros
            xbuf[1, pl.ds(rows_in, 8), :] = zeros
            fetch(0, 0)   # prime the per-image DMA chain

        wait(slot)

        # Prefetch the next H-tile of this image while computing this one.
        @pl.when(j + 1 < num_j)
        def _():
            fetch(j + 1, 1 - slot)

        # TODO(synk): cross-image prefetch of (n+1, tile 0) here would hide the
        # one exposed DMA per image, but the j==0 prime above cannot tell
        # whether a previous step on the *same core* already issued it (the
        # batch axis is megacore-"parallel"), so skipping the prime risks a
        # never-signalled semaphore; left out until a per-core first-step
        # predicate is available.

        xs = xbuf.at[slot]            # (rows_in + 8, Cin_p) view, current tile
        bias_row = b_ref[...]         # (1, Cout_p) f32, hoisted out of loops

        # Value-chain accumulation per output-row chunk: 9 MXU taps + bias +
        # ReLU feed ONE lane-dense bf16 store per chunk (no acc_ref RMW).
        for c0 in range(0, th, ch):            # static unroll, bounded <= 32
            base = c0 * wp2
            acc = None
            for kh in range(3):
                for kw in range(3):
                    # Plain contiguous row-range of the flat tile: output flat
                    # row r*wp2 + c reads input flat row (r+kh)*wp2 + (c+kw).
                    patch = xs[pl.ds(base + kh * wp2 + kw, ch * wp2), :]
                    tap = jnp.dot(patch, w_ref[kh, kw],
                                  preferred_element_type=jnp.float32)
                    acc = tap if acc is None else acc + tap
            y = jnp.maximum(acc + bias_row, 0.0)
            o_ref[0, pl.ds(base, ch * wp2), :] = y.astype(o_ref.dtype)

    return kernel


def _vmem_capacity_bytes():
    """Generation-aware VMEM capacity (128 MiB v5e/v6e, 64 MiB v7x)."""
    try:
        cap = int(getattr(pltpu.get_tpu_info(), "vmem_capacity_bytes", 0))
        if cap > 0:
            return cap
    except Exception:
        pass
    return 64 * 1024 * 1024   # conservative fallback (v7x per-core VMEM)


def _choose_tiles(h, wp2, cin_p, cout_p, budget_bytes):
    """Pick (tile_height TH, chunk_height CH) under a VMEM budget.

    CH targets ~512 flat rows per MXU chunk; TH is the largest multiple of CH
    whose working set (double-buffered bf16 input/out rows, resident weights,
    f32 chunk temporaries) fits the budget, capped so the static chunk-loop
    unroll stays bounded.
    """
    ch = max(1, min(h, max(1, 512 // wp2)))               # output rows / chunk
    per_row = (2 * wp2 * cin_p * 2 +                      # dbl-buf bf16 input
               2 * wp2 * cout_p * 2)                      # dbl-buf bf16 output
    fixed = (2 * (2 * wp2 + 8) * cin_p * 2 +              # halo + pad rows x2
             2 * 9 * cin_p * cout_p * 2 +                 # dbl-buf bf16 weights
             2 * cout_p * 4 +                             # bias
             4 * ch * wp2 * cout_p * 4)                   # f32 chunk temporaries
    avail = max(budget_bytes - fixed, per_row * ch)
    th = (avail // per_row) // ch * ch
    th = max(ch, min(th, _round_up(h, ch)))
    th = min(th, ch * 32)                                 # bound static unroll
    return th, ch


def conv_relu(x_nchw, weight, bias, *, tile_h=None):
    """ConvRelu forward matching nn.Conv2d(k=3, padding=1) + ReLU (NCHW).

    x_nchw: (N, Cin, H, W); weight: (Cout, Cin, 3, 3); bias: (Cout,).
    """
    n, cin, h, w = x_nchw.shape
    cout = weight.shape[0]
    cin_p = _round_up(cin, 128)     # lane-dense contraction dim
    cout_p = _round_up(cout, 128)   # lane-dense output dim (unmasked stores)

    # Pad width so the padded row (W + 2) is a sublane multiple: flat-layout
    # reshapes are free and every in-kernel slice/store start is 8-aligned.
    wp2 = _round_up(w + 2, 8)
    wp = wp2 - 2

    cap = _vmem_capacity_bytes()
    vmem_limit = min(int(cap * 0.85), 110 * 1024 * 1024)
    budget = int(vmem_limit * 0.70)     # headroom for Mosaic temporaries

    if tile_h is None:
        th, ch = _choose_tiles(h, wp2, cin_p, cout_p, budget)
    else:
        ch = max(1, min(tile_h, max(1, 512 // wp2)))
        th = max(ch, (tile_h // ch) * ch)

    # No TH collapse: pad H up to a multiple of TH (junk rows sliced off below).
    num_h_tiles = -(-h // th)
    hp = num_h_tiles * th

    # NCHW -> NHWC, bf16, halo + alignment pad, channels padded to 128 lanes,
    # then flattened to (rows, C).  TODO(synk): a full-network port keeps
    # activations in this layout between layers so these transposes/pads (full
    # HBM round trips) disappear.
    x = jnp.transpose(x_nchw, (0, 2, 3, 1)).astype(jnp.bfloat16)
    x = jnp.pad(x, ((0, 0),
                    (1, 1 + hp - h),          # top halo | bottom halo + H pad
                    (1, wp - w + 1),          # left halo | W pad + right halo
                    (0, cin_p - cin)))
    x = x.reshape(n, (hp + 2) * wp2, cin_p)

    # OIHW -> HWIO, bf16; zero-padded channels keep the convolution exact.
    wk = jnp.transpose(weight, (2, 3, 1, 0)).astype(jnp.bfloat16)
    wk = jnp.pad(wk, ((0, 0), (0, 0), (0, cin_p - cin), (0, cout_p - cout)))
    bk = jnp.pad(bias.astype(jnp.float32), (0, cout_p - cout)).reshape(1, cout_p)

    rows_in = (th + 2) * wp2
    kernel = _make_conv_relu_kernel(th, ch, wp2)

    out = pl.pallas_call(
        kernel,
        # bf16 output: halves HBM writeback and the double-buffered out block.
        out_shape=jax.ShapeDtypeStruct((n, hp * wp2, cout_p), jnp.bfloat16),
        grid_spec=pltpu.PrefetchScalarGridSpec(
            num_scalar_prefetch=0,
            grid=(n, num_h_tiles),
            in_specs=[
                pl.BlockSpec(memory_space=pl.ANY),   # input stays in HBM
                # Constant index maps -> fetched once, kept resident.
                # TODO(synk): pipeline_mode=pl.Buffered(1) would drop the 2nd
                # weight buffer; it is accounted for in _choose_tiles instead.
                pl.BlockSpec((3, 3, cin_p, cout_p), lambda b, j: (0, 0, 0, 0)),
                pl.BlockSpec((1, cout_p), lambda b, j: (0, 0)),
            ],
            out_specs=pl.BlockSpec((1, th * wp2, cout_p),
                                   lambda b, j: (b, j, 0)),
            scratch_shapes=[
                pltpu.VMEM((2, rows_in + 8, cin_p), jnp.bfloat16),
                pltpu.SemaphoreType.DMA((2,)),
            ],
        ),
        compiler_params=pltpu.CompilerParams(
            # Batch axis shardable across v7x's 2 TensorCores; the H-tile axis
            # carries the DMA prefetch chain so it stays "arbitrary".
            # TODO(synk): for N==1 on v7x, add a size-2 "parallel" H-split axis
            # (each half with its own DMA chain) so the 2nd core isn't idle.
            dimension_semantics=("parallel", "arbitrary"),
            vmem_limit_bytes=vmem_limit,
        ),
    )(x, wk, bk)

    # Drop junk columns/rows and channel padding, back to NCHW f32 for
    # nn.Conv2d parity (a full-network port would keep bf16 NHWC here).
    out = out.reshape(n, hp, wp2, cout_p)[:, :h, :w, :cout]
    return jnp.transpose(out, (0, 3, 1, 2)).astype(jnp.float32)

    # TODO(synk): for low-Cin decoder layers (Cin <= 64) pack K = 3*Cin (kh taps
    # concatenated) so one matmul covers all kh and the K lanes are full.


if __name__ == "__main__":
    # ConvRelu(in_channels=4, out_channels=8) at small test shapes.
    n, cin, h, w = 2, 4, 16, 16
    cout = 8

    key = jax.random.PRNGKey(0)
    kx, kw_, kb = jax.random.split(key, 3)
    x = jax.random.normal(kx, (n, cin, h, w), dtype=jnp.float32)
    weight = jax.random.normal(kw_, (cout, cin, 3, 3), dtype=jnp.float32) * 0.1
    bias = jax.random.normal(kb, (cout,), dtype=jnp.float32) * 0.1

    # Multi-tile run (exercises the halo / double-buffered DMA chain) and the
    # default single-tile run (heuristic TH covers H for this small input).
    out_tiled = jax.block_until_ready(conv_relu(x, weight, bias, tile_h=8))
    out_full = jax.block_until_ready(conv_relu(x, weight, bias))

    # Reference on the same bf16-quantised inputs (the kernel feeds the MXU
    # bf16, accumulates in f32 and writes bf16).
    xq = x.astype(jnp.bfloat16).astype(jnp.float32)
    wq = weight.astype(jnp.bfloat16).astype(jnp.float32)
    ref = lax.conv_general_dilated(
        xq, wq, window_strides=(1, 1), padding=((1, 1), (1, 1)),
        dimension_numbers=("NCHW", "OIHW", "NCHW"),
        precision=lax.Precision.HIGHEST)
    ref = jnp.maximum(ref + bias[None, :, None, None], 0.0)
    ref = jax.block_until_ready(ref)

    assert out_tiled.shape == (n, cout, h, w)
    assert out_full.shape == (n, cout, h, w)

    # Tolerance covers the bf16 rounding of the (O(1)-magnitude) kernel output.
    tol = 3e-2
    err_tiled = float(jnp.max(jnp.abs(out_tiled - ref)))
    err_full = float(jnp.max(jnp.abs(out_full - ref)))
    assert err_tiled < tol, f"tiled kernel mismatch vs reference: {err_tiled}"
    assert err_full < tol, f"full-tile kernel mismatch vs reference: {err_full}"

    print("KERNEL_OK")
</pallas_src>

<mosaic_0001>
module attributes {stable_mosaic.version = 11 : i64} {
  func.func @kernel(%arg0: i32, %arg1: i32, %arg2: memref<2x432x128xbf16, #tpu.memory_space<any>>, %arg3: memref<3x3x128x128xbf16, #tpu.memory_space<vmem>>, %arg4: memref<1x128xf32, #tpu.memory_space<vmem>>, %arg5: memref<1x192x128xbf16, #tpu.memory_space<vmem>>, %arg6: memref<2x248x128xbf16, #tpu.memory_space<vmem>>, %arg7: memref<2x!tpu.dma_semaphore, #tpu.memory_space<semaphore_mem>>) attributes {dimension_semantics = [#tpu.dimension_semantics<parallel>, #tpu.dimension_semantics<arbitrary>], iteration_bounds = array<i64: 2, 2>, scalar_prefetch = 0 : i64, scratch_operands = 2 : i64, tpu.core_type = #tpu.core_type<tc>, window_params = [{}, {pipeline_mode = #tpu.pipeline_mode<synchronous>, transform_indices = @transform_1, window_bounds = array<i64: 3, 3, 128, 128>}, {pipeline_mode = #tpu.pipeline_mode<synchronous>, transform_indices = @transform_2, window_bounds = array<i64: 1, 128>}, {transform_indices = @transform_3, window_bounds = array<i64: 1, 192, 128>}]} {
    %c1_i32 = arith.constant 1 : i32
    %0 = arith.andi %arg1, %c1_i32 : i32
    %c0_i32 = arith.constant 0 : i32
    %1 = arith.cmpi eq, %arg1, %c0_i32 : i32
    %2 = arith.extui %1 : i1 to i32
    %c0_i32_0 = arith.constant 0 : i32
    %3 = arith.cmpi ne, %2, %c0_i32_0 : i32
    scf.if %3 {
      %cst_84 = arith.constant 0.000000e+00 : bf16
      %85 = vector.broadcast %cst_84 : bf16 to vector<8x128xbf16>
      %c0_85 = arith.constant 0 : index
      %c240 = arith.constant 240 : index
      %c0_86 = arith.constant 0 : index
      %86 = vector.load %arg6[%c0_85, %c240, %c0_86] : memref<2x248x128xbf16, #tpu.memory_space<vmem>>, vector<1x8x128xbf16>
      %87 = vector.shape_cast %86 : vector<1x8x128xbf16> to vector<8x128xbf16>
      %88 = vector.shape_cast %85 : vector<8x128xbf16> to vector<1x8x128xbf16>
      tpu.vector_store %arg6[%c0_85, %c240, %c0_86], %88 {strides = array<i32>} : memref<2x248x128xbf16, #tpu.memory_space<vmem>>, vector<1x8x128xbf16>,
      %c1_87 = arith.constant 1 : index
      %c240_88 = arith.constant 240 : index
      %c0_89 = arith.constant 0 : index
      %89 = vector.load %arg6[%c1_87, %c240_88, %c0_89] : memref<2x248x128xbf16, #tpu.memory_space<vmem>>, vector<1x8x128xbf16>
      %90 = vector.shape_cast %89 : vector<1x8x128xbf16> to vector<8x128xbf16>
      %91 = vector.shape_cast %85 : vector<8x128xbf16> to vector<1x8x128xbf16>
      tpu.vector_store %arg6[%c1_87, %c240_88, %c0_89], %91 {strides = array<i32>} : memref<2x248x128xbf16, #tpu.memory_space<vmem>>, vector<1x8x128xbf16>,
      %c0_i32_90 = arith.constant 0 : i32
      %92 = tpu.assume_multiple %c0_i32_90, 8 : i32
      %c0_i32_91 = arith.constant 0 : i32
      %c0_i32_92 = arith.constant 0 : i32
      %c0_i32_93 = arith.constant 0 : i32
      %93 = tpu.memref_slice %arg2[%arg0, %92, %c0_i32_93] : memref<2x432x128xbf16, #tpu.memory_space<any>> -> memref<1x240x128xbf16, #tpu.memory_space<any>>
      %94 = tpu.memref_squeeze %93 : memref<1x240x128xbf16, #tpu.memory_space<any>> -> memref<240x128xbf16, #tpu.memory_space<any>>
      %c0_i32_94 = arith.constant 0 : i32
      %c0_i32_95 = arith.constant 0 : i32
      %95 = tpu.memref_slice %arg6[%c0_i32_91, %c0_i32_94, %c0_i32_95] : memref<2x248x128xbf16, #tpu.memory_space<vmem>> -> memref<1x240x128xbf16, #tpu.memory_space<vmem>>
      %96 = tpu.memref_squeeze %95 : memref<1x240x128xbf16, #tpu.memory_space<vmem>> -> memref<240x128xbf16, #tpu.memory_space<vmem>>
      %97 = tpu.memref_slice %arg7[%c0_i32_92] : memref<2x!tpu.dma_semaphore, #tpu.memory_space<semaphore_mem>> -> memref<1x!tpu.dma_semaphore, #tpu.memory_space<semaphore_mem>>
      %98 = tpu.memref_squeeze %97 : memref<1x!tpu.dma_semaphore, #tpu.memory_space<semaphore_mem>> -> memref<!tpu.dma_semaphore, #tpu.memory_space<semaphore_mem>>
      tpu.enqueue_dma source(%94 : memref<240x128xbf16, #tpu.memory_space<any>>) target(%96 : memref<240x128xbf16, #tpu.memory_space<vmem>>) target_semaphore(%98 : memref<!tpu.dma_semaphore, #tpu.memory_space<semaphore_mem>>)
    } else {
    }
    %c0_i32_1 = arith.constant 0 : i32
    %c0_i32_2 = arith.constant 0 : i32
    %4 = tpu.memref_slice %arg2[%arg0, %c0_i32_1, %c0_i32_2] : memref<2x432x128xbf16, #tpu.memory_space<any>> -> memref<1x240x128xbf16, #tpu.memory_space<any>>
    %5 = tpu.memref_squeeze %4 : memref<1x240x128xbf16, #tpu.memory_space<any>> -> memref<240x128xbf16, #tpu.memory_space<any>>
    %c0_i32_3 = arith.constant 0 : i32
    %c0_i32_4 = arith.constant 0 : i32
    %6 = tpu.memref_slice %arg6[%0, %c0_i32_3, %c0_i32_4] : memref<2x248x128xbf16, #tpu.memory_space<vmem>> -> memref<1x240x128xbf16, #tpu.memory_space<vmem>>
    %7 = tpu.memref_squeeze %6 : memref<1x240x128xbf16, #tpu.memory_space<vmem>> -> memref<240x128xbf16, #tpu.memory_space<vmem>>
    %8 = tpu.memref_slice %arg7[%0] : memref<2x!tpu.dma_semaphore, #tpu.memory_space<semaphore_mem>> -> memref<1x!tpu.dma_semaphore, #tpu.memory_space<semaphore_mem>>
    %9 = tpu.memref_squeeze %8 : memref<1x!tpu.dma_semaphore, #tpu.memory_space<semaphore_mem>> -> memref<!tpu.dma_semaphore, #tpu.memory_space<semaphore_mem>>
    tpu.wait_dma2 semaphore(%9 : memref<!tpu.dma_semaphore, #tpu.memory_space<semaphore_mem>>) src(%5 : memref<240x128xbf16, #tpu.memory_space<any>>) dst(%7 : memref<240x128xbf16, #tpu.memory_space<vmem>>)
    %c1_i32_5 = arith.constant 1 : i32
    %10 = arith.addi %arg1, %c1_i32_5 : i32
    %c2_i32 = arith.constant 2 : i32
    %11 = arith.cmpi slt, %10, %c2_i32 : i32
    %12 = arith.extui %11 : i1 to i32
    %c0_i32_6 = arith.constant 0 : i32
    %13 = arith.cmpi ne, %12, %c0_i32_6 : i32
    scf.if %13 {
      %c1_i32_84 = arith.constant 1 : i32
      %85 = arith.addi %arg1, %c1_i32_84 : i32
      %c1_i32_85 = arith.constant 1 : i32
      %86 = arith.subi %c1_i32_85, %0 : i32
      %c192_i32 = arith.constant 192 : i32
      %87 = arith.muli %85, %c192_i32 : i32
      %88 = tpu.assume_multiple %87, 8 : i32
      %c0_i32_86 = arith.constant 0 : i32
      %89 = tpu.memref_slice %arg2[%arg0, %88, %c0_i32_86] : memref<2x432x128xbf16, #tpu.memory_space<any>> -> memref<1x240x128xbf16, #tpu.memory_space<any>>
      %90 = tpu.memref_squeeze %89 : memref<1x240x128xbf16, #tpu.memory_space<any>> -> memref<240x128xbf16, #tpu.memory_space<any>>
      %c0_i32_87 = arith.constant 0 : i32
      %c0_i32_88 = arith.constant 0 : i32
      %91 = tpu.memref_slice %arg6[%86, %c0_i32_87, %c0_i32_88] : memref<2x248x128xbf16, #tpu.memory_space<vmem>> -> memref<1x240x128xbf16, #tpu.memory_space<vmem>>
      %92 = tpu.memref_squeeze %91 : memref<1x240x128xbf16, #tpu.memory_space<vmem>> -> memref<240x128xbf16, #tpu.memory_space<vmem>>
      %93 = tpu.memref_slice %arg7[%86] : memref<2x!tpu.dma_semaphore, #tpu.memory_space<semaphore_mem>> -> memref<1x!tpu.dma_semaphore, #tpu.memory_space<semaphore_mem>>
      %94 = tpu.memref_squeeze %93 : memref<1x!tpu.dma_semaphore, #tpu.memory_space<semaphore_mem>> -> memref<!tpu.dma_semaphore, #tpu.memory_space<semaphore_mem>>
      tpu.enqueue_dma source(%90 : memref<240x128xbf16, #tpu.memory_space<any>>) target(%92 : memref<240x128xbf16, #tpu.memory_space<vmem>>) target_semaphore(%94 : memref<!tpu.dma_semaphore, #tpu.memory_space<semaphore_mem>>)
    } else {
    }
    %c0 = arith.constant 0 : index
    %c0_7 = arith.constant 0 : index
    %14 = vector.load %arg4[%c0, %c0_7] : memref<1x128xf32, #tpu.memory_space<vmem>>, vector<1x128xf32>
    %c0_i32_8 = arith.constant 0 : i32
    %c0_i32_9 = arith.constant 0 : i32
    %15 = tpu.memref_slice %arg6[%0, %c0_i32_8, %c0_i32_9] : memref<2x248x128xbf16, #tpu.memory_space<vmem>> -> memref<1x248x128xbf16, #tpu.memory_space<vmem>>
    %16 = tpu.memref_squeeze %15 : memref<1x248x128xbf16, #tpu.memory_space<vmem>> -> memref<248x128xbf16, #tpu.memory_space<vmem>>
    %c0_10 = arith.constant 0 : index
    %c0_11 = arith.constant 0 : index
    %17 = vector.load %16[%c0_10, %c0_11] : memref<248x128xbf16, #tpu.memory_space<vmem>>, vector<192x128xbf16>
    %c0_12 = arith.constant 0 : index
    %c0_13 = arith.constant 0 : index
    %c0_14 = arith.constant 0 : index
    %c0_15 = arith.constant 0 : index
    %18 = vector.load %arg3[%c0_12, %c0_13, %c0_14, %c0_15] : memref<3x3x128x128xbf16, #tpu.memory_space<vmem>>, vector<1x1x128x128xbf16>
    %19 = vector.shape_cast %18 : vector<1x1x128x128xbf16> to vector<128x128xbf16>
    %cst = arith.constant dense<0.000000e+00> : vector<192x128xf32>
    %20 = tpu.matmul %17, %19, %cst {dimension_numbers = #tpu.dot_dimension_numbers<[1], [0], [0], [1], [0, 0, 1, 1], [], []>} : vector<192x128xbf16>, vector<128x128xbf16>, vector<192x128xf32> -> vector<192x128xf32>
    %c0_i32_16 = arith.constant 0 : i32
    %c0_i32_17 = arith.constant 0 : i32
    %21 = tpu.memref_slice %arg6[%0, %c0_i32_16, %c0_i32_17] : memref<2x248x128xbf16, #tpu.memory_space<vmem>> -> memref<1x248x128xbf16, #tpu.memory_space<vmem>>
    %22 = tpu.memref_squeeze %21 : memref<1x248x128xbf16, #tpu.memory_space<vmem>> -> memref<248x128xbf16, #tpu.memory_space<vmem>>
    %c1 = arith.constant 1 : index
    %c0_18 = arith.constant 0 : index
    %23 = vector.load %22[%c1, %c0_18] : memref<248x128xbf16, #tpu.memory_space<vmem>>, vector<192x128xbf16>
    %c0_19 = arith.constant 0 : index
    %c1_20 = arith.constant 1 : index
    %c0_21 = arith.constant 0 : index
    %c0_22 = arith.constant 0 : index
    %24 = vector.load %arg3[%c0_19, %c1_20, %c0_21, %c0_22] : memref<3x3x128x128xbf16, #tpu.memory_space<vmem>>, vector<1x1x128x128xbf16>
    %25 = vector.shape_cast %24 : vector<1x1x128x128xbf16> to vector<128x128xbf16>
    %cst_23 = arith.constant dense<0.000000e+00> : vector<192x128xf32>
    %26 = tpu.matmul %23, %25, %cst_23 {dimension_numbers = #tpu.dot_dimension_numbers<[1], [0], [0], [1], [0, 0, 1, 1], [], []>} : vector<192x128xbf16>, vector<128x128xbf16>, vector<192x128xf32> -> vector<192x128xf32>
    %27 = arith.addf %20, %26 : vector<192x128xf32>
    %c0_i32_24 = arith.constant 0 : i32
    %c0_i32_25 = arith.constant 0 : i32
    %28 = tpu.memref_slice %arg6[%0, %c0_i32_24, %c0_i32_25] : memref<2x248x128xbf16, #tpu.memory_space<vmem>> -> memref<1x248x128xbf16, #tpu.memory_space<vmem>>
    %29 = tpu.memref_squeeze %28 : memref<1x248x128xbf16, #tpu.memory_space<vmem>> -> memref<248x128xbf16, #tpu.memory_space<vmem>>
    %c2 = arith.constant 2 : index
    %c0_26 = arith.constant 0 : index
    %30 = vector.load %29[%c2, %c0_26] : memref<248x128xbf16, #tpu.memory_space<vmem>>, vector<192x128xbf16>
    %c0_27 = arith.constant 0 : index
    %c2_28 = arith.constant 2 : index
    %c0_29 = arith.constant 0 : index
    %c0_30 = arith.constant 0 : index
    %31 = vector.load %arg3[%c0_27, %c2_28, %c0_29, %c0_30] : memref<3x3x128x128xbf16, #tpu.memory_space<vmem>>, vector<1x1x128x128xbf16>
    %32 = vector.shape_cast %31 : vector<1x1x128x128xbf16> to vector<128x128xbf16>
    %cst_31 = arith.constant dense<0.000000e+00> : vector<192x128xf32>
    %33 = tpu.matmul %30, %32, %cst_31 {dimension_numbers = #tpu.dot_dimension_numbers<[1], [0], [0], [1], [0, 0, 1, 1], [], []>} : vector<192x128xbf16>, vector<128x128xbf16>, vector<192x128xf32> -> vector<192x128xf32>
    %34 = arith.addf %27, %33 : vector<192x128xf32>
    %c0_i32_32 = arith.constant 0 : i32
    %c0_i32_33 = arith.constant 0 : i32
    %35 = tpu.memref_slice %arg6[%0, %c0_i32_32, %c0_i32_33] : memref<2x248x128xbf16, #tpu.memory_space<vmem>> -> memref<1x248x128xbf16, #tpu.memory_space<vmem>>
    %36 = tpu.memref_squeeze %35 : memref<1x248x128xbf16, #tpu.memory_space<vmem>> -> memref<248x128xbf16, #tpu.memory_space<vmem>>
    %c24 = arith.constant 24 : index
    %c0_34 = arith.constant 0 : index
    %37 = vector.load %36[%c24, %c0_34] : memref<248x128xbf16, #tpu.memory_space<vmem>>, vector<192x128xbf16>
    %c1_35 = arith.constant 1 : index
    %c0_36 = arith.constant 0 : index
    %c0_37 = arith.constant 0 : index
    %c0_38 = arith.constant 0 : index
    %38 = vector.load %arg3[%c1_35, %c0_36, %c0_37, %c0_38] : memref<3x3x128x128xbf16, #tpu.memory_space<vmem>>, vector<1x1x128x128xbf16>
    %39 = vector.shape_cast %38 : vector<1x1x128x128xbf16> to vector<128x128xbf16>
    %cst_39 = arith.constant dense<0.000000e+00> : vector<192x128xf32>
    %40 = tpu.matmul %37, %39, %cst_39 {dimension_numbers = #tpu.dot_dimension_numbers<[1], [0], [0], [1], [0, 0, 1, 1], [], []>} : vector<192x128xbf16>, vector<128x128xbf16>, vector<192x128xf32> -> vector<192x128xf32>
    %41 = arith.addf %34, %40 : vector<192x128xf32>
    %c0_i32_40 = arith.constant 0 : i32
    %c0_i32_41 = arith.constant 0 : i32
    %42 = tpu.memref_slice %arg6[%0, %c0_i32_40, %c0_i32_41] : memref<2x248x128xbf16, #tpu.memory_space<vmem>> -> memref<1x248x128xbf16, #tpu.memory_space<vmem>>
    %43 = tpu.memref_squeeze %42 : memref<1x248x128xbf16, #tpu.memory_space<vmem>> -> memref<248x128xbf16, #tpu.memory_space<vmem>>
    %c25 = arith.constant 25 : index
    %c0_42 = arith.constant 0 : index
    %44 = vector.load %43[%c25, %c0_42] : memref<248x128xbf16, #tpu.memory_space<vmem>>, vector<192x128xbf16>
    %c1_43 = arith.constant 1 : index
    %c1_44 = arith.constant 1 : index
    %c0_45 = arith.constant 0 : index
    %c0_46 = arith.constant 0 : index
    %45 = vector.load %arg3[%c1_43, %c1_44, %c0_45, %c0_46] : memref<3x3x128x128xbf16, #tpu.memory_space<vmem>>, vector<1x1x128x128xbf16>
    %46 = vector.shape_cast %45 : vector<1x1x128x128xbf16> to vector<128x128xbf16>
    %cst_47 = arith.constant dense<0.000000e+00> : vector<192x128xf32>
    %47 = tpu.matmul %44, %46, %cst_47 {dimension_numbers = #tpu.dot_dimension_numbers<[1], [0], [0], [1], [0, 0, 1, 1], [], []>} : vector<192x128xbf16>, vector<128x128xbf16>, vector<192x128xf32> -> vector<192x128xf32>
    %48 = arith.addf %41, %47 : vector<192x128xf32>
    %c0_i32_48 = arith.constant 0 : i32
    %c0_i32_49 = arith.constant 0 : i32
    %49 = tpu.memref_slice %arg6[%0, %c0_i32_48, %c0_i32_49] : memref<2x248x128xbf16, #tpu.memory_space<vmem>> -> memref<1x248x128xbf16, #tpu.memory_space<vmem>>
    %50 = tpu.memref_squeeze %49 : memref<1x248x128xbf16, #tpu.memory_space<vmem>> -> memref<248x128xbf16, #tpu.memory_space<vmem>>
    %c26 = arith.constant 26 : index
    %c0_50 = arith.constant 0 : index
    %51 = vector.load %50[%c26, %c0_50] : memref<248x128xbf16, #tpu.memory_space<vmem>>, vector<192x128xbf16>
    %c1_51 = arith.constant 1 : index
    %c2_52 = arith.constant 2 : index
    %c0_53 = arith.constant 0 : index
    %c0_54 = arith.constant 0 : index
    %52 = vector.load %arg3[%c1_51, %c2_52, %c0_53, %c0_54] : memref<3x3x128x128xbf16, #tpu.memory_space<vmem>>, vector<1x1x128x128xbf16>
    %53 = vector.shape_cast %52 : vector<1x1x128x128xbf16> to vector<128x128xbf16>
    %cst_55 = arith.constant dense<0.000000e+00> : vector<192x128xf32>
    %54 = tpu.matmul %51, %53, %cst_55 {dimension_numbers = #tpu.dot_dimension_numbers<[1], [0], [0], [1], [0, 0, 1, 1], [], []>} : vector<192x128xbf16>, vector<128x128xbf16>, vector<192x128xf32> -> vector<192x128xf32>
    %55 = arith.addf %48, %54 : vector<192x128xf32>
    %c0_i32_56 = arith.constant 0 : i32
    %c0_i32_57 = arith.constant 0 : i32
    %56 = tpu.memref_slice %arg6[%0, %c0_i32_56, %c0_i32_57] : memref<2x248x128xbf16, #tpu.memory_space<vmem>> -> memref<1x248x128xbf16, #tpu.memory_space<vmem>>
    %57 = tpu.memref_squeeze %56 : memref<1x248x128xbf16, #tpu.memory_space<vmem>> -> memref<248x128xbf16, #tpu.memory_space<vmem>>
    %c48 = arith.constant 48 : index
    %c0_58 = arith.constant 0 : index
    %58 = vector.load %57[%c48, %c0_58] : memref<248x128xbf16, #tpu.memory_space<vmem>>, vector<192x128xbf16>
    %c2_59 = arith.constant 2 : index
    %c0_60 = arith.constant 0 : index
    %c0_61 = arith.constant 0 : index
    %c0_62 = arith.constant 0 : index
    %59 = vector.load %arg3[%c2_59, %c0_60, %c0_61, %c0_62] : memref<3x3x128x128xbf16, #tpu.memory_space<vmem>>, vector<1x1x128x128xbf16>
    %60 = vector.shape_cast %59 : vector<1x1x128x128xbf16> to vector<128x128xbf16>
    %cst_63 = arith.constant dense<0.000000e+00> : vector<192x128xf32>
    %61 = tpu.matmul %58, %60, %cst_63 {dimension_numbers = #tpu.dot_dimension_numbers<[1], [0], [0], [1], [0, 0, 1, 1], [], []>} : vector<192x128xbf16>, vector<128x128xbf16>, vector<192x128xf32> -> vector<192x128xf32>
    %62 = arith.addf %55, %61 : vector<192x128xf32>
    %c0_i32_64 = arith.constant 0 : i32
    %c0_i32_65 = arith.constant 0 : i32
    %63 = tpu.memref_slice %arg6[%0, %c0_i32_64, %c0_i32_65] : memref<2x248x128xbf16, #tpu.memory_space<vmem>> -> memref<1x248x128xbf16, #tpu.memory_space<vmem>>
    %64 = tpu.memref_squeeze %63 : memref<1x248x128xbf16, #tpu.memory_space<vmem>> -> memref<248x128xbf16, #tpu.memory_space<vmem>>
    %c49 = arith.constant 49 : index
    %c0_66 = arith.constant 0 : index
    %65 = vector.load %64[%c49, %c0_66] : memref<248x128xbf16, #tpu.memory_space<vmem>>, vector<192x128xbf16>
    %c2_67 = arith.constant 2 : index
    %c1_68 = arith.constant 1 : index
    %c0_69 = arith.constant 0 : index
    %c0_70 = arith.constant 0 : index
    %66 = vector.load %arg3[%c2_67, %c1_68, %c0_69, %c0_70] : memref<3x3x128x128xbf16, #tpu.memory_space<vmem>>, vector<1x1x128x128xbf16>
    %67 = vector.shape_cast %66 : vector<1x1x128x128xbf16> to vector<128x128xbf16>
    %cst_71 = arith.constant dense<0.000000e+00> : vector<192x128xf32>
    %68 = tpu.matmul %65, %67, %cst_71 {dimension_numbers = #tpu.dot_dimension_numbers<[1], [0], [0], [1], [0, 0, 1, 1], [], []>} : vector<192x128xbf16>, vector<128x128xbf16>, vector<192x128xf32> -> vector<192x128xf32>
    %69 = arith.addf %62, %68 : vector<192x128xf32>
    %c0_i32_72 = arith.constant 0 : i32
    %c0_i32_73 = arith.constant 0 : i32
    %70 = tpu.memref_slice %arg6[%0, %c0_i32_72, %c0_i32_73] : memref<2x248x128xbf16, #tpu.memory_space<vmem>> -> memref<1x248x128xbf16, #tpu.memory_space<vmem>>
    %71 = tpu.memref_squeeze %70 : memref<1x248x128xbf16, #tpu.memory_space<vmem>> -> memref<248x128xbf16, #tpu.memory_space<vmem>>
    %c50 = arith.constant 50 : index
    %c0_74 = arith.constant 0 : index
    %72 = vector.load %71[%c50, %c0_74] : memref<248x128xbf16, #tpu.memory_space<vmem>>, vector<192x128xbf16>
    %c2_75 = arith.constant 2 : index
    %c2_76 = arith.constant 2 : index
    %c0_77 = arith.constant 0 : index
    %c0_78 = arith.constant 0 : index
    %73 = vector.load %arg3[%c2_75, %c2_76, %c0_77, %c0_78] : memref<3x3x128x128xbf16, #tpu.memory_space<vmem>>, vector<1x1x128x128xbf16>
    %74 = vector.shape_cast %73 : vector<1x1x128x128xbf16> to vector<128x128xbf16>
    %cst_79 = arith.constant dense<0.000000e+00> : vector<192x128xf32>
    %75 = tpu.matmul %72, %74, %cst_79 {dimension_numbers = #tpu.dot_dimension_numbers<[1], [0], [0], [1], [0, 0, 1, 1], [], []>} : vector<192x128xbf16>, vector<128x128xbf16>, vector<192x128xf32> -> vector<192x128xf32>
    %76 = arith.addf %69, %75 : vector<192x128xf32>
    %77 = vector.broadcast %14 : vector<1x128xf32> to vector<192x128xf32>
    %78 = arith.addf %76, %77 : vector<192x128xf32>
    %cst_80 = arith.constant 0.000000e+00 : f32
    %79 = vector.broadcast %cst_80 : f32 to vector<192x128xf32>
    %80 = arith.maximumf %78, %79 : vector<192x128xf32>
    %81 = arith.truncf %80 : vector<192x128xf32> to vector<192x128xbf16>
    %c0_81 = arith.constant 0 : index
    %c0_82 = arith.constant 0 : index
    %c0_83 = arith.constant 0 : index
    %82 = vector.load %arg5[%c0_81, %c0_82, %c0_83] : memref<1x192x128xbf16, #tpu.memory_space<vmem>>, vector<1x192x128xbf16>
    %83 = vector.shape_cast %82 : vector<1x192x128xbf16> to vector<192x128xbf16>
    %84 = vector.shape_cast %81 : vector<192x128xbf16> to vector<1x192x128xbf16>
    tpu.vector_store %arg5[%c0_81, %c0_82, %c0_83], %84 {strides = array<i32>} : memref<1x192x128xbf16, #tpu.memory_space<vmem>>, vector<1x192x128xbf16>,
    return
  }
  func.func @transform_1(%arg0: i32, %arg1: i32) -> (i32, i32, i32, i32) {
    %c0_i32 = arith.constant 0 : i32
    %c0_i32_0 = arith.constant 0 : i32
    %c0_i32_1 = arith.constant 0 : i32
    %c0_i32_2 = arith.constant 0 : i32
    %c0_i32_3 = arith.constant 0 : i32
    return %c0_i32, %c0_i32_0, %c0_i32_1, %c0_i32_2 : i32, i32, i32, i32
  }
  func.func @transform_2(%arg0: i32, %arg1: i32) -> (i32, i32) {
    %c0_i32 = arith.constant 0 : i32
    %c0_i32_0 = arith.constant 0 : i32
    %c0_i32_1 = arith.constant 0 : i32
    return %c0_i32, %c0_i32_0 : i32, i32
  }
  func.func @transform_3(%arg0: i32, %arg1: i32) -> (i32, i32, i32) {
    %c0_i32 = arith.constant 0 : i32
    %c0_i32_0 = arith.constant 0 : i32
    return %arg0, %arg1, %c0_i32 : i32, i32, i32
  }
}

</mosaic_0001>

<llo_original>
// kernel: tpu_custom_call.1
$region0: #{tpu_custom_call.1}
  #allocation0 [shape = 'u32[]', space=smem, size = 0x4, offset = 0x4, fixed_abs, tag = 'smem constant byte address 0x4 - core index']
  #allocation1 [shape = 'u32[144,128]{1,0:T(1,128)}', space=vmem, size = 0x12000, scoped, tag = 'internal scratch']
  #allocation2 [shape = 'bf16[2,248,128]{2,1,0:T(8,128)(2,1)}', space=vmem, size = 0x1f000, scoped, tag = 'scratch operand']
  #allocation3 [shape = 's32[2]{0}', space=sflag, size = 0x8, scoped, tag = 'scratch operand']
  #allocation8 [shape = 's32[]', space=sflag, size = 0x4, offset = 0, fixed_abs, tag = 'sflag constant byte address 0x0 - dummy sync flag']
  #allocation9 [shape = 's32[]', space=sflag, size = 0x4, offset = 0, fixed_abs, tag = 'sflag constant byte address 0x0 - dummy sync flag']
  #allocation10 [shape = 'u32[]', space=smem, size = 0x4, offset = 0x44, fixed_abs, tag = 'smem constant byte address 0x44 - assertion arg 0']
  #allocation11 [shape = 'u32[]', space=smem, size = 0x4, offset = 0x48, fixed_abs, tag = 'smem constant byte address 0x48 - assertion arg 1']
  #allocation12 [shape = 's32[]', space=sflag, size = 0x4, offset = 0, fixed_abs, tag = 'sflag constant byte address 0x0 - dummy sync flag']
  #allocation13 [shape = 's32[]', space=sflag, size = 0x4, offset = 0, fixed_abs, tag = 'sflag constant byte address 0x0 - dummy sync flag']
  %s0 = inlined_call_operand.hbm [shape: bf16[2,432,128], index: 0, kind: input, shape index: {}]
  %s1 = inlined_call_operand.hbm [shape: bf16[3,3,128,128], index: 1, kind: input, shape index: {}]
  %s2 = inlined_call_operand.vmem [shape: f32[1,128], index: 2, kind: input, shape index: {}]
  %s3 = inlined_call_operand.hbm [shape: bf16[2,384,128], index: 3, kind: output, shape index: {}]
  %s4 = sld [smem:[#allocation0]]
  $region61: #{tpu_custom_call.1} parent=0
    _
  %s6 = ssub.s32 1, %s4
  %s7 = scalar_select 0, %s6, %s4
  $region1: #{tpu_custom_call.1} parent=0
    #allocation4 [shape = 'u8[294912]{0}', space=vmem, size = 0x48000, scoped, tag = 'input window, operand 1, single buffered']
    #allocation5 [shape = 's32[2]{0}', space=sflag, size = 0x8, scoped, tag = 'scoped memory for tpu_custom_call.1']
    #allocation6 [shape = 's32[2]{0}', space=sflag, size = 0x8, scoped, tag = 'scoped memory for tpu_custom_call.1']
    #allocation7 [shape = 'u8[98304]{0}', space=vmem, size = 0x18000, scoped, tag = 'output window, operand 0']
    %8 = vsyncpa [#allocation5], 0
    %9 = vsyncpa [#allocation6], 0
    %s10 = scalar_lea.sflag [#allocation6], 1
    %11 = vsyncpa %s10, 0
    loop: start=0, step=1, limit=6
    $region2: #{tpu_custom_call.1} parent=1 // loop_pre_header
      _
    $region3: #{tpu_custom_call.1} parent=1 // loop_header
      %s13 = sphi 0, %s17
      %p14 = scmp.ge.s32.totalorder %s13, 6
      %s20 = sphi 0, %s32
      %s21 = sphi 0, %s28
      %s22 = sphi 0, %s20
      %s23 = sphi 0, %s21
      %s24 = sphi 0, %s22
      %s25 = sphi 0, %s23
      %s33 = sphi 0, %s33
      %s35 = sphi 0, %s33
      %s36 = sphi 0, %s35
      %s50 = sphi 0, %s36
      %s54 = sphi 0, %s54
      %s56 = sphi 0, %s54
      %s57 = sphi 0, %s56
      %s71 = sphi 0, %s57
      %s79 = sphi 0, %s81
      %s82 = sphi 0, %s79
      %s83 = sphi 0, %s82
      %s99 = sphi 0, %s83
    $region4: #{tpu_custom_call.1} parent=1 // loop_header_branch
      %16 = sbr.rel (%p14) target = $region8
    $region5: #{tpu_custom_call.1} parent=1 // loop_body
      %s18 = ssub.s32 %s13, 1
      %s19 = ssub.s32 %s13, 2
      %s26 = sadd.s32 1, %s21
      %p27 = scmp.ge.s32.totalorder %s26, 2
      %s28 = scalar_select %p27, 0, %s26
      %s29 = sadd.s32 1, %s20
      %s30 = scalar_select %p27, %s29, %s20
      %p31 = scmp.ge.s32.totalorder %s30, 2
      %s32 = scalar_select %p31, 0, %s30
      %s34 = sadd.s32 %s33, 1
      %p37 = scmp.eq.s32.totalorder %s13, 3
      %p38 = scmp.ne.s32.totalorder %s33, %s35
      %p39 = scmp.eq.s32.totalorder %s13, 0
      %p40 = por %p38, %p39
      %p41 = scmp.ne.s32.totalorder %s33, %s35
      %p42 = scmp.eq.s32.totalorder %s18, 3
      %p43 = por %p41, %p42
      %p44 = scmp.ne.s32.totalorder %s35, %s36
      %p45 = scmp.eq.s32.totalorder %s18, 0
      %p46 = por %p44, %p45
      %p47 = scmp.ne.s32.totalorder %s35, %s36
      %p48 = scmp.eq.s32.totalorder %s19, 3
      %p49 = por %p47, %p48
      %p51 = scmp.ne.s32.totalorder %s36, %s50
      %p52 = scmp.eq.s32.totalorder %s19, 0
      %p53 = por %p51, %p52
      %s55 = sadd.s32 %s54, 1
      %p58 = scmp.eq.s32.totalorder %s13, 3
      %p59 = scmp.ne.s32.totalorder %s54, %s56
      %p60 = scmp.eq.s32.totalorder %s13, 0
      %p61 = por %p59, %p60
      %p62 = scmp.ne.s32.totalorder %s54, %s56
      %p63 = scmp.eq.s32.totalorder %s18, 3
      %p64 = por %p62, %p63
      %p65 = scmp.ne.s32.totalorder %s56, %s57
      %p66 = scmp.eq.s32.totalorder %s18, 0
      %p67 = por %p65, %p66
      %p68 = scmp.ne.s32.totalorder %s56, %s57
      %p69 = scmp.eq.s32.totalorder %s19, 3
      %p70 = por %p68, %p69
      %p72 = scmp.ne.s32.totalorder %s57, %s71
      %p73 = scmp.eq.s32.totalorder %s19, 0
      %p74 = por %p72, %p73
      %s75 = ssub.s32 %s20, %s32
      %s76 = ssub.s32 %s21, %s28
      %s77 = sor.u32 %s75, %s76
      %p78 = scmp.eq.s32.totalorder %s77, 0
      %s80 = sadd.s32 %s79, 1
      %s81 = scalar_select %p78, %s79, %s80
      %p84 = pneg %p78
      %p85 = scmp.eq.s32.totalorder %s13, 3
      %p86 = por %p84, %p85
      %p87 = scmp.ne.s32.totalorder %s79, %s82
      %p88 = scmp.eq.s32.totalorder %s13, 0
      %p89 = por %p87, %p88
      %p90 = scmp.ne.s32.totalorder %s79, %s82
      %p91 = scmp.eq.s32.totalorder %s18, 3
      %p92 = por %p90, %p91
      %p93 = scmp.ne.s32.totalorder %s82, %s83
      %p94 = scmp.eq.s32.totalorder %s18, 0
      %p95 = por %p93, %p94
      %p96 = scmp.ne.s32.totalorder %s82, %s83
      %p97 = scmp.eq.s32.totalorder %s19, 3
      %p98 = por %p96, %p97
      %p100 = scmp.ne.s32.totalorder %s83, %s99
      %p101 = scmp.eq.s32.totalorder %s19, 0
      %p102 = por %p100, %p101
      %p103 = scmp.le.s32.totalorder 1, %s13
      %p104 = scmp.lt.s32.totalorder %s13, 5
      %p105 = pnand %p103, %p104
      %p106 = pneg %p105
      // Predicated region
      $region9: #{tpu_custom_call.1} parent=5 // pred_check
        _
      $region10: #{tpu_custom_call.1} parent=5 // pred_check_branch
        %108 = sbr.rel (%p105) target = $region12
      $region11: #{tpu_custom_call.1} parent=5 // pred_region
        %s109 = ssub.s32 %s13, 1
        // Predicated region
        $region13: #{tpu_custom_call.1} parent=11 // pred_check
          %p110 = pneg %p46
        $region14: #{tpu_custom_call.1} parent=11 // pred_check_branch
          %112 = sbr.rel (%p110) target = $region16
        $region15: #{tpu_custom_call.1} parent=11 // pred_region
          %s114 = ssub.s32 9216, 9216
          %115 = vsyncadd [#allocation5], %s114
          %s116 = sshll.u32 [#allocation4], 4
          %s117 = int_to_ptr.vmem [resolvable:$true] %s116
          %122 = dma.hbm_to_vmem [thread:$0]  %s1, 9216, %s117, [#allocation5], 64, 64, 4
        $region16: #{tpu_custom_call.1} parent=11 // pred_fallthru
          _
        // Predicated region
        $region17: #{tpu_custom_call.1} parent=11 // pred_check
          %p123 = pneg %p67
        $region18: #{tpu_custom_call.1} parent=11 // pred_check_branch
          %125 = sbr.rel (%p123) target = $region20
        $region19: #{tpu_custom_call.1} parent=11 // pred_region
          _
        $region20: #{tpu_custom_call.1} parent=11 // pred_fallthru
          _
      $region12: #{tpu_custom_call.1} parent=5 // pred_fallthru
        _
      %p126 = scmp.lt.s32.totalorder %s13, 4
      // Predicated region
      $region21: #{tpu_custom_call.1} parent=5 // pred_check
        %p127 = pneg %p126
      $region22: #{tpu_custom_call.1} parent=5 // pred_check_branch
        %129 = sbr.rel (%p127) target = $region24
      $region23: #{tpu_custom_call.1} parent=5 // pred_region
        _
      $region24: #{tpu_custom_call.1} parent=5 // pred_fallthru
        _
      %p130 = scmp.le.s32.totalorder 1, %s13
      %p131 = scmp.lt.s32.totalorder %s13, 5
      %p132 = pnand %p130, %p131
      %p133 = pneg %p132
      // Predicated region
      $region25: #{tpu_custom_call.1} parent=5 // pred_check
        _
      $region26: #{tpu_custom_call.1} parent=5 // pred_check_branch
        %135 = sbr.rel (%p132) target = $region28
      $region27: #{tpu_custom_call.1} parent=5 // pred_region
        %s136 = ssub.s32 %s13, 1
        // Predicated region
        $region29: #{tpu_custom_call.1} parent=27 // pred_check
          %p137 = pneg %p46
        $region30: #{tpu_custom_call.1} parent=27 // pred_check_branch
          %139 = sbr.rel (%p137) target = $region32
        $region31: #{tpu_custom_call.1} parent=27 // pred_region
          %140 = dma.done [#allocation5], 9216
        $region32: #{tpu_custom_call.1} parent=27 // pred_fallthru
          _
        %p141 = pneg %p46
        %p142 = pneg %p43
        %p143 = pneg %p67
        %p144 = pneg %p64
        %p145 = pneg %p95
        %p146 = pneg %p92
        %s147 = sand.u32 %s82, 1
        %s148 = scalar_lea.sflag [#allocation6], %s147
        %s149 = sand.u32 %s82, 1
        %s150 = smul.addr %s149, 96
        %s151 = scalar_lea.vmem [#allocation7], %s150
        %s152 = smul.u32 24, %s23
        %s154 = sand.u32 %s23, 1
        %p155 = scmp.eq.s32.totalorder %s23, 0
        // Predicated region
        $region33: #{tpu_custom_call.1} parent=27 // pred_check
          %p156 = pneg %p155
        $region34: #{tpu_custom_call.1} parent=27 // pred_check_branch
          %158 = sbr.rel (%p156) target = $region36
        $region35: #{tpu_custom_call.1} parent=27 // pred_region
          %159 = vst [vmem:[#allocation2 + $0x78] sm:$0xf] 0
          %s160 = scalar_lea.vmem [#allocation2], 124
          %161 = vst [vmem:[%s160 + $0x78] sm:$0xf] 0
          %s162 = smul.u32 %s22, 54
          %s163 = sadd.s32 0, %s162
          %s164 = smul.addr %s163, 64
          %s165 = scalar_lea.hbm %s0, %s164
          // Predicated region
          $region37: #{tpu_custom_call.1} parent=35 // pred_check
            _
          $region38: #{tpu_custom_call.1} parent=35 // pred_check_branch
            %167 = sbr.rel target = $region40
          $region39: #{tpu_custom_call.1} parent=35 // pred_region
            %168 = sst [smem:[#allocation10]] [#allocation9]
            %169 = sst [smem:[#allocation11]] [#allocation8]
          $region40: #{tpu_custom_call.1} parent=35 // pred_fallthru
            _
          %171 = shalt.err (0)
          %s173 = sshll.u32 [#allocation2], 4
          %s174 = int_to_ptr.vmem [resolvable:$true] %s173
          %176 = dma.hbm_to_vmem [thread:$0]  %s165, 1920, %s174, [#allocation3]
        $region36: #{tpu_custom_call.1} parent=27 // pred_fallthru
          _
        %s177 = scalar_lea.sflag [#allocation3], %s154
        %s178 = smul.u32 4, 30
        %s179 = smul.u32 %s178, 1
        %s180 = sshll.u32 %s179, 4
        %181 = dma.done %s177, %s180
        %s182 = sadd.s32 %s23, 1
        %p183 = scmp.lt.s32.totalorder %s182, 2
        // Predicated region
        $region41: #{tpu_custom_call.1} parent=27 // pred_check
          %p184 = pneg %p183
        $region42: #{tpu_custom_call.1} parent=27 // pred_check_branch
          %186 = sbr.rel (%p184) target = $region44
        $region43: #{tpu_custom_call.1} parent=27 // pred_region
          %s187 = ssub.s32 1, %s154
          %s188 = smul.u32 %s182, 192
          %s189 = sshra.s32 %s188, 3
          %s190 = sand.u32 %s188, 7
          %s191 = smul.u32 %s22, 54
          %s192 = sadd.s32 %s189, %s191
          %s193 = smul.addr %s192, 64
          %s194 = scalar_lea.hbm %s0, %s193
          %s195 = smul.u32 %s187, 31
          %s196 = smul.addr %s195, 4
          %s197 = scalar_lea.vmem [#allocation2], %s196
          %s198 = scalar_lea.sflag [#allocation3], %s187
          // Predicated region
          $region45: #{tpu_custom_call.1} parent=43 // pred_check
            _
          $region46: #{tpu_custom_call.1} parent=43 // pred_check_branch
            %200 = sbr.rel target = $region48
          $region47: #{tpu_custom_call.1} parent=43 // pred_region
            %201 = sst [smem:[#allocation10]] [#allocation13]
            %202 = sst [smem:[#allocation11]] [#allocation12]
          $region48: #{tpu_custom_call.1} parent=43 // pred_fallthru
            _
          %204 = shalt.err (0)
          %s206 = sshll.u32 %s197, 4
          %s207 = int_to_ptr.vmem [resolvable:$true] %s206
          %209 = dma.hbm_to_vmem [thread:$0]  %s194, 1920, %s207, %s198
        $region44: #{tpu_custom_call.1} parent=27 // pred_fallthru
          _
        %v210 = vld [vmem:[%s2] sm:$0x1]
        %s211 = smul.u32 %s154, 31
        %s212 = smul.addr %s211, 4
        %s213 = scalar_lea.vmem [#allocation2], %s212
        %v214 = vld [vmem:[%s213] sm:$0xf]
        %v215 = vld [vmem:[%s213 + $0x4] sm:$0xf]
        %v216 = vld [vmem:[%s213 + $0x8] sm:$0xf]
        %v217 = vld [vmem:[%s213 + $0xc] sm:$0xf]
        %v218 = vld [vmem:[%s213 + $0x10] sm:$0xf]
        %v219 = vld [vmem:[%s213 + $0x14] sm:$0xf]
        %v220 = vld [vmem:[%s213 + $0x18] sm:$0xf]
        %v221 = vld [vmem:[%s213 + $0x1c] sm:$0xf]
        %v222 = vld [vmem:[%s213 + $0x20] sm:$0xf]
        %v223 = vld [vmem:[%s213 + $0x24] sm:$0xf]
        %v224 = vld [vmem:[%s213 + $0x28] sm:$0xf]
        %v225 = vld [vmem:[%s213 + $0x2c] sm:$0xf]
        %v226 = vld [vmem:[%s213 + $0x30] sm:$0xf]
        %v227 = vld [vmem:[%s213 + $0x34] sm:$0xf]
        %v228 = vld [vmem:[%s213 + $0x38] sm:$0xf]
        %v229 = vld [vmem:[%s213 + $0x3c] sm:$0xf]
        %v230 = vld [vmem:[%s213 + $0x40] sm:$0xf]
        %v231 = vld [vmem:[%s213 + $0x44] sm:$0xf]
        %v232 = vld [vmem:[%s213 + $0x48] sm:$0xf]
        %v233 = vld [vmem:[%s213 + $0x4c] sm:$0xf]
        %v234 = vld [vmem:[%s213 + $0x50] sm:$0xf]
        %v235 = vld [vmem:[%s213 + $0x54] sm:$0xf]
        %v236 = vld [vmem:[%s213 + $0x58] sm:$0xf]
        %v237 = vld [vmem:[%s213 + $0x5c] sm:$0xf]
        %v238 = vld [vmem:[#allocation4] sm:$0xf]
        %v239 = vld [vmem:[#allocation4 + $0x4] sm:$0xf]
        %v240 = vld [vmem:[#allocation4 + $0x8] sm:$0xf]
        %v241 = vld [vmem:[#allocation4 + $0xc] sm:$0xf]
        %v242 = vld [vmem:[#allocation4 + $0x10] sm:$0xf]
        %v243 = vld [vmem:[#allocation4 + $0x14] sm:$0xf]
        %v244 = vld [vmem:[#allocation4 + $0x18] sm:$0xf]
        %v245 = vld [vmem:[#allocation4 + $0x1c] sm:$0xf]
        %v246 = vld [vmem:[#allocation4 + $0x20] sm:$0xf]
        %v247 = vld [vmem:[#allocation4 + $0x24] sm:$0xf]
        %v248 = vld [vmem:[#allocation4 + $0x28] sm:$0xf]
        %v249 = vld [vmem:[#allocation4 + $0x2c] sm:$0xf]
        %v250 = vld [vmem:[#allocation4 + $0x30] sm:$0xf]
        %v251 = vld [vmem:[#allocation4 + $0x34] sm:$0xf]
        %v252 = vld [vmem:[#allocation4 + $0x38] sm:$0xf]
        %v253 = vld [vmem:[#allocation4 + $0x3c] sm:$0xf]
        %v254 = vld [vmem:[%s213 + $0x60] sm:$0x1]
        %s255 = scalar_lea.vmem [#allocation4], 64
        %v256 = vld [vmem:[%s255] sm:$0xf]
        %v257 = vld [vmem:[%s255 + $0x4] sm:$0xf]
        %v258 = vld [vmem:[%s255 + $0x8] sm:$0xf]
        %v259 = vld [vmem:[%s255 + $0xc] sm:$0xf]
        %v260 = vld [vmem:[%s255 + $0x10] sm:$0xf]
        %v261 = vld [vmem:[%s255 + $0x14] sm:$0xf]
        %v262 = vld [vmem:[%s255 + $0x18] sm:$0xf]
        %v263 = vld [vmem:[%s255 + $0x1c] sm:$0xf]
        %v264 = vld [vmem:[%s255 + $0x20] sm:$0xf]
        %v265 = vld [vmem:[%s255 + $0x24] sm:$0xf]
        %v266 = vld [vmem:[%s255 + $0x28] sm:$0xf]
        %v267 = vld [vmem:[%s255 + $0x2c] sm:$0xf]
        %v268 = vld [vmem:[%s255 + $0x30] sm:$0xf]
        %v269 = vld [vmem:[%s255 + $0x34] sm:$0xf]
        %v270 = vld [vmem:[%s255 + $0x38] sm:$0xf]
        %v271 = vld [vmem:[%s255 + $0x3c] sm:$0xf]
        %v297 = vunpack.c.l.b16 %v214
        %v298 = vunpack.c.l.b16 %v215
        %v299 = vunpack.c.l.b16 %v216
        %v300 = vunpack.c.l.b16 %v217
        %v301 = vunpack.c.l.b16 %v218
        %v302 = vunpack.c.l.b16 %v219
        %v303 = vunpack.c.l.b16 %v220
        %v304 = vunpack.c.l.b16 %v221
        %v305 = vunpack.c.l.b16 %v222
        %v306 = vunpack.c.l.b16 %v223
        %v307 = vunpack.c.l.b16 %v224
        %v308 = vunpack.c.l.b16 %v225
        %v309 = vunpack.c.l.b16 %v226
        %v310 = vunpack.c.l.b16 %v227
        %v311 = vunpack.c.l.b16 %v228
        %v312 = vunpack.c.l.b16 %v229
        %v313 = vunpack.c.l.b16 %v230
        %v314 = vunpack.c.l.b16 %v231
        %v315 = vunpack.c.l.b16 %v232
        %v316 = vunpack.c.l.b16 %v233
        %v317 = vunpack.c.l.b16 %v234
        %v318 = vunpack.c.l.b16 %v235
        %v319 = vunpack.c.l.b16 %v236
        %v320 = vunpack.c.l.b16 %v237
        %v321 = vunpack.c.l.b16 %v254
        %v322 = vpack.c.b16 %v298, %v297
        %v323 = vpack.c.b16 %v300, %v299
        %v324 = vpack.c.b16 %v302, %v301
        %v325 = vpack.c.b16 %v304, %v303
        %v326 = vpack.c.b16 %v306, %v305
        %v327 = vpack.c.b16 %v308, %v307
        %v328 = vpack.c.b16 %v310, %v309
        %v329 = vpack.c.b16 %v312, %v311
        %v330 = vpack.c.b16 %v314, %v313
        %v331 = vpack.c.b16 %v316, %v315
        %v332 = vpack.c.b16 %v318, %v317
        %v333 = vpack.c.b16 %v320, %v319
        %v334 = vpack.c.b16 %v321, %v321
        %vm335 = vsmask.f32 7424
        %v337 = vshrl.u32 %v322, 16
        %v339 = vshll.u32 %v322, 16
        %v341 = vrot.slane %v339, 1
        %v342 = vor.u32 %v337, %v341
        %v344 = vshll.u32 %v323, 16
        %v346 = vrot.slane %v344, 1
        %v347 = vsel %vm335, %v342, %v346
        %v348 = vshrl.u32 %v323, 16
        %v350 = vor.u32 %v348, %v346
        %v352 = vshll.u32 %v324, 16
        %v354 = vrot.slane %v352, 1
        %v355 = vsel %vm335, %v350, %v354
        %v356 = vshrl.u32 %v324, 16
        %v358 = vor.u32 %v356, %v354
        %v360 = vshll.u32 %v325, 16
        %v362 = vrot.slane %v360, 1
        %v363 = vsel %vm335, %v358, %v362
        %v364 = vshrl.u32 %v325, 16
        %v366 = vor.u32 %v364, %v362
        %v368 = vshll.u32 %v326, 16
        %v370 = vrot.slane %v368, 1
        %v371 = vsel %vm335, %v366, %v370
        %v372 = vshrl.u32 %v326, 16
        %v374 = vor.u32 %v372, %v370
        %v376 = vshll.u32 %v327, 16
        %v378 = vrot.slane %v376, 1
        %v379 = vsel %vm335, %v374, %v378
        %v380 = vshrl.u32 %v327, 16
        %v382 = vor.u32 %v380, %v378
        %v384 = vshll.u32 %v328, 16
        %v386 = vrot.slane %v384, 1
        %v387 = vsel %vm335, %v382, %v386
        %v388 = vshrl.u32 %v328, 16
        %v390 = vor.u32 %v388, %v386
        %v392 = vshll.u32 %v329, 16
        %v394 = vrot.slane %v392, 1
        %v395 = vsel %vm335, %v390, %v394
        %v396 = vshrl.u32 %v329, 16
        %v398 = vor.u32 %v396, %v394
        %v400 = vshll.u32 %v330, 16
        %v402 = vrot.slane %v400, 1
        %v403 = vsel %vm335, %v398, %v402
        %v404 = vshrl.u32 %v330, 16
        %v406 = vor.u32 %v404, %v402
        %v408 = vshll.u32 %v331, 16
        %v410 = vrot.slane %v408, 1
        %v411 = vsel %vm335, %v406, %v410
        %v412 = vshrl.u32 %v331, 16
        %v414 = vor.u32 %v412, %v410
        %v416 = vshll.u32 %v332, 16
        %v418 = vrot.slane %v416, 1
        %v419 = vsel %vm335, %v414, %v418
        %v420 = vshrl.u32 %v332, 16
        %v422 = vor.u32 %v420, %v418
        %v424 = vshll.u32 %v333, 16
        %v426 = vrot.slane %v424, 1
        %v427 = vsel %vm335, %v422, %v426
        %v428 = vshrl.u32 %v333, 16
        %v430 = vor.u32 %v428, %v426
        %v432 = vshll.u32 %v334, 16
        %v434 = vrot.slane %v432, 1
        %v435 = vsel %vm335, %v430, %v434
        %v464 = vunpack.c.l.b16 %v256
        %v465 = vunpack.c.l.b16 %v257
        %v466 = vunpack.c.l.b16 %v258
        %v467 = vunpack.c.l.b16 %v259
        %v468 = vunpack.c.l.b16 %v260
        %v469 = vunpack.c.l.b16 %v261
        %v470 = vunpack.c.l.b16 %v262
        %v471 = vunpack.c.l.b16 %v263
        %v472 = vunpack.c.l.b16 %v264
        %v473 = vunpack.c.l.b16 %v265
        %v474 = vunpack.c.l.b16 %v266
        %v475 = vunpack.c.l.b16 %v267
        %v476 = vunpack.c.l.b16 %v268
        %v477 = vunpack.c.l.b16 %v269
        %v478 = vunpack.c.l.b16 %v270
        %v479 = vunpack.c.l.b16 %v271
        %v480 = vpack.c.b16 %v465, %v464
        %v481 = vpack.c.b16 %v467, %v466
        %v482 = vpack.c.b16 %v469, %v468
        %v483 = vpack.c.b16 %v471, %v470
        %v484 = vpack.c.b16 %v473, %v472
        %v485 = vpack.c.b16 %v475, %v474
        %v486 = vpack.c.b16 %v477, %v476
        %v487 = vpack.c.b16 %v479, %v478
        %496 = vmatprep.subr.bf16.mxu0 0
        %497 = vmatpush1.bf16.msra.mxu0 %v480
        %498 = vmatprep.subr.bf16.mxu0 0
        %499 = vmatpush1.bf16.msra.mxu0 %v481
        %500 = vmatprep.subr.bf16.mxu0 0
        %501 = vmatpush1.bf16.msra.mxu0 %v482
        %502 = vmatprep.subr.bf16.mxu0 0
        %503 = vmatpush1.bf16.msra.mxu0 %v483
        %504 = vmatprep.subr.bf16.mxu0 0
        %505 = vmatpush1.bf16.msra.mxu0 %v484
        %506 = vmatprep.subr.bf16.mxu0 0
        %507 = vmatpush1.bf16.msra.mxu0 %v485
        %508 = vmatprep.subr.bf16.mxu0 0
        %509 = vmatpush1.bf16.msra.mxu0 %v486
        %510 = vmatprep.subr.bf16.mxu0 0
        %511 = vmatpush1.bf16.msra.mxu0 %v487
        %512 = vmatprep.subr.bf16.mxu0 0
        %513 = vmatpush1.bf16.msra.mxu0 0
        %514 = vmatprep.subr.bf16.mxu0 0
        %515 = vmatpush1.bf16.msra.mxu0 0
        %516 = vmatprep.subr.bf16.mxu0 0
        %517 = vmatpush1.bf16.msra.mxu0 0
        %518 = vmatprep.subr.bf16.mxu0 0
        %519 = vmatpush1.bf16.msra.mxu0 0
        %520 = vmatprep.subr.bf16.mxu0 0
        %521 = vmatpush1.bf16.msra.mxu0 0
        %522 = vmatprep.subr.bf16.mxu0 0
        %523 = vmatpush1.bf16.msra.mxu0 0
        %524 = vmatprep.subr.bf16.mxu0 0
        %525 = vmatpush1.bf16.msra.mxu0 0
        %526 = vmatprep.subr.bf16.mxu0 0
        %527 = vmatpush1.bf16.msra.mxu0 0
        %528 = vmatprep.mubr.bf16.mxu0 0
        %529 = vmatmul.mubr.bf16.gmra.mrb[0].mxu0 %v347
        %v530 = vpop.f32.mrb[0].mxu0
        %v531 = vadd.f32 0.0, %v530
        %v532 = vpop.f32.mrb[0].mxu0
        %v533 = vpop.f32.mrb[0].mxu0
        %v534 = vadd.f32 0.0, %v533
        %v535 = vpop.f32.mrb[0].mxu0
        %536 = vmatprep.mubr.bf16.mxu0 0
        %537 = vmatmul.mubr.bf16.gmra.mrb[0].mxu0 %v355
        %v538 = vpop.f32.mrb[0].mxu0
        %v539 = vadd.f32 0.0, %v538
        %v540 = vpop.f32.mrb[0].mxu0
        %v541 = vpop.f32.mrb[0].mxu0
        %v542 = vadd.f32 0.0, %v541
        %v543 = vpop.f32.mrb[0].mxu0
        %544 = vmatprep.mubr.bf16.mxu0 0
        %545 = vmatmul.mubr.bf16.gmra.mrb[0].mxu0 %v363
        %v546 = vpop.f32.mrb[0].mxu0
        %v547 = vadd.f32 0.0, %v546
        %v548 = vpop.f32.mrb[0].mxu0
        %v549 = vpop.f32.mrb[0].mxu0
        %v550 = vadd.f32 0.0, %v549
        %v551 = vpop.f32.mrb[0].mxu0
        %552 = vmatprep.mubr.bf16.mxu0 0
        %553 = vmatmul.mubr.bf16.gmra.mrb[0].mxu0 %v371
        %v554 = vpop.f32.mrb[0].mxu0
        %v555 = vadd.f32 0.0, %v554
        %v556 = vpop.f32.mrb[0].mxu0
        %v557 = vpop.f32.mrb[0].mxu0
        %v558 = vadd.f32 0.0, %v557
        %v559 = vpop.f32.mrb[0].mxu0
        %560 = vmatprep.mubr.bf16.mxu0 0
        %561 = vmatmul.mubr.bf16.gmra.mrb[0].mxu0 %v379
        %v562 = vpop.f32.mrb[0].mxu0
        %v563 = vadd.f32 0.0, %v562
        %v564 = vpop.f32.mrb[0].mxu0
        %v565 = vpop.f32.mrb[0].mxu0
        %v566 = vadd.f32 0.0, %v565
        %v567 = vpop.f32.mrb[0].mxu0
        %568 = vmatprep.mubr.bf16.mxu0 0
        %569 = vmatmul.mubr.bf16.gmra.mrb[0].mxu0 %v387
        %v570 = vpop.f32.mrb[0].mxu0
        %v571 = vadd.f32 0.0, %v570
        %v572 = vpop.f32.mrb[0].mxu0
        %v573 = vpop.f32.mrb[0].mxu0
        %v574 = vadd.f32 0.0, %v573
        %v575 = vpop.f32.mrb[0].mxu0
        %576 = vmatprep.mubr.bf16.mxu0 0
        %577 = vmatmul.mubr.bf16.gmra.mrb[0].mxu0 %v395
        %v578 = vpop.f32.mrb[0].mxu0
        %v579 = vadd.f32 0.0, %v578
        %v580 = vpop.f32.mrb[0].mxu0
        %v581 = vpop.f32.mrb[0].mxu0
        %v582 = vadd.f32 0.0, %v581
        %v583 = vpop.f32.mrb[0].mxu0
        %584 = vmatprep.mubr.bf16.mxu0 0
        %585 = vmatmul.mubr.bf16.gmra.mrb[0].mxu0 %v403
        %v586 = vpop.f32.mrb[0].mxu0
        %v587 = vadd.f32 0.0, %v586
        %v588 = vpop.f32.mrb[0].mxu0
        %v589 = vpop.f32.mrb[0].mxu0
        %v590 = vadd.f32 0.0, %v589
        %v591 = vpop.f32.mrb[0].mxu0
        %592 = vmatprep.mubr.bf16.mxu0 0
        %593 = vmatmul.mubr.bf16.gmra.mrb[0].mxu0 %v411
        %v594 = vpop.f32.mrb[0].mxu0
        %v595 = vadd.f32 0.0, %v594
        %v596 = vpop.f32.mrb[0].mxu0
        %v597 = vpop.f32.mrb[0].mxu0
        %v598 = vadd.f32 0.0, %v597
        %v599 = vpop.f32.mrb[0].mxu0
        %600 = vmatprep.mubr.bf16.mxu0 0
        %601 = vmatmul.mubr.bf16.gmra.mrb[0].mxu0 %v419
        %v602 = vpop.f32.mrb[0].mxu0
        %v603 = vadd.f32 0.0, %v602
        %v604 = vpop.f32.mrb[0].mxu0
        %v605 = vpop.f32.mrb[0].mxu0
        %v606 = vadd.f32 0.0, %v605
        %v607 = vpop.f32.mrb[0].mxu0
        %608 = vmatprep.mubr.bf16.mxu0 0
        %609 = vmatmul.mubr.bf16.gmra.mrb[0].mxu0 %v427
        %v610 = vpop.f32.mrb[0].mxu0
        %v611 = vadd.f32 0.0, %v610
        %v612 = vpop.f32.mrb[0].mxu0
        %v613 = vpop.f32.mrb[0].mxu0
        %v614 = vadd.f32 0.0, %v613
        %v615 = vpop.f32.mrb[0].mxu0
        %616 = vmatprep.mubr.bf16.mxu0 0
        %617 = vmatmul.mubr.bf16.gmra.mrb[0].mxu0 %v435
        %v618 = vpop.f32.mrb[0].mxu0
        %v619 = vadd.f32 0.0, %v618
        %v620 = vpop.f32.mrb[0].mxu0
        %v621 = vpop.f32.mrb[0].mxu0
        %v622 = vadd.f32 0.0, %v621
        %v623 = vpop.f32.mrb[0].mxu0
        %624 = vdwg.mxu0
        %v653 = vunpack.c.l.b16 %v238
        %v654 = vunpack.c.l.b16 %v239
        %v655 = vunpack.c.l.b16 %v240
        %v656 = vunpack.c.l.b16 %v241
        %v657 = vunpack.c.l.b16 %v242
        %v658 = vunpack.c.l.b16 %v243
        %v659 = vunpack.c.l.b16 %v244
        %v660 = vunpack.c.l.b16 %v245
        %v661 = vunpack.c.l.b16 %v246
        %v662 = vunpack.c.l.b16 %v247
        %v663 = vunpack.c.l.b16 %v248
        %v664 = vunpack.c.l.b16 %v249
        %v665 = vunpack.c.l.b16 %v250
        %v666 = vunpack.c.l.b16 %v251
        %v667 = vunpack.c.l.b16 %v252
        %v668 = vunpack.c.l.b16 %v253
        %v669 = vpack.c.b16 %v654, %v653
        %v670 = vpack.c.b16 %v656, %v655
        %v671 = vpack.c.b16 %v658, %v657
        %v672 = vpack.c.b16 %v660, %v659
        %v673 = vpack.c.b16 %v662, %v661
        %v674 = vpack.c.b16 %v664, %v663
        %v675 = vpack.c.b16 %v666, %v665
        %v676 = vpack.c.b16 %v668, %v667
        %685 = vmatprep.subr.bf16.mxu0 0
        %686 = vmatpush1.bf16.msra.mxu0 %v669
        %687 = vmatprep.subr.bf16.mxu0 0
        %688 = vmatpush1.bf16.msra.mxu0 %v670
        %689 = vmatprep.subr.bf16.mxu0 0
        %690 = vmatpush1.bf16.msra.mxu0 %v671
        %691 = vmatprep.subr.bf16.mxu0 0
        %692 = vmatpush1.bf16.msra.mxu0 %v672
        %693 = vmatprep.subr.bf16.mxu0 0
        %694 = vmatpush1.bf16.msra.mxu0 %v673
        %695 = vmatprep.subr.bf16.mxu0 0
        %696 = vmatpush1.bf16.msra.mxu0 %v674
        %697 = vmatprep.subr.bf16.mxu0 0
        %698 = vmatpush1.bf16.msra.mxu0 %v675
        %699 = vmatprep.subr.bf16.mxu0 0
        %700 = vmatpush1.bf16.msra.mxu0 %v676
        %701 = vmatprep.subr.bf16.mxu0 0
        %702 = vmatpush1.bf16.msra.mxu0 0
        %703 = vmatprep.subr.bf16.mxu0 0
        %704 = vmatpush1.bf16.msra.mxu0 0
        %705 = vmatprep.subr.bf16.mxu0 0
        %706 = vmatpush1.bf16.msra.mxu0 0
        %707 = vmatprep.subr.bf16.mxu0 0
        %708 = vmatpush1.bf16.msra.mxu0 0
        %709 = vmatprep.subr.bf16.mxu0 0
        %710 = vmatpush1.bf16.msra.mxu0 0
        %711 = vmatprep.subr.bf16.mxu0 0
        %712 = vmatpush1.bf16.msra.mxu0 0
        %713 = vmatprep.subr.bf16.mxu0 0
        %714 = vmatpush1.bf16.msra.mxu0 0
        %715 = vmatprep.subr.bf16.mxu0 0
        %716 = vmatpush1.bf16.msra.mxu0 0
        %717 = vmatprep.mubr.bf16.mxu0 0
        %718 = vmatmul.mubr.bf16.gmra.mrb[0].mxu0 %v322
        %v719 = vpop.f32.mrb[0].mxu0
        %v720 = vadd.f32 %v531, %v719
        %v721 = vpop.f32.mrb[0].mxu0
        %v722 = vpop.f32.mrb[0].mxu0
        %v723 = vadd.f32 %v534, %v722
        %v724 = vpop.f32.mrb[0].mxu0
        %725 = vmatprep.mubr.bf16.mxu0 0
        %726 = vmatmul.mubr.bf16.gmra.mrb[0].mxu0 %v323
        %v727 = vpop.f32.mrb[0].mxu0
        %v728 = vadd.f32 %v539, %v727
        %v729 = vpop.f32.mrb[0].mxu0
        %v730 = vpop.f32.mrb[0].mxu0
        %v731 = vadd.f32 %v542, %v730
        %v732 = vpop.f32.mrb[0].mxu0
        %733 = vmatprep.mubr.bf16.mxu0 0
        %734 = vmatmul.mubr.bf16.gmra.mrb[0].mxu0 %v324
        %v735 = vpop.f32.mrb[0].mxu0
        %v736 = vadd.f32 %v547, %v735
        %v737 = vpop.f32.mrb[0].mxu0
        %v738 = vpop.f32.mrb[0].mxu0
        %v739 = vadd.f32 %v550, %v738
        %v740 = vpop.f32.mrb[0].mxu0
        %741 = vmatprep.mubr.bf16.mxu0 0
        %742 = vmatmul.mubr.bf16.gmra.mrb[0].mxu0 %v325
        %v743 = vpop.f32.mrb[0].mxu0
        %v744 = vadd.f32 %v555, %v743
        %v745 = vpop.f32.mrb[0].mxu0
        %v746 = vpop.f32.mrb[0].mxu0
        %v747 = vadd.f32 %v558, %v746
        %v748 = vpop.f32.mrb[0].mxu0
        %749 = vmatprep.mubr.bf16.mxu0 0
        %750 = vmatmul.mubr.bf16.gmra.mrb[0].mxu0 %v326
        %v751 = vpop.f32.mrb[0].mxu0
        %v752 = vadd.f32 %v563, %v751
        %v753 = vpop.f32.mrb[0].mxu0
        %v754 = vpop.f32.mrb[0].mxu0
        %v755 = vadd.f32 %v566, %v754
        %v756 = vpop.f32.mrb[0].mxu0
        %757 = vmatprep.mubr.bf16.mxu0 0
        %758 = vmatmul.mubr.bf16.gmra.mrb[0].mxu0 %v327
        %v759 = vpop.f32.mrb[0].mxu0
        %v760 = vadd.f32 %v571, %v759
        %v761 = vpop.f32.mrb[0].mxu0
        %v762 = vpop.f32.mrb[0].mxu0
        %v763 = vadd.f32 %v574, %v762
        %v764 = vpop.f32.mrb[0].mxu0
        %765 = vmatprep.mubr.bf16.mxu0 0
        %766 = vmatmul.mubr.bf16.gmra.mrb[0].mxu0 %v328
        %v767 = vpop.f32.mrb[0].mxu0
        %v768 = vadd.f32 %v579, %v767
        %v769 = vpop.f32.mrb[0].mxu0
        %v770 = vpop.f32.mrb[0].mxu0
        %v771 = vadd.f32 %v582, %v770
        %v772 = vpop.f32.mrb[0].mxu0
        %773 = vmatprep.mubr.bf16.mxu0 0
        %774 = vmatmul.mubr.bf16.gmra.mrb[0].mxu0 %v329
        %v775 = vpop.f32.mrb[0].mxu0
        %v776 = vadd.f32 %v587, %v775
        %v777 = vpop.f32.mrb[0].mxu0
        %v778 = vpop.f32.mrb[0].mxu0
        %v779 = vadd.f32 %v590, %v778
        %v780 = vpop.f32.mrb[0].mxu0
        %781 = vmatprep.mubr.bf16.mxu0 0
        %782 = vmatmul.mubr.bf16.gmra.mrb[0].mxu0 %v330
        %v783 = vpop.f32.mrb[0].mxu0
        %v784 = vadd.f32 %v595, %v783
        %v785 = vpop.f32.mrb[0].mxu0
        %v786 = vpop.f32.mrb[0].mxu0
        %v787 = vadd.f32 %v598, %v786
        %v788 = vpop.f32.mrb[0].mxu0
        %789 = vmatprep.mubr.bf16.mxu0 0
        %790 = vmatmul.mubr.bf16.gmra.mrb[0].mxu0 %v331
        %v791 = vpop.f32.mrb[0].mxu0
        %v792 = vadd.f32 %v603, %v791
        %v793 = vpop.f32.mrb[0].mxu0
        %v794 = vpop.f32.mrb[0].mxu0
        %v795 = vadd.f32 %v606, %v794
        %v796 = vpop.f32.mrb[0].mxu0
        %797 = vmatprep.mubr.bf16.mxu0 0
        %798 = vmatmul.mubr.bf16.gmra.mrb[0].mxu0 %v332
        %v799 = vpop.f32.mrb[0].mxu0
        %v800 = vadd.f32 %v611, %v799
        %v801 = vpop.f32.mrb[0].mxu0
        %v802 = vpop.f32.mrb[0].mxu0
        %v803 = vadd.f32 %v614, %v802
        %v804 = vpop.f32.mrb[0].mxu0
        %805 = vmatprep.mubr.bf16.mxu0 0
        %806 = vmatmul.mubr.bf16.gmra.mrb[0].mxu0 %v333
        %v807 = vpop.f32.mrb[0].mxu0
        %v808 = vadd.f32 %v619, %v807
        %v809 = vpop.f32.mrb[0].mxu0
        %v810 = vpop.f32.mrb[0].mxu0
        %v811 = vadd.f32 %v622, %v810
        %v812 = vpop.f32.mrb[0].mxu0
        %813 = vdwg.mxu0
        %v814 = vld [vmem:[%s213] sm:$0xe]
        %s815 = scalar_lea.vmem [#allocation4], 128
        %v816 = vld [vmem:[%s815] sm:$0xf]
        %v817 = vld [vmem:[%s815 + $0x4] sm:$0xf]
        %v818 = vld [vmem:[%s815 + $0x8] sm:$0xf]
        %v819 = vld [vmem:[%s815 + $0xc] sm:$0xf]
        %v820 = vld [vmem:[%s815 + $0x10] sm:$0xf]
        %v821 = vld [vmem:[%s815 + $0x14] sm:$0xf]
        %v822 = vld [vmem:[%s815 + $0x18] sm:$0xf]
        %v823 = vld [vmem:[%s815 + $0x1c] sm:$0xf]
        %v824 = vld [vmem:[%s815 + $0x20] sm:$0xf]
        %v825 = vld [vmem:[%s815 + $0x24] sm:$0xf]
        %v826 = vld [vmem:[%s815 + $0x28] sm:$0xf]
        %v827 = vld [vmem:[%s815 + $0x2c] sm:$0xf]
        %v828 = vld [vmem:[%s815 + $0x30] sm:$0xf]
        %v829 = vld [vmem:[%s815 + $0x34] sm:$0xf]
        %v830 = vld [vmem:[%s815 + $0x38] sm:$0xf]
        %v831 = vld [vmem:[%s815 + $0x3c] sm:$0xf]
        %v833 = vunpack.c.l.b16 %v814
        %v834 = vpack.c.b16 %v298, %v833
        %vm835 = vcmask 1046528
        %v836 = vrot.slane %v834, 1
        %v837 = vrot.slane %v323, 1
        %v838 = vsel %vm835, %v836, %v837
        %v839 = vrot.slane %v324, 1
        %v840 = vsel %vm835, %v837, %v839
        %v841 = vrot.slane %v325, 1
        %v842 = vsel %vm835, %v839, %v841
        %v843 = vrot.slane %v326, 1
        %v844 = vsel %vm835, %v841, %v843
        %v845 = vrot.slane %v327, 1
        %v846 = vsel %vm835, %v843, %v845
        %v847 = vrot.slane %v328, 1
        %v848 = vsel %vm835, %v845, %v847
        %v849 = vrot.slane %v329, 1
        %v850 = vsel %vm835, %v847, %v849
        %v851 = vrot.slane %v330, 1
        %v852 = vsel %vm835, %v849, %v851
        %v853 = vrot.slane %v331, 1
        %v854 = vsel %vm835, %v851, %v853
        %v855 = vrot.slane %v332, 1
        %v856 = vsel %vm835, %v853, %v855
        %v857 = vrot.slane %v333, 1
        %v858 = vsel %vm835, %v855, %v857
        %v859 = vrot.slane %v334, 1
        %v860 = vsel %vm835, %v857, %v859
        %v889 = vunpack.c.l.b16 %v816
        %v890 = vunpack.c.l.b16 %v817
        %v891 = vunpack.c.l.b16 %v818
        %v892 = vunpack.c.l.b16 %v819
        %v893 = vunpack.c.l.b16 %v820
        %v894 = vunpack.c.l.b16 %v821
        %v895 = vunpack.c.l.b16 %v822
        %v896 = vunpack.c.l.b16 %v823
        %v897 = vunpack.c.l.b16 %v824
        %v898 = vunpack.c.l.b16 %v825
        %v899 = vunpack.c.l.b16 %v826
        %v900 = vunpack.c.l.b16 %v827
        %v901 = vunpack.c.l.b16 %v828
        %v902 = vunpack.c.l.b16 %v829
        %v903 = vunpack.c.l.b16 %v830
        %v904 = vunpack.c.l.b16 %v831
        %v905 = vpack.c.b16 %v890, %v889
        %v906 = vpack.c.b16 %v892, %v891
        %v907 = vpack.c.b16 %v894, %v893
        %v908 = vpack.c.b16 %v896, %v895
        %v909 = vpack.c.b16 %v898, %v897
        %v910 = vpack.c.b16 %v900, %v899
        %v911 = vpack.c.b16 %v902, %v901
        %v912 = vpack.c.b16 %v904, %v903
        %921 = vmatprep.subr.bf16.mxu0 0
        %922 = vmatpush1.bf16.msra.mxu0 %v905
        %923 = vmatprep.subr.bf16.mxu0 0
        %924 = vmatpush1.bf16.msra.mxu0 %v906
        %925 = vmatprep.subr.bf16.mxu0 0
        %926 = vmatpush1.bf16.msra.mxu0 %v907
        %927 = vmatprep.subr.bf16.mxu0 0
        %928 = vmatpush1.bf16.msra.mxu0 %v908
        %929 = vmatprep.subr.bf16.mxu0 0
        %930 = vmatpush1.bf16.msra.mxu0 %v909
        %931 = vmatprep.subr.bf16.mxu0 0
        %932 = vmatpush1.bf16.msra.mxu0 %v910
        %933 = vmatprep.subr.bf16.mxu0 0
        %934 = vmatpush1.bf16.msra.mxu0 %v911
        %935 = vmatprep.subr.bf16.mxu0 0
        %936 = vmatpush1.bf16.msra.mxu0 %v912
        %937 = vmatprep.subr.bf16.mxu0 0
        %938 = vmatpush1.bf16.msra.mxu0 0
        %939 = vmatprep.subr.bf16.mxu0 0
        %940 = vmatpush1.bf16.msra.mxu0 0
        %941 = vmatprep.subr.bf16.mxu0 0
        %942 = vmatpush1.bf16.msra.mxu0 0
        %943 = vmatprep.subr.bf16.mxu0 0
        %944 = vmatpush1.bf16.msra.mxu0 0
        %945 = vmatprep.subr.bf16.mxu0 0
        %946 = vmatpush1.bf16.msra.mxu0 0
        %947 = vmatprep.subr.bf16.mxu0 0
        %948 = vmatpush1.bf16.msra.mxu0 0
        %949 = vmatprep.subr.bf16.mxu0 0
        %950 = vmatpush1.bf16.msra.mxu0 0
        %951 = vmatprep.subr.bf16.mxu0 0
        %952 = vmatpush1.bf16.msra.mxu0 0
        %953 = vmatprep.mubr.bf16.mxu0 0
        %954 = vmatmul.mubr.bf16.gmra.mrb[0].mxu0 %v838
        %v955 = vpop.f32.mrb[0].mxu0
        %v956 = vadd.f32 0.0, %v955
        %v957 = vpop.f32.mrb[0].mxu0
        %v958 = vpop.f32.mrb[0].mxu0
        %v959 = vadd.f32 0.0, %v958
        %v960 = vpop.f32.mrb[0].mxu0
        %961 = vmatprep.mubr.bf16.mxu0 0
        %962 = vmatmul.mubr.bf16.gmra.mrb[0].mxu0 %v840
        %v963 = vpop.f32.mrb[0].mxu0
        %v964 = vadd.f32 0.0, %v963
        %v965 = vpop.f32.mrb[0].mxu0
        %v966 = vpop.f32.mrb[0].mxu0
        %v967 = vadd.f32 0.0, %v966
        %v968 = vpop.f32.mrb[0].mxu0
        %969 = vmatprep.mubr.bf16.mxu0 0
        %970 = vmatmul.mubr.bf16.gmra.mrb[0].mxu0 %v842
        %v971 = vpop.f32.mrb[0].mxu0
        %v972 = vadd.f32 0.0, %v971
        %v973 = vpop.f32.mrb[0].mxu0
        %v974 = vpop.f32.mrb[0].mxu0
        %v975 = vadd.f32 0.0, %v974
        %v976 = vpop.f32.mrb[0].mxu0
        %977 = vmatprep.mubr.bf16.mxu0 0
        %978 = vmatmul.mubr.bf16.gmra.mrb[0].mxu0 %v844
        %v979 = vpop.f32.mrb[0].mxu0
        %v980 = vadd.f32 0.0, %v979
        %v981 = vpop.f32.mrb[0].mxu0
        %v982 = vpop.f32.mrb[0].mxu0
        %v983 = vadd.f32 0.0, %v982
        %v984 = vpop.f32.mrb[0].mxu0
        %985 = vmatprep.mubr.bf16.mxu0 0
        %986 = vmatmul.mubr.bf16.gmra.mrb[0].mxu0 %v846
        %v987 = vpop.f32.mrb[0].mxu0
        %v988 = vadd.f32 0.0, %v987
        %v989 = vpop.f32.mrb[0].mxu0
        %v990 = vpop.f32.mrb[0].mxu0
        %v991 = vadd.f32 0.0, %v990
        %v992 = vpop.f32.mrb[0].mxu0
        %993 = vmatprep.mubr.bf16.mxu0 0
        %994 = vmatmul.mubr.bf16.gmra.mrb[0].mxu0 %v848
        %v995 = vpop.f32.mrb[0].mxu0
        %v996 = vadd.f32 0.0, %v995
        %v997 = vpop.f32.mrb[0].mxu0
        %v998 = vpop.f32.mrb[0].mxu0
        %v999 = vadd.f32 0.0, %v998
        %v1000 = vpop.f32.mrb[0].mxu0
        %1001 = vmatprep.mubr.bf16.mxu0 0
        %1002 = vmatmul.mubr.bf16.gmra.mrb[0].mxu0 %v850
        %v1003 = vpop.f32.mrb[0].mxu0
        %v1004 = vadd.f32 0.0, %v1003
        %v1005 = vpop.f32.mrb[0].mxu0
        %v1006 = vpop.f32.mrb[0].mxu0
        %v1007 = vadd.f32 0.0, %v1006
        %v1008 = vpop.f32.mrb[0].mxu0
        %1009 = vmatprep.mubr.bf16.mxu0 0
        %1010 = vmatmul.mubr.bf16.gmra.mrb[0].mxu0 %v852
        %v1011 = vpop.f32.mrb[0].mxu0
        %v1012 = vadd.f32 0.0, %v1011
        %v1013 = vpop.f32.mrb[0].mxu0
        %v1014 = vpop.f32.mrb[0].mxu0
        %v1015 = vadd.f32 0.0, %v1014
        %v1016 = vpop.f32.mrb[0].mxu0
        %1017 = vmatprep.mubr.bf16.mxu0 0
        %1018 = vmatmul.mubr.bf16.gmra.mrb[0].mxu0 %v854
        %v1019 = vpop.f32.mrb[0].mxu0
        %v1020 = vadd.f32 0.0, %v1019
        %v1021 = vpop.f32.mrb[0].mxu0
        %v1022 = vpop.f32.mrb[0].mxu0
        %v1023 = vadd.f32 0.0, %v1022
        %v1024 = vpop.f32.mrb[0].mxu0
        %1025 = vmatprep.mubr.bf16.mxu0 0
        %1026 = vmatmul.mubr.bf16.gmra.mrb[0].mxu0 %v856
        %v1027 = vpop.f32.mrb[0].mxu0
        %v1028 = vadd.f32 0.0, %v1027
        %v1029 = vpop.f32.mrb[0].mxu0
        %v1030 = vpop.f32.mrb[0].mxu0
        %v1031 = vadd.f32 0.0, %v1030
        %v1032 = vpop.f32.mrb[0].mxu0
        %1033 = vmatprep.mubr.bf16.mxu0 0
        %1034 = vmatmul.mubr.bf16.gmra.mrb[0].mxu0 %v858
        %v1035 = vpop.f32.mrb[0].mxu0
        %v1036 = vadd.f32 0.0, %v1035
        %v1037 = vpop.f32.mrb[0].mxu0
        %v1038 = vpop.f32.mrb[0].mxu0
        %v1039 = vadd.f32 0.0, %v1038
        %v1040 = vpop.f32.mrb[0].mxu0
        %1041 = vmatprep.mubr.bf16.mxu0 0
        %1042 = vmatmul.mubr.bf16.gmra.mrb[0].mxu0 %v860
        %v1043 = vpop.f32.mrb[0].mxu0
        %v1044 = vadd.f32 0.0, %v1043
        %v1045 = vpop.f32.mrb[0].mxu0
        %v1046 = vpop.f32.mrb[0].mxu0
        %v1047 = vadd.f32 0.0, %v1046
        %v1048 = vpop.f32.mrb[0].mxu0
        %1049 = vdwg.mxu0
        %v1050 = vadd.f32 %v720, %v956
        %v1051 = vadd.f32 %v723, %v959
        %v1052 = vadd.f32 %v728, %v964
        %v1053 = vadd.f32 %v731, %v967
        %v1054 = vadd.f32 %v736, %v972
        %v1055 = vadd.f32 %v739, %v975
        %v1056 = vadd.f32 %v744, %v980
        %v1057 = vadd.f32 %v747, %v983
        %v1058 = vadd.f32 %v752, %v988
        %v1059 = vadd.f32 %v755, %v991
        %v1060 = vadd.f32 %v760, %v996
        %v1061 = vadd.f32 %v763, %v999
        %v1062 = vadd.f32 %v768, %v1004
        %v1063 = vadd.f32 %v771, %v1007
        %v1064 = vadd.f32 %v776, %v1012
        %v1065 = vadd.f32 %v779, %v1015
        %v1066 = vadd.f32 %v784, %v1020
        %v1067 = vadd.f32 %v787, %v1023
        %v1068 = vadd.f32 %v792, %v1028
        %v1069 = vadd.f32 %v795, %v1031
        %v1070 = vadd.f32 %v800, %v1036
        %v1071 = vadd.f32 %v803, %v1039
        %v1072 = vadd.f32 %v808, %v1044
        %v1073 = vadd.f32 %v811, %v1047
        %v1074 = vld [vmem:[%s213 + $0xc] sm:$0xf]
        %v1075 = vld [vmem:[%s213 + $0x10] sm:$0xf]
        %v1076 = vld [vmem:[%s213 + $0x14] sm:$0xf]
        %v1077 = vld [vmem:[%s213 + $0x18] sm:$0xf]
        %v1078 = vld [vmem:[%s213 + $0x1c] sm:$0xf]
        %v1079 = vld [vmem:[%s213 + $0x20] sm:$0xf]
        %v1080 = vld [vmem:[%s213 + $0x24] sm:$0xf]
        %v1081 = vld [vmem:[%s213 + $0x28] sm:$0xf]
        %v1082 = vld [vmem:[%s213 + $0x2c] sm:$0xf]
        %v1083 = vld [vmem:[%s213 + $0x30] sm:$0xf]
        %v1084 = vld [vmem:[%s213 + $0x34] sm:$0xf]
        %v1085 = vld [vmem:[%s213 + $0x38] sm:$0xf]
        %v1086 = vld [vmem:[%s213 + $0x3c] sm:$0xf]
        %v1087 = vld [vmem:[%s213 + $0x40] sm:$0xf]
        %v1088 = vld [vmem:[%s213 + $0x44] sm:$0xf]
        %v1089 = vld [vmem:[%s213 + $0x48] sm:$0xf]
        %v1090 = vld [vmem:[%s213 + $0x4c] sm:$0xf]
        %v1091 = vld [vmem:[%s213 + $0x50] sm:$0xf]
        %v1092 = vld [vmem:[%s213 + $0x54] sm:$0xf]
        %v1093 = vld [vmem:[%s213 + $0x58] sm:$0xf]
        %v1094 = vld [vmem:[%s213 + $0x5c] sm:$0xf]
        %v1095 = vld [vmem:[%s213 + $0x60] sm:$0xf]
        %v1096 = vld [vmem:[%s213 + $0x64] sm:$0xf]
        %v1097 = vld [vmem:[%s213 + $0x68] sm:$0xf]
        %s1098 = scalar_lea.vmem [#allocation4], 192
        %v1099 = vld [vmem:[%s1098] sm:$0xf]
        %v1100 = vld [vmem:[%s1098 + $0x4] sm:$0xf]
        %v1101 = vld [vmem:[%s1098 + $0x8] sm:$0xf]
        %v1102 = vld [vmem:[%s1098 + $0xc] sm:$0xf]
        %v1103 = vld [vmem:[%s1098 + $0x10] sm:$0xf]
        %v1104 = vld [vmem:[%s1098 + $0x14] sm:$0xf]
        %v1105 = vld [vmem:[%s1098 + $0x18] sm:$0xf]
        %v1106 = vld [vmem:[%s1098 + $0x1c] sm:$0xf]
        %v1107 = vld [vmem:[%s1098 + $0x20] sm:$0xf]
        %v1108 = vld [vmem:[%s1098 + $0x24] sm:$0xf]
        %v1109 = vld [vmem:[%s1098 + $0x28] sm:$0xf]
        %v1110 = vld [vmem:[%s1098 + $0x2c] sm:$0xf]
        %v1111 = vld [vmem:[%s1098 + $0x30] sm:$0xf]
        %v1112 = vld [vmem:[%s1098 + $0x34] sm:$0xf]
        %v1113 = vld [vmem:[%s1098 + $0x38] sm:$0xf]
        %v1114 = vld [vmem:[%s1098 + $0x3c] sm:$0xf]
        %v1139 = vunpack.c.l.b16 %v1074
        %v1140 = vunpack.c.l.b16 %v1075
        %v1141 = vunpack.c.l.b16 %v1076
        %v1142 = vunpack.c.l.b16 %v1077
        %v1143 = vunpack.c.l.b16 %v1078
        %v1144 = vunpack.c.l.b16 %v1079
        %v1145 = vunpack.c.l.b16 %v1080
        %v1146 = vunpack.c.l.b16 %v1081
        %v1147 = vunpack.c.l.b16 %v1082
        %v1148 = vunpack.c.l.b16 %v1083
        %v1149 = vunpack.c.l.b16 %v1084
        %v1150 = vunpack.c.l.b16 %v1085
        %v1151 = vunpack.c.l.b16 %v1086
        %v1152 = vunpack.c.l.b16 %v1087
        %v1153 = vunpack.c.l.b16 %v1088
        %v1154 = vunpack.c.l.b16 %v1089
        %v1155 = vunpack.c.l.b16 %v1090
        %v1156 = vunpack.c.l.b16 %v1091
        %v1157 = vunpack.c.l.b16 %v1092
        %v1158 = vunpack.c.l.b16 %v1093
        %v1159 = vunpack.c.l.b16 %v1094
        %v1160 = vunpack.c.l.b16 %v1095
        %v1161 = vunpack.c.l.b16 %v1096
        %v1162 = vunpack.c.l.b16 %v1097
        %v1163 = vpack.c.b16 %v1140, %v1139
        %v1164 = vpack.c.b16 %v1142, %v1141
        %v1165 = vpack.c.b16 %v1144, %v1143
        %v1166 = vpack.c.b16 %v1146, %v1145
        %v1167 = vpack.c.b16 %v1148, %v1147
        %v1168 = vpack.c.b16 %v1150, %v1149
        %v1169 = vpack.c.b16 %v1152, %v1151
        %v1170 = vpack.c.b16 %v1154, %v1153
        %v1171 = vpack.c.b16 %v1156, %v1155
        %v1172 = vpack.c.b16 %v1158, %v1157
        %v1173 = vpack.c.b16 %v1160, %v1159
        %v1174 = vpack.c.b16 %v1162, %v1161
        %v1203 = vunpack.c.l.b16 %v1099
        %v1204 = vunpack.c.l.b16 %v1100
        %v1205 = vunpack.c.l.b16 %v1101
        %v1206 = vunpack.c.l.b16 %v1102
        %v1207 = vunpack.c.l.b16 %v1103
        %v1208 = vunpack.c.l.b16 %v1104
        %v1209 = vunpack.c.l.b16 %v1105
        %v1210 = vunpack.c.l.b16 %v1106
        %v1211 = vunpack.c.l.b16 %v1107
        %v1212 = vunpack.c.l.b16 %v1108
        %v1213 = vunpack.c.l.b16 %v1109
        %v1214 = vunpack.c.l.b16 %v1110
        %v1215 = vunpack.c.l.b16 %v1111
        %v1216 = vunpack.c.l.b16 %v1112
        %v1217 = vunpack.c.l.b16 %v1113
        %v1218 = vunpack.c.l.b16 %v1114
        %v1219 = vpack.c.b16 %v1204, %v1203
        %v1220 = vpack.c.b16 %v1206, %v1205
        %v1221 = vpack.c.b16 %v1208, %v1207
        %v1222 = vpack.c.b16 %v1210, %v1209
        %v1223 = vpack.c.b16 %v1212, %v1211
        %v1224 = vpack.c.b16 %v1214, %v1213
        %v1225 = vpack.c.b16 %v1216, %v1215
        %v1226 = vpack.c.b16 %v1218, %v1217
        %1235 = vmatprep.subr.bf16.mxu0 0
        %1236 = vmatpush1.bf16.msra.mxu0 %v1219
        %1237 = vmatprep.subr.bf16.mxu0 0
        %1238 = vmatpush1.bf16.msra.mxu0 %v1220
        %1239 = vmatprep.subr.bf16.mxu0 0
        %1240 = vmatpush1.bf16.msra.mxu0 %v1221
        %1241 = vmatprep.subr.bf16.mxu0 0
        %1242 = vmatpush1.bf16.msra.mxu0 %v1222
        %1243 = vmatprep.subr.bf16.mxu0 0
        %1244 = vmatpush1.bf16.msra.mxu0 %v1223
        %1245 = vmatprep.subr.bf16.mxu0 0
        %1246 = vmatpush1.bf16.msra.mxu0 %v1224
        %1247 = vmatprep.subr.bf16.mxu0 0
        %1248 = vmatpush1.bf16.msra.mxu0 %v1225
        %1249 = vmatprep.subr.bf16.mxu0 0
        %1250 = vmatpush1.bf16.msra.mxu0 %v1226
        %1251 = vmatprep.subr.bf16.mxu0 0
        %1252 = vmatpush1.bf16.msra.mxu0 0
        %1253 = vmatprep.subr.bf16.mxu0 0
        %1254 = vmatpush1.bf16.msra.mxu0 0
        %1255 = vmatprep.subr.bf16.mxu0 0
        %1256 = vmatpush1.bf16.msra.mxu0 0
        %1257 = vmatprep.subr.bf16.mxu0 0
        %1258 = vmatpush1.bf16.msra.mxu0 0
        %1259 = vmatprep.subr.bf16.mxu0 0
        %1260 = vmatpush1.bf16.msra.mxu0 0
        %1261 = vmatprep.subr.bf16.mxu0 0
        %1262 = vmatpush1.bf16.msra.mxu0 0
        %1263 = vmatprep.subr.bf16.mxu0 0
        %1264 = vmatpush1.bf16.msra.mxu0 0
        %1265 = vmatprep.subr.bf16.mxu0 0
        %1266 = vmatpush1.bf16.msra.mxu0 0
        %1267 = vmatprep.mubr.bf16.mxu0 0
        %1268 = vmatmul.mubr.bf16.gmra.mrb[0].mxu0 %v1163
        %v1269 = vpop.f32.mrb[0].mxu0
        %v1270 = vadd.f32 0.0, %v1269
        %v1271 = vpop.f32.mrb[0].mxu0
        %v1272 = vpop.f32.mrb[0].mxu0
        %v1273 = vadd.f32 0.0, %v1272
        %v1274 = vpop.f32.mrb[0].mxu0
        %1275 = vmatprep.mubr.bf16.mxu0 0
        %1276 = vmatmul.mubr.bf16.gmra.mrb[0].mxu0 %v1164
        %v1277 = vpop.f32.mrb[0].mxu0
        %v1278 = vadd.f32 0.0, %v1277
        %v1279 = vpop.f32.mrb[0].mxu0
        %v1280 = vpop.f32.mrb[0].mxu0
        %v1281 = vadd.f32 0.0, %v1280
        %v1282 = vpop.f32.mrb[0].mxu0
        %1283 = vmatprep.mubr.bf16.mxu0 0
        %1284 = vmatmul.mubr.bf16.gmra.mrb[0].mxu0 %v1165
        %v1285 = vpop.f32.mrb[0].mxu0
        %v1286 = vadd.f32 0.0, %v1285
        %v1287 = vpop.f32.mrb[0].mxu0
        %v1288 = vpop.f32.mrb[0].mxu0
        %v1289 = vadd.f32 0.0, %v1288
        %v1290 = vpop.f32.mrb[0].mxu0
        %1291 = vmatprep.mubr.bf16.mxu0 0
        %1292 = vmatmul.mubr.bf16.gmra.mrb[0].mxu0 %v1166
        %v1293 = vpop.f32.mrb[0].mxu0
        %v1294 = vadd.f32 0.0, %v1293
        %v1295 = vpop.f32.mrb[0].mxu0
        %v1296 = vpop.f32.mrb[0].mxu0
        %v1297 = vadd.f32 0.0, %v1296
        %v1298 = vpop.f32.mrb[0].mxu0
        %1299 = vmatprep.mubr.bf16.mxu0 0
        %1300 = vmatmul.mubr.bf16.gmra.mrb[0].mxu0 %v1167
        %v1301 = vpop.f32.mrb[0].mxu0
        %v1302 = vadd.f32 0.0, %v1301
        %v1303 = vpop.f32.mrb[0].mxu0
        %v1304 = vpop.f32.mrb[0].mxu0
        %v1305 = vadd.f32 0.0, %v1304
        %v1306 = vpop.f32.mrb[0].mxu0
        %1307 = vmatprep.mubr.bf16.mxu0 0
        %1308 = vmatmul.mubr.bf16.gmra.mrb[0].mxu0 %v1168
        %v1309 = vpop.f32.mrb[0].mxu0
        %v1310 = vadd.f32 0.0, %v1309
        %v1311 = vpop.f32.mrb[0].mxu0
        %v1312 = vpop.f32.mrb[0].mxu0
        %v1313 = vadd.f32 0.0, %v1312
        %v1314 = vpop.f32.mrb[0].mxu0
        %1315 = vmatprep.mubr.bf16.mxu0 0
        %1316 = vmatmul.mubr.bf16.gmra.mrb[0].mxu0 %v1169
        %v1317 = vpop.f32.mrb[0].mxu0
        %v1318 = vadd.f32 0.0, %v1317
        %v1319 = vpop.f32.mrb[0].mxu0
        %v1320 = vpop.f32.mrb[0].mxu0
        %v1321 = vadd.f32 0.0, %v1320
        %v1322 = vpop.f32.mrb[0].mxu0
        %1323 = vmatprep.mubr.bf16.mxu0 0
        %1324 = vmatmul.mubr.bf16.gmra.mrb[0].mxu0 %v1170
        %v1325 = vpop.f32.mrb[0].mxu0
        %v1326 = vadd.f32 0.0, %v1325
        %v1327 = vpop.f32.mrb[0].mxu0
        %v1328 = vpop.f32.mrb[0].mxu0
        %v1329 = vadd.f32 0.0, %v1328
        %v1330 = vpop.f32.mrb[0].mxu0
        %1331 = vmatprep.mubr.bf16.mxu0 0
        %1332 = vmatmul.mubr.bf16.gmra.mrb[0].mxu0 %v1171
        %v1333 = vpop.f32.mrb[0].mxu0
        %v1334 = vadd.f32 0.0, %v1333
        %v1335 = vpop.f32.mrb[0].mxu0
        %v1336 = vpop.f32.mrb[0].mxu0
        %v1337 = vadd.f32 0.0, %v1336
        %v1338 = vpop.f32.mrb[0].mxu0
        %1339 = vmatprep.mubr.bf16.mxu0 0
        %1340 = vmatmul.mubr.bf16.gmra.mrb[0].mxu0 %v1172
        %v1341 = vpop.f32.mrb[0].mxu0
        %v1342 = vadd.f32 0.0, %v1341
        %v1343 = vpop.f32.mrb[0].mxu0
        %v1344 = vpop.f32.mrb[0].mxu0
        %v1345 = vadd.f32 0.0, %v1344
        %v1346 = vpop.f32.mrb[0].mxu0
        %1347 = vmatprep.mubr.bf16.mxu0 0
        %1348 = vmatmul.mubr.bf16.gmra.mrb[0].mxu0 %v1173
        %v1349 = vpop.f32.mrb[0].mxu0
        %v1350 = vadd.f32 0.0, %v1349
        %v1351 = vpop.f32.mrb[0].mxu0
        %v1352 = vpop.f32.mrb[0].mxu0
        %v1353 = vadd.f32 0.0, %v1352
        %v1354 = vpop.f32.mrb[0].mxu0
        %1355 = vmatprep.mubr.bf16.mxu0 0
        %1356 = vmatmul.mubr.bf16.gmra.mrb[0].mxu0 %v1174
        %v1357 = vpop.f32.mrb[0].mxu0
        %v1358 = vadd.f32 0.0, %v1357
        %v1359 = vpop.f32.mrb[0].mxu0
        %v1360 = vpop.f32.mrb[0].mxu0
        %v1361 = vadd.f32 0.0, %v1360
        %v1362 = vpop.f32.mrb[0].mxu0
        %1363 = vdwg.mxu0
        %v1364 = vadd.f32 %v1050, %v1270
        %v1365 = vadd.f32 %v1051, %v1273
        %v1366 = vadd.f32 %v1052, %v1278
        %v1367 = vadd.f32 %v1053, %v1281
        %v1368 = vadd.f32 %v1054, %v1286
        %v1369 = vadd.f32 %v1055, %v1289
        %v1370 = vadd.f32 %v1056, %v1294
        %v1371 = vadd.f32 %v1057, %v1297
        %v1372 = vadd.f32 %v1058, %v1302
        %v1373 = vadd.f32 %v1059, %v1305
        %v1374 = vadd.f32 %v1060, %v1310
        %v1375 = vadd.f32 %v1061, %v1313
        %v1376 = vadd.f32 %v1062, %v1318
        %v1377 = vadd.f32 %v1063, %v1321
        %v1378 = vadd.f32 %v1064, %v1326
        %v1379 = vadd.f32 %v1065, %v1329
        %v1380 = vadd.f32 %v1066, %v1334
        %v1381 = vadd.f32 %v1067, %v1337
        %v1382 = vadd.f32 %v1068, %v1342
        %v1383 = vadd.f32 %v1069, %v1345
        %v1384 = vadd.f32 %v1070, %v1350
        %v1385 = vadd.f32 %v1071, %v1353
        %v1386 = vadd.f32 %v1072, %v1358
        %v1387 = vadd.f32 %v1073, %v1361
        %v1388 = vld [vmem:[%s213 + $0xc] sm:$0xf]
        %v1389 = vld [vmem:[%s213 + $0x10] sm:$0xf]
        %v1390 = vld [vmem:[%s213 + $0x14] sm:$0xf]
        %v1391 = vld [vmem:[%s213 + $0x18] sm:$0xf]
        %v1392 = vld [vmem:[%s213 + $0x1c] sm:$0xf]
        %v1393 = vld [vmem:[%s213 + $0x20] sm:$0xf]
        %v1394 = vld [vmem:[%s213 + $0x24] sm:$0xf]
        %v1395 = vld [vmem:[%s213 + $0x28] sm:$0xf]
        %v1396 = vld [vmem:[%s213 + $0x2c] sm:$0xf]
        %v1397 = vld [vmem:[%s213 + $0x30] sm:$0xf]
        %v1398 = vld [vmem:[%s213 + $0x34] sm:$0xf]
        %v1399 = vld [vmem:[%s213 + $0x38] sm:$0xf]
        %v1400 = vld [vmem:[%s213 + $0x3c] sm:$0xf]
        %v1401 = vld [vmem:[%s213 + $0x40] sm:$0xf]
        %v1402 = vld [vmem:[%s213 + $0x44] sm:$0xf]
        %v1403 = vld [vmem:[%s213 + $0x48] sm:$0xf]
        %v1404 = vld [vmem:[%s213 + $0x4c] sm:$0xf]
        %v1405 = vld [vmem:[%s213 + $0x50] sm:$0xf]
        %v1406 = vld [vmem:[%s213 + $0x54] sm:$0xf]
        %v1407 = vld [vmem:[%s213 + $0x58] sm:$0xf]
        %v1408 = vld [vmem:[%s213 + $0x5c] sm:$0xf]
        %v1409 = vld [vmem:[%s213 + $0x60] sm:$0xf]
        %v1410 = vld [vmem:[%s213 + $0x64] sm:$0xf]
        %v1411 = vld [vmem:[%s213 + $0x68] sm:$0xf]
        %v1412 = vld [vmem:[%s213 + $0x6c] sm:$0x1]
        %s1413 = scalar_lea.vmem [#allocation4], 256
        %v1414 = vld [vmem:[%s1413] sm:$0xf]
        %v1415 = vld [vmem:[%s1413 + $0x4] sm:$0xf]
        %v1416 = vld [vmem:[%s1413 + $0x8] sm:$0xf]
        %v1417 = vld [vmem:[%s1413 + $0xc] sm:$0xf]
        %v1418 = vld [vmem:[%s1413 + $0x10] sm:$0xf]
        %v1419 = vld [vmem:[%s1413 + $0x14] sm:$0xf]
        %v1420 = vld [vmem:[%s1413 + $0x18] sm:$0xf]
        %v1421 = vld [vmem:[%s1413 + $0x1c] sm:$0xf]
        %v1422 = vld [vmem:[%s1413 + $0x20] sm:$0xf]
        %v1423 = vld [vmem:[%s1413 + $0x24] sm:$0xf]
        %v1424 = vld [vmem:[%s1413 + $0x28] sm:$0xf]
        %v1425 = vld [vmem:[%s1413 + $0x2c] sm:$0xf]
        %v1426 = vld [vmem:[%s1413 + $0x30] sm:$0xf]
        %v1427 = vld [vmem:[%s1413 + $0x34] sm:$0xf]
        %v1428 = vld [vmem:[%s1413 + $0x38] sm:$0xf]
        %v1429 = vld [vmem:[%s1413 + $0x3c] sm:$0xf]
        %v1455 = vunpack.c.l.b16 %v1388
        %v1456 = vunpack.c.l.b16 %v1389
        %v1457 = vunpack.c.l.b16 %v1390
        %v1458 = vunpack.c.l.b16 %v1391
        %v1459 = vunpack.c.l.b16 %v1392
        %v1460 = vunpack.c.l.b16 %v1393
        %v1461 = vunpack.c.l.b16 %v1394
        %v1462 = vunpack.c.l.b16 %v1395
        %v1463 = vunpack.c.l.b16 %v1396
        %v1464 = vunpack.c.l.b16 %v1397
        %v1465 = vunpack.c.l.b16 %v1398
        %v1466 = vunpack.c.l.b16 %v1399
        %v1467 = vunpack.c.l.b16 %v1400
        %v1468 = vunpack.c.l.b16 %v1401
        %v1469 = vunpack.c.l.b16 %v1402
        %v1470 = vunpack.c.l.b16 %v1403
        %v1471 = vunpack.c.l.b16 %v1404
        %v1472 = vunpack.c.l.b16 %v1405
        %v1473 = vunpack.c.l.b16 %v1406
        %v1474 = vunpack.c.l.b16 %v1407
        %v1475 = vunpack.c.l.b16 %v1408
        %v1476 = vunpack.c.l.b16 %v1409
        %v1477 = vunpack.c.l.b16 %v1410
        %v1478 = vunpack.c.l.b16 %v1411
        %v1479 = vunpack.c.l.b16 %v1412
        %v1480 = vpack.c.b16 %v1456, %v1455
        %v1481 = vpack.c.b16 %v1458, %v1457
        %v1482 = vpack.c.b16 %v1460, %v1459
        %v1483 = vpack.c.b16 %v1462, %v1461
        %v1484 = vpack.c.b16 %v1464, %v1463
        %v1485 = vpack.c.b16 %v1466, %v1465
        %v1486 = vpack.c.b16 %v1468, %v1467
        %v1487 = vpack.c.b16 %v1470, %v1469
        %v1488 = vpack.c.b16 %v1472, %v1471
        %v1489 = vpack.c.b16 %v1474, %v1473
        %v1490 = vpack.c.b16 %v1476, %v1475
        %v1491 = vpack.c.b16 %v1478, %v1477
        %v1492 = vpack.c.b16 %v1479, %v1479
        %v1494 = vshrl.u32 %v1480, 16
        %v1496 = vshll.u32 %v1480, 16
        %v1498 = vrot.slane %v1496, 1
        %v1499 = vor.u32 %v1494, %v1498
        %v1501 = vshll.u32 %v1481, 16
        %v1503 = vrot.slane %v1501, 1
        %v1504 = vsel %vm335, %v1499, %v1503
        %v1505 = vshrl.u32 %v1481, 16
        %v1507 = vor.u32 %v1505, %v1503
        %v1509 = vshll.u32 %v1482, 16
        %v1511 = vrot.slane %v1509, 1
        %v1512 = vsel %vm335, %v1507, %v1511
        %v1513 = vshrl.u32 %v1482, 16
        %v1515 = vor.u32 %v1513, %v1511
        %v1517 = vshll.u32 %v1483, 16
        %v1519 = vrot.slane %v1517, 1
        %v1520 = vsel %vm335, %v1515, %v1519
        %v1521 = vshrl.u32 %v1483, 16
        %v1523 = vor.u32 %v1521, %v1519
        %v1525 = vshll.u32 %v1484, 16
        %v1527 = vrot.slane %v1525, 1
        %v1528 = vsel %vm335, %v1523, %v1527
        %v1529 = vshrl.u32 %v1484, 16
        %v1531 = vor.u32 %v1529, %v1527
        %v1533 = vshll.u32 %v1485, 16
        %v1535 = vrot.slane %v1533, 1
        %v1536 = vsel %vm335, %v1531, %v1535
        %v1537 = vshrl.u32 %v1485, 16
        %v1539 = vor.u32 %v1537, %v1535
        %v1541 = vshll.u32 %v1486, 16
        %v1543 = vrot.slane %v1541, 1
        %v1544 = vsel %vm335, %v1539, %v1543
        %v1545 = vshrl.u32 %v1486, 16
        %v1547 = vor.u32 %v1545, %v1543
        %v1549 = vshll.u32 %v1487, 16
        %v1551 = vrot.slane %v1549, 1
        %v1552 = vsel %vm335, %v1547, %v1551
        %v1553 = vshrl.u32 %v1487, 16
        %v1555 = vor.u32 %v1553, %v1551
        %v1557 = vshll.u32 %v1488, 16
        %v1559 = vrot.slane %v1557, 1
        %v1560 = vsel %vm335, %v1555, %v1559
        %v1561 = vshrl.u32 %v1488, 16
        %v1563 = vor.u32 %v1561, %v1559
        %v1565 = vshll.u32 %v1489, 16
        %v1567 = vrot.slane %v1565, 1
        %v1568 = vsel %vm335, %v1563, %v1567
        %v1569 = vshrl.u32 %v1489, 16
        %v1571 = vor.u32 %v1569, %v1567
        %v1573 = vshll.u32 %v1490, 16
        %v1575 = vrot.slane %v1573, 1
        %v1576 = vsel %vm335, %v1571, %v1575
        %v1577 = vshrl.u32 %v1490, 16
        %v1579 = vor.u32 %v1577, %v1575
        %v1581 = vshll.u32 %v1491, 16
        %v1583 = vrot.slane %v1581, 1
        %v1584 = vsel %vm335, %v1579, %v1583
        %v1585 = vshrl.u32 %v1491, 16
        %v1587 = vor.u32 %v1585, %v1583
        %v1589 = vshll.u32 %v1492, 16
        %v1591 = vrot.slane %v1589, 1
        %v1592 = vsel %vm335, %v1587, %v1591
        %v1621 = vunpack.c.l.b16 %v1414
        %v1622 = vunpack.c.l.b16 %v1415
        %v1623 = vunpack.c.l.b16 %v1416
        %v1624 = vunpack.c.l.b16 %v1417
        %v1625 = vunpack.c.l.b16 %v1418
        %v1626 = vunpack.c.l.b16 %v1419
        %v1627 = vunpack.c.l.b16 %v1420
        %v1628 = vunpack.c.l.b16 %v1421
        %v1629 = vunpack.c.l.b16 %v1422
        %v1630 = vunpack.c.l.b16 %v1423
        %v1631 = vunpack.c.l.b16 %v1424
        %v1632 = vunpack.c.l.b16 %v1425
        %v1633 = vunpack.c.l.b16 %v1426
        %v1634 = vunpack.c.l.b16 %v1427
        %v1635 = vunpack.c.l.b16 %v1428
        %v1636 = vunpack.c.l.b16 %v1429
        %v1637 = vpack.c.b16 %v1622, %v1621
        %v1638 = vpack.c.b16 %v1624, %v1623
        %v1639 = vpack.c.b16 %v1626, %v1625
        %v1640 = vpack.c.b16 %v1628, %v1627
        %v1641 = vpack.c.b16 %v1630, %v1629
        %v1642 = vpack.c.b16 %v1632, %v1631
        %v1643 = vpack.c.b16 %v1634, %v1633
        %v1644 = vpack.c.b16 %v1636, %v1635
        %1653 = vmatprep.subr.bf16.mxu0 0
        %1654 = vmatpush1.bf16.msra.mxu0 %v1637
        %1655 = vmatprep.subr.bf16.mxu0 0
        %1656 = vmatpush1.bf16.msra.mxu0 %v1638
        %1657 = vmatprep.subr.bf16.mxu0 0
        %1658 = vmatpush1.bf16.msra.mxu0 %v1639
        %1659 = vmatprep.subr.bf16.mxu0 0
        %1660 = vmatpush1.bf16.msra.mxu0 %v1640
        %1661 = vmatprep.subr.bf16.mxu0 0
        %1662 = vmatpush1.bf16.msra.mxu0 %v1641
        %1663 = vmatprep.subr.bf16.mxu0 0
        %1664 = vmatpush1.bf16.msra.mxu0 %v1642
        %1665 = vmatprep.subr.bf16.mxu0 0
        %1666 = vmatpush1.bf16.msra.mxu0 %v1643
        %1667 = vmatprep.subr.bf16.mxu0 0
        %1668 = vmatpush1.bf16.msra.mxu0 %v1644
        %1669 = vmatprep.subr.bf16.mxu0 0
        %1670 = vmatpush1.bf16.msra.mxu0 0
        %1671 = vmatprep.subr.bf16.mxu0 0
        %1672 = vmatpush1.bf16.msra.mxu0 0
        %1673 = vmatprep.subr.bf16.mxu0 0
        %1674 = vmatpush1.bf16.msra.mxu0 0
        %1675 = vmatprep.subr.bf16.mxu0 0
        %1676 = vmatpush1.bf16.msra.mxu0 0
        %1677 = vmatprep.subr.bf16.mxu0 0
        %1678 = vmatpush1.bf16.msra.mxu0 0
        %1679 = vmatprep.subr.bf16.mxu0 0
        %1680 = vmatpush1.bf16.msra.mxu0 0
        %1681 = vmatprep.subr.bf16.mxu0 0
        %1682 = vmatpush1.bf16.msra.mxu0 0
        %1683 = vmatprep.subr.bf16.mxu0 0
        %1684 = vmatpush1.bf16.msra.mxu0 0
        %1685 = vmatprep.mubr.bf16.mxu0 0
        %1686 = vmatmul.mubr.bf16.gmra.mrb[0].mxu0 %v1504
        %v1687 = vpop.f32.mrb[0].mxu0
        %v1688 = vadd.f32 0.0, %v1687
        %v1689 = vpop.f32.mrb[0].mxu0
        %v1690 = vpop.f32.mrb[0].mxu0
        %v1691 = vadd.f32 0.0, %v1690
        %v1692 = vpop.f32.mrb[0].mxu0
        %1693 = vmatprep.mubr.bf16.mxu0 0
        %1694 = vmatmul.mubr.bf16.gmra.mrb[0].mxu0 %v1512
        %v1695 = vpop.f32.mrb[0].mxu0
        %v1696 = vadd.f32 0.0, %v1695
        %v1697 = vpop.f32.mrb[0].mxu0
        %v1698 = vpop.f32.mrb[0].mxu0
        %v1699 = vadd.f32 0.0, %v1698
        %v1700 = vpop.f32.mrb[0].mxu0
        %1701 = vmatprep.mubr.bf16.mxu0 0
        %1702 = vmatmul.mubr.bf16.gmra.mrb[0].mxu0 %v1520
        %v1703 = vpop.f32.mrb[0].mxu0
        %v1704 = vadd.f32 0.0, %v1703
        %v1705 = vpop.f32.mrb[0].mxu0
        %v1706 = vpop.f32.mrb[0].mxu0
        %v1707 = vadd.f32 0.0, %v1706
        %v1708 = vpop.f32.mrb[0].mxu0
        %1709 = vmatprep.mubr.bf16.mxu0 0
        %1710 = vmatmul.mubr.bf16.gmra.mrb[0].mxu0 %v1528
        %v1711 = vpop.f32.mrb[0].mxu0
        %v1712 = vadd.f32 0.0, %v1711
        %v1713 = vpop.f32.mrb[0].mxu0
        %v1714 = vpop.f32.mrb[0].mxu0
        %v1715 = vadd.f32 0.0, %v1714
        %v1716 = vpop.f32.mrb[0].mxu0
        %1717 = vmatprep.mubr.bf16.mxu0 0
        %1718 = vmatmul.mubr.bf16.gmra.mrb[0].mxu0 %v1536
        %v1719 = vpop.f32.mrb[0].mxu0
        %v1720 = vadd.f32 0.0, %v1719
        %v1721 = vpop.f32.mrb[0].mxu0
        %v1722 = vpop.f32.mrb[0].mxu0
        %v1723 = vadd.f32 0.0, %v1722
        %v1724 = vpop.f32.mrb[0].mxu0
        %1725 = vmatprep.mubr.bf16.mxu0 0
        %1726 = vmatmul.mubr.bf16.gmra.mrb[0].mxu0 %v1544
        %v1727 = vpop.f32.mrb[0].mxu0
        %v1728 = vadd.f32 0.0, %v1727
        %v1729 = vpop.f32.mrb[0].mxu0
        %v1730 = vpop.f32.mrb[0].mxu0
        %v1731 = vadd.f32 0.0, %v1730
        %v1732 = vpop.f32.mrb[0].mxu0
        %1733 = vmatprep.mubr.bf16.mxu0 0
        %1734 = vmatmul.mubr.bf16.gmra.mrb[0].mxu0 %v1552
        %v1735 = vpop.f32.mrb[0].mxu0
        %v1736 = vadd.f32 0.0, %v1735
        %v1737 = vpop.f32.mrb[0].mxu0
        %v1738 = vpop.f32.mrb[0].mxu0
        %v1739 = vadd.f32 0.0, %v1738
        %v1740 = vpop.f32.mrb[0].mxu0
        %1741 = vmatprep.mubr.bf16.mxu0 0
        %1742 = vmatmul.mubr.bf16.gmra.mrb[0].mxu0 %v1560
        %v1743 = vpop.f32.mrb[0].mxu0
        %v1744 = vadd.f32 0.0, %v1743
        %v1745 = vpop.f32.mrb[0].mxu0
        %v1746 = vpop.f32.mrb[0].mxu0
        %v1747 = vadd.f32 0.0, %v1746
        %v1748 = vpop.f32.mrb[0].mxu0
        %1749 = vmatprep.mubr.bf16.mxu0 0
        %1750 = vmatmul.mubr.bf16.gmra.mrb[0].mxu0 %v1568
        %v1751 = vpop.f32.mrb[0].mxu0
        %v1752 = vadd.f32 0.0, %v1751
        %v1753 = vpop.f32.mrb[0].mxu0
        %v1754 = vpop.f32.mrb[0].mxu0
        %v1755 = vadd.f32 0.0, %v1754
        %v1756 = vpop.f32.mrb[0].mxu0
        %1757 = vmatprep.mubr.bf16.mxu0 0
        %1758 = vmatmul.mubr.bf16.gmra.mrb[0].mxu0 %v1576
        %v1759 = vpop.f32.mrb[0].mxu0
        %v1760 = vadd.f32 0.0, %v1759
        %v1761 = vpop.f32.mrb[0].mxu0
        %v1762 = vpop.f32.mrb[0].mxu0
        %v1763 = vadd.f32 0.0, %v1762
        %v1764 = vpop.f32.mrb[0].mxu0
        %1765 = vmatprep.mubr.bf16.mxu0 0
        %1766 = vmatmul.mubr.bf16.gmra.mrb[0].mxu0 %v1584
        %v1767 = vpop.f32.mrb[0].mxu0
        %v1768 = vadd.f32 0.0, %v1767
        %v1769 = vpop.f32.mrb[0].mxu0
        %v1770 = vpop.f32.mrb[0].mxu0
        %v1771 = vadd.f32 0.0, %v1770
        %v1772 = vpop.f32.mrb[0].mxu0
        %1773 = vmatprep.mubr.bf16.mxu0 0
        %1774 = vmatmul.mubr.bf16.gmra.mrb[0].mxu0 %v1592
        %v1775 = vpop.f32.mrb[0].mxu0
        %v1776 = vadd.f32 0.0, %v1775
        %v1777 = vpop.f32.mrb[0].mxu0
        %v1778 = vpop.f32.mrb[0].mxu0
        %v1779 = vadd.f32 0.0, %v1778
        %v1780 = vpop.f32.mrb[0].mxu0
        %1781 = vdwg.mxu0
        %v1782 = vadd.f32 %v1364, %v1688
        %v1783 = vadd.f32 %v1365, %v1691
        %v1784 = vadd.f32 %v1366, %v1696
        %v1785 = vadd.f32 %v1367, %v1699
        %v1786 = vadd.f32 %v1368, %v1704
        %v1787 = vadd.f32 %v1369, %v1707
        %v1788 = vadd.f32 %v1370, %v1712
        %v1789 = vadd.f32 %v1371, %v1715
        %v1790 = vadd.f32 %v1372, %v1720
        %v1791 = vadd.f32 %v1373, %v1723
        %v1792 = vadd.f32 %v1374, %v1728
        %v1793 = vadd.f32 %v1375, %v1731
        %v1794 = vadd.f32 %v1376, %v1736
        %v1795 = vadd.f32 %v1377, %v1739
        %v1796 = vadd.f32 %v1378, %v1744
        %v1797 = vadd.f32 %v1379, %v1747
        %v1798 = vadd.f32 %v1380, %v1752
        %v1799 = vadd.f32 %v1381, %v1755
        %v1800 = vadd.f32 %v1382, %v1760
        %v1801 = vadd.f32 %v1383, %v1763
        %v1802 = vadd.f32 %v1384, %v1768
        %v1803 = vadd.f32 %v1385, %v1771
        %v1804 = vadd.f32 %v1386, %v1776
        %v1805 = vadd.f32 %v1387, %v1779
        %v1806 = vld [vmem:[%s213 + $0xc] sm:$0xe]
        %s1807 = scalar_lea.vmem [#allocation4], 320
        %v1808 = vld [vmem:[%s1807] sm:$0xf]
        %v1809 = vld [vmem:[%s1807 + $0x4] sm:$0xf]
        %v1810 = vld [vmem:[%s1807 + $0x8] sm:$0xf]
        %v1811 = vld [vmem:[%s1807 + $0xc] sm:$0xf]
        %v1812 = vld [vmem:[%s1807 + $0x10] sm:$0xf]
        %v1813 = vld [vmem:[%s1807 + $0x14] sm:$0xf]
        %v1814 = vld [vmem:[%s1807 + $0x18] sm:$0xf]
        %v1815 = vld [vmem:[%s1807 + $0x1c] sm:$0xf]
        %v1816 = vld [vmem:[%s1807 + $0x20] sm:$0xf]
        %v1817 = vld [vmem:[%s1807 + $0x24] sm:$0xf]
        %v1818 = vld [vmem:[%s1807 + $0x28] sm:$0xf]
        %v1819 = vld [vmem:[%s1807 + $0x2c] sm:$0xf]
        %v1820 = vld [vmem:[%s1807 + $0x30] sm:$0xf]
        %v1821 = vld [vmem:[%s1807 + $0x34] sm:$0xf]
        %v1822 = vld [vmem:[%s1807 + $0x38] sm:$0xf]
        %v1823 = vld [vmem:[%s1807 + $0x3c] sm:$0xf]
        %v1825 = vunpack.c.l.b16 %v1806
        %v1826 = vpack.c.b16 %v1456, %v1825
        %v1827 = vrot.slane %v1826, 1
        %v1828 = vrot.slane %v1481, 1
        %v1829 = vsel %vm835, %v1827, %v1828
        %v1830 = vrot.slane %v1482, 1
        %v1831 = vsel %vm835, %v1828, %v1830
        %v1832 = vrot.slane %v1483, 1
        %v1833 = vsel %vm835, %v1830, %v1832
        %v1834 = vrot.slane %v1484, 1
        %v1835 = vsel %vm835, %v1832, %v1834
        %v1836 = vrot.slane %v1485, 1
        %v1837 = vsel %vm835, %v1834, %v1836
        %v1838 = vrot.slane %v1486, 1
        %v1839 = vsel %vm835, %v1836, %v1838
        %v1840 = vrot.slane %v1487, 1
        %v1841 = vsel %vm835, %v1838, %v1840
        %v1842 = vrot.slane %v1488, 1
        %v1843 = vsel %vm835, %v1840, %v1842
        %v1844 = vrot.slane %v1489, 1
        %v1845 = vsel %vm835, %v1842, %v1844
        %v1846 = vrot.slane %v1490, 1
        %v1847 = vsel %vm835, %v1844, %v1846
        %v1848 = vrot.slane %v1491, 1
        %v1849 = vsel %vm835, %v1846, %v1848
        %v1850 = vrot.slane %v1492, 1
        %v1851 = vsel %vm835, %v1848, %v1850
        %v1880 = vunpack.c.l.b16 %v1808
        %v1881 = vunpack.c.l.b16 %v1809
        %v1882 = vunpack.c.l.b16 %v1810
        %v1883 = vunpack.c.l.b16 %v1811
        %v1884 = vunpack.c.l.b16 %v1812
        %v1885 = vunpack.c.l.b16 %v1813
        %v1886 = vunpack.c.l.b16 %v1814
        %v1887 = vunpack.c.l.b16 %v1815
        %v1888 = vunpack.c.l.b16 %v1816
        %v1889 = vunpack.c.l.b16 %v1817
        %v1890 = vunpack.c.l.b16 %v1818
        %v1891 = vunpack.c.l.b16 %v1819
        %v1892 = vunpack.c.l.b16 %v1820
        %v1893 = vunpack.c.l.b16 %v1821
        %v1894 = vunpack.c.l.b16 %v1822
        %v1895 = vunpack.c.l.b16 %v1823
        %v1896 = vpack.c.b16 %v1881, %v1880
        %v1897 = vpack.c.b16 %v1883, %v1882
        %v1898 = vpack.c.b16 %v1885, %v1884
        %v1899 = vpack.c.b16 %v1887, %v1886
        %v1900 = vpack.c.b16 %v1889, %v1888
        %v1901 = vpack.c.b16 %v1891, %v1890
        %v1902 = vpack.c.b16 %v1893, %v1892
        %v1903 = vpack.c.b16 %v1895, %v1894
        %1912 = vmatprep.subr.bf16.mxu0 0
        %1913 = vmatpush1.bf16.msra.mxu0 %v1896
        %1914 = vmatprep.subr.bf16.mxu0 0
        %1915 = vmatpush1.bf16.msra.mxu0 %v1897
        %1916 = vmatprep.subr.bf16.mxu0 0
        %1917 = vmatpush1.bf16.msra.mxu0 %v1898
        %1918 = vmatprep.subr.bf16.mxu0 0
        %1919 = vmatpush1.bf16.msra.mxu0 %v1899
        %1920 = vmatprep.subr.bf16.mxu0 0
        %1921 = vmatpush1.bf16.msra.mxu0 %v1900
        %1922 = vmatprep.subr.bf16.mxu0 0
        %1923 = vmatpush1.bf16.msra.mxu0 %v1901
        %1924 = vmatprep.subr.bf16.mxu0 0
        %1925 = vmatpush1.bf16.msra.mxu0 %v1902
        %1926 = vmatprep.subr.bf16.mxu0 0
        %1927 = vmatpush1.bf16.msra.mxu0 %v1903
        %1928 = vmatprep.subr.bf16.mxu0 0
        %1929 = vmatpush1.bf16.msra.mxu0 0
        %1930 = vmatprep.subr.bf16.mxu0 0
        %1931 = vmatpush1.bf16.msra.mxu0 0
        %1932 = vmatprep.subr.bf16.mxu0 0
        %1933 = vmatpush1.bf16.msra.mxu0 0
        %1934 = vmatprep.subr.bf16.mxu0 0
        %1935 = vmatpush1.bf16.msra.mxu0 0
        %1936 = vmatprep.subr.bf16.mxu0 0
        %1937 = vmatpush1.bf16.msra.mxu0 0
        %1938 = vmatprep.subr.bf16.mxu0 0
        %1939 = vmatpush1.bf16.msra.mxu0 0
        %1940 = vmatprep.subr.bf16.mxu0 0
        %1941 = vmatpush1.bf16.msra.mxu0 0
        %1942 = vmatprep.subr.bf16.mxu0 0
        %1943 = vmatpush1.bf16.msra.mxu0 0
        %1944 = vmatprep.mubr.bf16.mxu0 0
        %1945 = vmatmul.mubr.bf16.gmra.mrb[0].mxu0 %v1829
        %v1946 = vpop.f32.mrb[0].mxu0
        %v1947 = vadd.f32 0.0, %v1946
        %v1948 = vpop.f32.mrb[0].mxu0
        %v1949 = vpop.f32.mrb[0].mxu0
        %v1950 = vadd.f32 0.0, %v1949
        %v1951 = vpop.f32.mrb[0].mxu0
        %1952 = vmatprep.mubr.bf16.mxu0 0
        %1953 = vmatmul.mubr.bf16.gmra.mrb[0].mxu0 %v1831
        %v1954 = vpop.f32.mrb[0].mxu0
        %v1955 = vadd.f32 0.0, %v1954
        %v1956 = vpop.f32.mrb[0].mxu0
        %v1957 = vpop.f32.mrb[0].mxu0
        %v1958 = vadd.f32 0.0, %v1957
        %v1959 = vpop.f32.mrb[0].mxu0
        %1960 = vmatprep.mubr.bf16.mxu0 0
        %1961 = vmatmul.mubr.bf16.gmra.mrb[0].mxu0 %v1833
        %v1962 = vpop.f32.mrb[0].mxu0
        %v1963 = vadd.f32 0.0, %v1962
        %v1964 = vpop.f32.mrb[0].mxu0
        %v1965 = vpop.f32.mrb[0].mxu0
        %v1966 = vadd.f32 0.0, %v1965
        %v1967 = vpop.f32.mrb[0].mxu0
        %1968 = vmatprep.mubr.bf16.mxu0 0
        %1969 = vmatmul.mubr.bf16.gmra.mrb[0].mxu0 %v1835
        %v1970 = vpop.f32.mrb[0].mxu0
        %v1971 = vadd.f32 0.0, %v1970
        %v1972 = vpop.f32.mrb[0].mxu0
        %v1973 = vpop.f32.mrb[0].mxu0
        %v1974 = vadd.f32 0.0, %v1973
        %v1975 = vpop.f32.mrb[0].mxu0
        %1976 = vmatprep.mubr.bf16.mxu0 0
        %1977 = vmatmul.mubr.bf16.gmra.mrb[0].mxu0 %v1837
        %v1978 = vpop.f32.mrb[0].mxu0
        %v1979 = vadd.f32 0.0, %v1978
        %v1980 = vpop.f32.mrb[0].mxu0
        %v1981 = vpop.f32.mrb[0].mxu0
        %v1982 = vadd.f32 0.0, %v1981
        %v1983 = vpop.f32.mrb[0].mxu0
        %1984 = vmatprep.mubr.bf16.mxu0 0
        %1985 = vmatmul.mubr.bf16.gmra.mrb[0].mxu0 %v1839
        %v1986 = vpop.f32.mrb[0].mxu0
        %v1987 = vadd.f32 0.0, %v1986
        %v1988 = vpop.f32.mrb[0].mxu0
        %v1989 = vpop.f32.mrb[0].mxu0
        %v1990 = vadd.f32 0.0, %v1989
        %v1991 = vpop.f32.mrb[0].mxu0
        %1992 = vmatprep.mubr.bf16.mxu0 0
        %1993 = vmatmul.mubr.bf16.gmra.mrb[0].mxu0 %v1841
        %v1994 = vpop.f32.mrb[0].mxu0
        %v1995 = vadd.f32 0.0, %v1994
        %v1996 = vpop.f32.mrb[0].mxu0
        %v1997 = vpop.f32.mrb[0].mxu0
        %v1998 = vadd.f32 0.0, %v1997
        %v1999 = vpop.f32.mrb[0].mxu0
        %2000 = vmatprep.mubr.bf16.mxu0 0
        %2001 = vmatmul.mubr.bf16.gmra.mrb[0].mxu0 %v1843
        %v2002 = vpop.f32.mrb[0].mxu0
        %v2003 = vadd.f32 0.0, %v2002
        %v2004 = vpop.f32.mrb[0].mxu0
        %v2005 = vpop.f32.mrb[0].mxu0
        %v2006 = vadd.f32 0.0, %v2005
        %v2007 = vpop.f32.mrb[0].mxu0
        %2008 = vmatprep.mubr.bf16.mxu0 0
        %2009 = vmatmul.mubr.bf16.gmra.mrb[0].mxu0 %v1845
        %v2010 = vpop.f32.mrb[0].mxu0
        %v2011 = vadd.f32 0.0, %v2010
        %v2012 = vpop.f32.mrb[0].mxu0
        %v2013 = vpop.f32.mrb[0].mxu0
        %v2014 = vadd.f32 0.0, %v2013
        %v2015 = vpop.f32.mrb[0].mxu0
        %2016 = vmatprep.mubr.bf16.mxu0 0
        %2017 = vmatmul.mubr.bf16.gmra.mrb[0].mxu0 %v1847
        %v2018 = vpop.f32.mrb[0].mxu0
        %v2019 = vadd.f32 0.0, %v2018
        %v2020 = vpop.f32.mrb[0].mxu0
        %v2021 = vpop.f32.mrb[0].mxu0
        %v2022 = vadd.f32 0.0, %v2021
        %v2023 = vpop.f32.mrb[0].mxu0
        %2024 = vmatprep.mubr.bf16.mxu0 0
        %2025 = vmatmul.mubr.bf16.gmra.mrb[0].mxu0 %v1849
        %v2026 = vpop.f32.mrb[0].mxu0
        %v2027 = vadd.f32 0.0, %v2026
        %v2028 = vpop.f32.mrb[0].mxu0
        %v2029 = vpop.f32.mrb[0].mxu0
        %v2030 = vadd.f32 0.0, %v2029
        %v2031 = vpop.f32.mrb[0].mxu0
        %2032 = vmatprep.mubr.bf16.mxu0 0
        %2033 = vmatmul.mubr.bf16.gmra.mrb[0].mxu0 %v1851
        %v2034 = vpop.f32.mrb[0].mxu0
        %v2035 = vadd.f32 0.0, %v2034
        %v2036 = vpop.f32.mrb[0].mxu0
        %v2037 = vpop.f32.mrb[0].mxu0
        %v2038 = vadd.f32 0.0, %v2037
        %v2039 = vpop.f32.mrb[0].mxu0
        %2040 = vdwg.mxu0
        %v2041 = vadd.f32 %v1782, %v1947
        %v2042 = vadd.f32 %v1783, %v1950
        %v2043 = vadd.f32 %v1784, %v1955
        %v2044 = vadd.f32 %v1785, %v1958
        %v2045 = vadd.f32 %v1786, %v1963
        %v2046 = vadd.f32 %v1787, %v1966
        %v2047 = vadd.f32 %v1788, %v1971
        %v2048 = vadd.f32 %v1789, %v1974
        %v2049 = vadd.f32 %v1790, %v1979
        %v2050 = vadd.f32 %v1791, %v1982
        %v2051 = vadd.f32 %v1792, %v1987
        %v2052 = vadd.f32 %v1793, %v1990
        %v2053 = vadd.f32 %v1794, %v1995
        %v2054 = vadd.f32 %v1795, %v1998
        %v2055 = vadd.f32 %v1796, %v2003
        %v2056 = vadd.f32 %v1797, %v2006
        %v2057 = vadd.f32 %v1798, %v2011
        %v2058 = vadd.f32 %v1799, %v2014
        %v2059 = vadd.f32 %v1800, %v2019
        %v2060 = vadd.f32 %v1801, %v2022
        %v2061 = vadd.f32 %v1802, %v2027
        %v2062 = vadd.f32 %v1803, %v2030
        %v2063 = vadd.f32 %v1804, %v2035
        %v2064 = vadd.f32 %v1805, %v2038
        %v2065 = vld [vmem:[%s213 + $0x18] sm:$0xf]
        %v2066 = vld [vmem:[%s213 + $0x1c] sm:$0xf]
        %v2067 = vld [vmem:[%s213 + $0x20] sm:$0xf]
        %v2068 = vld [vmem:[%s213 + $0x24] sm:$0xf]
        %v2069 = vld [vmem:[%s213 + $0x28] sm:$0xf]
        %v2070 = vld [vmem:[%s213 + $0x2c] sm:$0xf]
        %v2071 = vld [vmem:[%s213 + $0x30] sm:$0xf]
        %v2072 = vld [vmem:[%s213 + $0x34] sm:$0xf]
        %v2073 = vld [vmem:[%s213 + $0x38] sm:$0xf]
        %v2074 = vld [vmem:[%s213 + $0x3c] sm:$0xf]
        %v2075 = vld [vmem:[%s213 + $0x40] sm:$0xf]
        %v2076 = vld [vmem:[%s213 + $0x44] sm:$0xf]
        %v2077 = vld [vmem:[%s213 + $0x48] sm:$0xf]
        %v2078 = vld [vmem:[%s213 + $0x4c] sm:$0xf]
        %v2079 = vld [vmem:[%s213 + $0x50] sm:$0xf]
        %v2080 = vld [vmem:[%s213 + $0x54] sm:$0xf]
        %v2081 = vld [vmem:[%s213 + $0x58] sm:$0xf]
        %v2082 = vld [vmem:[%s213 + $0x5c] sm:$0xf]
        %v2083 = vld [vmem:[%s213 + $0x60] sm:$0xf]
        %v2084 = vld [vmem:[%s213 + $0x64] sm:$0xf]
        %v2085 = vld [vmem:[%s213 + $0x68] sm:$0xf]
        %v2086 = vld [vmem:[%s213 + $0x6c] sm:$0xf]
        %v2087 = vld [vmem:[%s213 + $0x70] sm:$0xf]
        %v2088 = vld [vmem:[%s213 + $0x74] sm:$0xf]
        %s2089 = scalar_lea.vmem [#allocation4], 384
        %v2090 = vld [vmem:[%s2089] sm:$0xf]
        %v2091 = vld [vmem:[%s2089 + $0x4] sm:$0xf]
        %v2092 = vld [vmem:[%s2089 + $0x8] sm:$0xf]
        %v2093 = vld [vmem:[%s2089 + $0xc] sm:$0xf]
        %v2094 = vld [vmem:[%s2089 + $0x10] sm:$0xf]
        %v2095 = vld [vmem:[%s2089 + $0x14] sm:$0xf]
        %v2096 = vld [vmem:[%s2089 + $0x18] sm:$0xf]
        %v2097 = vld [vmem:[%s2089 + $0x1c] sm:$0xf]
        %v2098 = vld [vmem:[%s2089 + $0x20] sm:$0xf]
        %v2099 = vld [vmem:[%s2089 + $0x24] sm:$0xf]
        %v2100 = vld [vmem:[%s2089 + $0x28] sm:$0xf]
        %v2101 = vld [vmem:[%s2089 + $0x2c] sm:$0xf]
        %v2102 = vld [vmem:[%s2089 + $0x30] sm:$0xf]
        %v2103 = vld [vmem:[%s2089 + $0x34] sm:$0xf]
        %v2104 = vld [vmem:[%s2089 + $0x38] sm:$0xf]
        %v2105 = vld [vmem:[%s2089 + $0x3c] sm:$0xf]
        %v2130 = vunpack.c.l.b16 %v2065
        %v2131 = vunpack.c.l.b16 %v2066
        %v2132 = vunpack.c.l.b16 %v2067
        %v2133 = vunpack.c.l.b16 %v2068
        %v2134 = vunpack.c.l.b16 %v2069
        %v2135 = vunpack.c.l.b16 %v2070
        %v2136 = vunpack.c.l.b16 %v2071
        %v2137 = vunpack.c.l.b16 %v2072
        %v2138 = vunpack.c.l.b16 %v2073
        %v2139 = vunpack.c.l.b16 %v2074
        %v2140 = vunpack.c.l.b16 %v2075
        %v2141 = vunpack.c.l.b16 %v2076
        %v2142 = vunpack.c.l.b16 %v2077
        %v2143 = vunpack.c.l.b16 %v2078
        %v2144 = vunpack.c.l.b16 %v2079
        %v2145 = vunpack.c.l.b16 %v2080
        %v2146 = vunpack.c.l.b16 %v2081
        %v2147 = vunpack.c.l.b16 %v2082
        %v2148 = vunpack.c.l.b16 %v2083
        %v2149 = vunpack.c.l.b16 %v2084
        %v2150 = vunpack.c.l.b16 %v2085
        %v2151 = vunpack.c.l.b16 %v2086
        %v2152 = vunpack.c.l.b16 %v2087
        %v2153 = vunpack.c.l.b16 %v2088
        %v2154 = vpack.c.b16 %v2131, %v2130
        %v2155 = vpack.c.b16 %v2133, %v2132
        %v2156 = vpack.c.b16 %v2135, %v2134
        %v2157 = vpack.c.b16 %v2137, %v2136
        %v2158 = vpack.c.b16 %v2139, %v2138
        %v2159 = vpack.c.b16 %v2141, %v2140
        %v2160 = vpack.c.b16 %v2143, %v2142
        %v2161 = vpack.c.b16 %v2145, %v2144
        %v2162 = vpack.c.b16 %v2147, %v2146
        %v2163 = vpack.c.b16 %v2149, %v2148
        %v2164 = vpack.c.b16 %v2151, %v2150
        %v2165 = vpack.c.b16 %v2153, %v2152
        %v2194 = vunpack.c.l.b16 %v2090
        %v2195 = vunpack.c.l.b16 %v2091
        %v2196 = vunpack.c.l.b16 %v2092
        %v2197 = vunpack.c.l.b16 %v2093
        %v2198 = vunpack.c.l.b16 %v2094
        %v2199 = vunpack.c.l.b16 %v2095
        %v2200 = vunpack.c.l.b16 %v2096
        %v2201 = vunpack.c.l.b16 %v2097
        %v2202 = vunpack.c.l.b16 %v2098
        %v2203 = vunpack.c.l.b16 %v2099
        %v2204 = vunpack.c.l.b16 %v2100
        %v2205 = vunpack.c.l.b16 %v2101
        %v2206 = vunpack.c.l.b16 %v2102
        %v2207 = vunpack.c.l.b16 %v2103
        %v2208 = vunpack.c.l.b16 %v2104
        %v2209 = vunpack.c.l.b16 %v2105
        %v2210 = vpack.c.b16 %v2195, %v2194
        %v2211 = vpack.c.b16 %v2197, %v2196
        %v2212 = vpack.c.b16 %v2199, %v2198
        %v2213 = vpack.c.b16 %v2201, %v2200
        %v2214 = vpack.c.b16 %v2203, %v2202
        %v2215 = vpack.c.b16 %v2205, %v2204
        %v2216 = vpack.c.b16 %v2207, %v2206
        %v2217 = vpack.c.b16 %v2209, %v2208
        %2226 = vmatprep.subr.bf16.mxu0 0
        %2227 = vmatpush1.bf16.msra.mxu0 %v2210
        %2228 = vmatprep.subr.bf16.mxu0 0
        %2229 = vmatpush1.bf16.msra.mxu0 %v2211
        %2230 = vmatprep.subr.bf16.mxu0 0
        %2231 = vmatpush1.bf16.msra.mxu0 %v2212
        %2232 = vmatprep.subr.bf16.mxu0 0
        %2233 = vmatpush1.bf16.msra.mxu0 %v2213
        %2234 = vmatprep.subr.bf16.mxu0 0
        %2235 = vmatpush1.bf16.msra.mxu0 %v2214
        %2236 = vmatprep.subr.bf16.mxu0 0
        %2237 = vmatpush1.bf16.msra.mxu0 %v2215
        %2238 = vmatprep.subr.bf16.mxu0 0
        %2239 = vmatpush1.bf16.msra.mxu0 %v2216
        %2240 = vmatprep.subr.bf16.mxu0 0
        %2241 = vmatpush1.bf16.msra.mxu0 %v2217
        %2242 = vmatprep.subr.bf16.mxu0 0
        %2243 = vmatpush1.bf16.msra.mxu0 0
        %2244 = vmatprep.subr.bf16.mxu0 0
        %2245 = vmatpush1.bf16.msra.mxu0 0
        %2246 = vmatprep.subr.bf16.mxu0 0
        %2247 = vmatpush1.bf16.msra.mxu0 0
        %2248 = vmatprep.subr.bf16.mxu0 0
        %2249 = vmatpush1.bf16.msra.mxu0 0
        %2250 = vmatprep.subr.bf16.mxu0 0
        %2251 = vmatpush1.bf16.msra.mxu0 0
        %2252 = vmatprep.subr.bf16.mxu0 0
        %2253 = vmatpush1.bf16.msra.mxu0 0
        %2254 = vmatprep.subr.bf16.mxu0 0
        %2255 = vmatpush1.bf16.msra.mxu0 0
        %2256 = vmatprep.subr.bf16.mxu0 0
        %2257 = vmatpush1.bf16.msra.mxu0 0
        %2258 = vmatprep.mubr.bf16.mxu0 0
        %2259 = vmatmul.mubr.bf16.gmra.mrb[0].mxu0 %v2154
        %v2260 = vpop.f32.mrb[0].mxu0
        %v2261 = vadd.f32 0.0, %v2260
        %v2262 = vpop.f32.mrb[0].mxu0
        %v2263 = vpop.f32.mrb[0].mxu0
        %v2264 = vadd.f32 0.0, %v2263
        %v2265 = vpop.f32.mrb[0].mxu0
        %2266 = vmatprep.mubr.bf16.mxu0 0
        %2267 = vmatmul.mubr.bf16.gmra.mrb[0].mxu0 %v2155
        %v2268 = vpop.f32.mrb[0].mxu0
        %v2269 = vadd.f32 0.0, %v2268
        %v2270 = vpop.f32.mrb[0].mxu0
        %v2271 = vpop.f32.mrb[0].mxu0
        %v2272 = vadd.f32 0.0, %v2271
        %v2273 = vpop.f32.mrb[0].mxu0
        %2274 = vmatprep.mubr.bf16.mxu0 0
        %2275 = vmatmul.mubr.bf16.gmra.mrb[0].mxu0 %v2156
        %v2276 = vpop.f32.mrb[0].mxu0
        %v2277 = vadd.f32 0.0, %v2276
        %v2278 = vpop.f32.mrb[0].mxu0
        %v2279 = vpop.f32.mrb[0].mxu0
        %v2280 = vadd.f32 0.0, %v2279
        %v2281 = vpop.f32.mrb[0].mxu0
        %2282 = vmatprep.mubr.bf16.mxu0 0
        %2283 = vmatmul.mubr.bf16.gmra.mrb[0].mxu0 %v2157
        %v2284 = vpop.f32.mrb[0].mxu0
        %v2285 = vadd.f32 0.0, %v2284
        %v2286 = vpop.f32.mrb[0].mxu0
        %v2287 = vpop.f32.mrb[0].mxu0
        %v2288 = vadd.f32 0.0, %v2287
        %v2289 = vpop.f32.mrb[0].mxu0
        %2290 = vmatprep.mubr.bf16.mxu0 0
        %2291 = vmatmul.mubr.bf16.gmra.mrb[0].mxu0 %v2158
        %v2292 = vpop.f32.mrb[0].mxu0
        %v2293 = vadd.f32 0.0, %v2292
        %v2294 = vpop.f32.mrb[0].mxu0
        %v2295 = vpop.f32.mrb[0].mxu0
        %v2296 = vadd.f32 0.0, %v2295
        %v2297 = vpop.f32.mrb[0].mxu0
        %2298 = vmatprep.mubr.bf16.mxu0 0
        %2299 = vmatmul.mubr.bf16.gmra.mrb[0].mxu0 %v2159
        %v2300 = vpop.f32.mrb[0].mxu0
        %v2301 = vadd.f32 0.0, %v2300
        %v2302 = vpop.f32.mrb[0].mxu0
        %v2303 = vpop.f32.mrb[0].mxu0
        %v2304 = vadd.f32 0.0, %v2303
        %v2305 = vpop.f32.mrb[0].mxu0
        %2306 = vmatprep.mubr.bf16.mxu0 0
        %2307 = vmatmul.mubr.bf16.gmra.mrb[0].mxu0 %v2160
        %v2308 = vpop.f32.mrb[0].mxu0
        %v2309 = vadd.f32 0.0, %v2308
        %v2310 = vpop.f32.mrb[0].mxu0
        %v2311 = vpop.f32.mrb[0].mxu0
        %v2312 = vadd.f32 0.0, %v2311
        %v2313 = vpop.f32.mrb[0].mxu0
        %2314 = vmatprep.mubr.bf16.mxu0 0
        %2315 = vmatmul.mubr.bf16.gmra.mrb[0].mxu0 %v2161
        %v2316 = vpop.f32.mrb[0].mxu0
        %v2317 = vadd.f32 0.0, %v2316
        %v2318 = vpop.f32.mrb[0].mxu0
        %v2319 = vpop.f32.mrb[0].mxu0
        %v2320 = vadd.f32 0.0, %v2319
        %v2321 = vpop.f32.mrb[0].mxu0
        %2322 = vmatprep.mubr.bf16.mxu0 0
        %2323 = vmatmul.mubr.bf16.gmra.mrb[0].mxu0 %v2162
        %v2324 = vpop.f32.mrb[0].mxu0
        %v2325 = vadd.f32 0.0, %v2324
        %v2326 = vpop.f32.mrb[0].mxu0
        %v2327 = vpop.f32.mrb[0].mxu0
        %v2328 = vadd.f32 0.0, %v2327
        %v2329 = vpop.f32.mrb[0].mxu0
        %2330 = vmatprep.mubr.bf16.mxu0 0
        %2331 = vmatmul.mubr.bf16.gmra.mrb[0].mxu0 %v2163
        %v2332 = vpop.f32.mrb[0].mxu0
        %v2333 = vadd.f32 0.0, %v2332
        %v2334 = vpop.f32.mrb[0].mxu0
        %v2335 = vpop.f32.mrb[0].mxu0
        %v2336 = vadd.f32 0.0, %v2335
        %v2337 = vpop.f32.mrb[0].mxu0
        %2338 = vmatprep.mubr.bf16.mxu0 0
        %2339 = vmatmul.mubr.bf16.gmra.mrb[0].mxu0 %v2164
        %v2340 = vpop.f32.mrb[0].mxu0
        %v2341 = vadd.f32 0.0, %v2340
        %v2342 = vpop.f32.mrb[0].mxu0
        %v2343 = vpop.f32.mrb[0].mxu0
        %v2344 = vadd.f32 0.0, %v2343
        %v2345 = vpop.f32.mrb[0].mxu0
        %2346 = vmatprep.mubr.bf16.mxu0 0
        %2347 = vmatmul.mubr.bf16.gmra.mrb[0].mxu0 %v2165
        %v2348 = vpop.f32.mrb[0].mxu0
        %v2349 = vadd.f32 0.0, %v2348
        %v2350 = vpop.f32.mrb[0].mxu0
        %v2351 = vpop.f32.mrb[0].mxu0
        %v2352 = vadd.f32 0.0, %v2351
        %v2353 = vpop.f32.mrb[0].mxu0
        %2354 = vdwg.mxu0
        %v2355 = vadd.f32 %v2041, %v2261
        %v2356 = vadd.f32 %v2042, %v2264
        %v2357 = vadd.f32 %v2043, %v2269
        %v2358 = vadd.f32 %v2044, %v2272
        %v2359 = vadd.f32 %v2045, %v2277
        %v2360 = vadd.f32 %v2046, %v2280
        %v2361 = vadd.f32 %v2047, %v2285
        %v2362 = vadd.f32 %v2048, %v2288
        %v2363 = vadd.f32 %v2049, %v2293
        %v2364 = vadd.f32 %v2050, %v2296
        %v2365 = vadd.f32 %v2051, %v2301
        %v2366 = vadd.f32 %v2052, %v2304
        %v2367 = vadd.f32 %v2053, %v2309
        %v2368 = vadd.f32 %v2054, %v2312
        %v2369 = vadd.f32 %v2055, %v2317
        %v2370 = vadd.f32 %v2056, %v2320
        %v2371 = vadd.f32 %v2057, %v2325
        %v2372 = vadd.f32 %v2058, %v2328
        %v2373 = vadd.f32 %v2059, %v2333
        %v2374 = vadd.f32 %v2060, %v2336
        %v2375 = vadd.f32 %v2061, %v2341
        %v2376 = vadd.f32 %v2062, %v2344
        %v2377 = vadd.f32 %v2063, %v2349
        %v2378 = vadd.f32 %v2064, %v2352
        %v2379 = vld [vmem:[%s213 + $0x18] sm:$0xf]
        %v2380 = vld [vmem:[%s213 + $0x1c] sm:$0xf]
        %v2381 = vld [vmem:[%s213 + $0x20] sm:$0xf]
        %v2382 = vld [vmem:[%s213 + $0x24] sm:$0xf]
        %v2383 = vld [vmem:[%s213 + $0x28] sm:$0xf]
        %v2384 = vld [vmem:[%s213 + $0x2c] sm:$0xf]
        %v2385 = vld [vmem:[%s213 + $0x30] sm:$0xf]
        %v2386 = vld [vmem:[%s213 + $0x34] sm:$0xf]
        %v2387 = vld [vmem:[%s213 + $0x38] sm:$0xf]
        %v2388 = vld [vmem:[%s213 + $0x3c] sm:$0xf]
        %v2389 = vld [vmem:[%s213 + $0x40] sm:$0xf]
        %v2390 = vld [vmem:[%s213 + $0x44] sm:$0xf]
        %v2391 = vld [vmem:[%s213 + $0x48] sm:$0xf]
        %v2392 = vld [vmem:[%s213 + $0x4c] sm:$0xf]
        %v2393 = vld [vmem:[%s213 + $0x50] sm:$0xf]
        %v2394 = vld [vmem:[%s213 + $0x54] sm:$0xf]
        %v2395 = vld [vmem:[%s213 + $0x58] sm:$0xf]
        %v2396 = vld [vmem:[%s213 + $0x5c] sm:$0xf]
        %v2397 = vld [vmem:[%s213 + $0x60] sm:$0xf]
        %v2398 = vld [vmem:[%s213 + $0x64] sm:$0xf]
        %v2399 = vld [vmem:[%s213 + $0x68] sm:$0xf]
        %v2400 = vld [vmem:[%s213 + $0x6c] sm:$0xf]
        %v2401 = vld [vmem:[%s213 + $0x70] sm:$0xf]
        %v2402 = vld [vmem:[%s213 + $0x74] sm:$0xf]
        %v2403 = vld [vmem:[%s213 + $0x78] sm:$0x1]
        %s2404 = scalar_lea.vmem [#allocation4], 448
        %v2405 = vld [vmem:[%s2404] sm:$0xf]
        %v2406 = vld [vmem:[%s2404 + $0x4] sm:$0xf]
        %v2407 = vld [vmem:[%s2404 + $0x8] sm:$0xf]
        %v2408 = vld [vmem:[%s2404 + $0xc] sm:$0xf]
        %v2409 = vld [vmem:[%s2404 + $0x10] sm:$0xf]
        %v2410 = vld [vmem:[%s2404 + $0x14] sm:$0xf]
        %v2411 = vld [vmem:[%s2404 + $0x18] sm:$0xf]
        %v2412 = vld [vmem:[%s2404 + $0x1c] sm:$0xf]
        %v2413 = vld [vmem:[%s2404 + $0x20] sm:$0xf]
        %v2414 = vld [vmem:[%s2404 + $0x24] sm:$0xf]
        %v2415 = vld [vmem:[%s2404 + $0x28] sm:$0xf]
        %v2416 = vld [vmem:[%s2404 + $0x2c] sm:$0xf]
        %v2417 = vld [vmem:[%s2404 + $0x30] sm:$0xf]
        %v2418 = vld [vmem:[%s2404 + $0x34] sm:$0xf]
        %v2419 = vld [vmem:[%s2404 + $0x38] sm:$0xf]
        %v2420 = vld [vmem:[%s2404 + $0x3c] sm:$0xf]
        %v2446 = vunpack.c.l.b16 %v2379
        %v2447 = vunpack.c.l.b16 %v2380
        %v2448 = vunpack.c.l.b16 %v2381
        %v2449 = vunpack.c.l.b16 %v2382
        %v2450 = vunpack.c.l.b16 %v2383
        %v2451 = vunpack.c.l.b16 %v2384
        %v2452 = vunpack.c.l.b16 %v2385
        %v2453 = vunpack.c.l.b16 %v2386
        %v2454 = vunpack.c.l.b16 %v2387
        %v2455 = vunpack.c.l.b16 %v2388
        %v2456 = vunpack.c.l.b16 %v2389
        %v2457 = vunpack.c.l.b16 %v2390
        %v2458 = vunpack.c.l.b16 %v2391
        %v2459 = vunpack.c.l.b16 %v2392
        %v2460 = vunpack.c.l.b16 %v2393
        %v2461 = vunpack.c.l.b16 %v2394
        %v2462 = vunpack.c.l.b16 %v2395
        %v2463 = vunpack.c.l.b16 %v2396
        %v2464 = vunpack.c.l.b16 %v2397
        %v2465 = vunpack.c.l.b16 %v2398
        %v2466 = vunpack.c.l.b16 %v2399
        %v2467 = vunpack.c.l.b16 %v2400
        %v2468 = vunpack.c.l.b16 %v2401
        %v2469 = vunpack.c.l.b16 %v2402
        %v2470 = vunpack.c.l.b16 %v2403
        %v2471 = vpack.c.b16 %v2447, %v2446
        %v2472 = vpack.c.b16 %v2449, %v2448
        %v2473 = vpack.c.b16 %v2451, %v2450
        %v2474 = vpack.c.b16 %v2453, %v2452
        %v2475 = vpack.c.b16 %v2455, %v2454
        %v2476 = vpack.c.b16 %v2457, %v2456
        %v2477 = vpack.c.b16 %v2459, %v2458
        %v2478 = vpack.c.b16 %v2461, %v2460
        %v2479 = vpack.c.b16 %v2463, %v2462
        %v2480 = vpack.c.b16 %v2465, %v2464
        %v2481 = vpack.c.b16 %v2467, %v2466
        %v2482 = vpack.c.b16 %v2469, %v2468
        %v2483 = vpack.c.b16 %v2470, %v2470
        %v2485 = vshrl.u32 %v2471, 16
        %v2487 = vshll.u32 %v2471, 16
        %v2489 = vrot.slane %v2487, 1
        %v2490 = vor.u32 %v2485, %v2489
        %v2492 = vshll.u32 %v2472, 16
        %v2494 = vrot.slane %v2492, 1
        %v2495 = vsel %vm335, %v2490, %v2494
        %v2496 = vshrl.u32 %v2472, 16
        %v2498 = vor.u32 %v2496, %v2494
        %v2500 = vshll.u32 %v2473, 16
        %v2502 = vrot.slane %v2500, 1
        %v2503 = vsel %vm335, %v2498, %v2502
        %v2504 = vshrl.u32 %v2473, 16
        %v2506 = vor.u32 %v2504, %v2502
        %v2508 = vshll.u32 %v2474, 16
        %v2510 = vrot.slane %v2508, 1
        %v2511 = vsel %vm335, %v2506, %v2510
        %v2512 = vshrl.u32 %v2474, 16
        %v2514 = vor.u32 %v2512, %v2510
        %v2516 = vshll.u32 %v2475, 16
        %v2518 = vrot.slane %v2516, 1
        %v2519 = vsel %vm335, %v2514, %v2518
        %v2520 = vshrl.u32 %v2475, 16
        %v2522 = vor.u32 %v2520, %v2518
        %v2524 = vshll.u32 %v2476, 16
        %v2526 = vrot.slane %v2524, 1
        %v2527 = vsel %vm335, %v2522, %v2526
        %v2528 = vshrl.u32 %v2476, 16
        %v2530 = vor.u32 %v2528, %v2526
        %v2532 = vshll.u32 %v2477, 16
        %v2534 = vrot.slane %v2532, 1
        %v2535 = vsel %vm335, %v2530, %v2534
        %v2536 = vshrl.u32 %v2477, 16
        %v2538 = vor.u32 %v2536, %v2534
        %v2540 = vshll.u32 %v2478, 16
        %v2542 = vrot.slane %v2540, 1
        %v2543 = vsel %vm335, %v2538, %v2542
        %v2544 = vshrl.u32 %v2478, 16
        %v2546 = vor.u32 %v2544, %v2542
        %v2548 = vshll.u32 %v2479, 16
        %v2550 = vrot.slane %v2548, 1
        %v2551 = vsel %vm335, %v2546, %v2550
        %v2552 = vshrl.u32 %v2479, 16
        %v2554 = vor.u32 %v2552, %v2550
        %v2556 = vshll.u32 %v2480, 16
        %v2558 = vrot.slane %v2556, 1
        %v2559 = vsel %vm335, %v2554, %v2558
        %v2560 = vshrl.u32 %v2480, 16
        %v2562 = vor.u32 %v2560, %v2558
        %v2564 = vshll.u32 %v2481, 16
        %v2566 = vrot.slane %v2564, 1
        %v2567 = vsel %vm335, %v2562, %v2566
        %v2568 = vshrl.u32 %v2481, 16
        %v2570 = vor.u32 %v2568, %v2566
        %v2572 = vshll.u32 %v2482, 16
        %v2574 = vrot.slane %v2572, 1
        %v2575 = vsel %vm335, %v2570, %v2574
        %v2576 = vshrl.u32 %v2482, 16
        %v2578 = vor.u32 %v2576, %v2574
        %v2580 = vshll.u32 %v2483, 16
        %v2582 = vrot.slane %v2580, 1
        %v2583 = vsel %vm335, %v2578, %v2582
        %v2612 = vunpack.c.l.b16 %v2405
        %v2613 = vunpack.c.l.b16 %v2406
        %v2614 = vunpack.c.l.b16 %v2407
        %v2615 = vunpack.c.l.b16 %v2408
        %v2616 = vunpack.c.l.b16 %v2409
        %v2617 = vunpack.c.l.b16 %v2410
        %v2618 = vunpack.c.l.b16 %v2411
        %v2619 = vunpack.c.l.b16 %v2412
        %v2620 = vunpack.c.l.b16 %v2413
        %v2621 = vunpack.c.l.b16 %v2414
        %v2622 = vunpack.c.l.b16 %v2415
        %v2623 = vunpack.c.l.b16 %v2416
        %v2624 = vunpack.c.l.b16 %v2417
        %v2625 = vunpack.c.l.b16 %v2418
        %v2626 = vunpack.c.l.b16 %v2419
        %v2627 = vunpack.c.l.b16 %v2420
        %v2628 = vpack.c.b16 %v2613, %v2612
        %v2629 = vpack.c.b16 %v2615, %v2614
        %v2630 = vpack.c.b16 %v2617, %v2616
        %v2631 = vpack.c.b16 %v2619, %v2618
        %v2632 = vpack.c.b16 %v2621, %v2620
        %v2633 = vpack.c.b16 %v2623, %v2622
        %v2634 = vpack.c.b16 %v2625, %v2624
        %v2635 = vpack.c.b16 %v2627, %v2626
        %2644 = vmatprep.subr.bf16.mxu0 0
        %2645 = vmatpush1.bf16.msra.mxu0 %v2628
        %2646 = vmatprep.subr.bf16.mxu0 0
        %2647 = vmatpush1.bf16.msra.mxu0 %v2629
        %2648 = vmatprep.subr.bf16.mxu0 0
        %2649 = vmatpush1.bf16.msra.mxu0 %v2630
        %2650 = vmatprep.subr.bf16.mxu0 0
        %2651 = vmatpush1.bf16.msra.mxu0 %v2631
        %2652 = vmatprep.subr.bf16.mxu0 0
        %2653 = vmatpush1.bf16.msra.mxu0 %v2632
        %2654 = vmatprep.subr.bf16.mxu0 0
        %2655 = vmatpush1.bf16.msra.mxu0 %v2633
        %2656 = vmatprep.subr.bf16.mxu0 0
        %2657 = vmatpush1.bf16.msra.mxu0 %v2634
        %2658 = vmatprep.subr.bf16.mxu0 0
        %2659 = vmatpush1.bf16.msra.mxu0 %v2635
        %2660 = vmatprep.subr.bf16.mxu0 0
        %2661 = vmatpush1.bf16.msra.mxu0 0
        %2662 = vmatprep.subr.bf16.mxu0 0
        %2663 = vmatpush1.bf16.msra.mxu0 0
        %2664 = vmatprep.subr.bf16.mxu0 0
        %2665 = vmatpush1.bf16.msra.mxu0 0
        %2666 = vmatprep.subr.bf16.mxu0 0
        %2667 = vmatpush1.bf16.msra.mxu0 0
        %2668 = vmatprep.subr.bf16.mxu0 0
        %2669 = vmatpush1.bf16.msra.mxu0 0
        %2670 = vmatprep.subr.bf16.mxu0 0
        %2671 = vmatpush1.bf16.msra.mxu0 0
        %2672 = vmatprep.subr.bf16.mxu0 0
        %2673 = vmatpush1.bf16.msra.mxu0 0
        %2674 = vmatprep.subr.bf16.mxu0 0
        %2675 = vmatpush1.bf16.msra.mxu0 0
        %2676 = vmatprep.mubr.bf16.mxu0 0
        %2677 = vmatmul.mubr.bf16.gmra.mrb[0].mxu0 %v2495
        %v2678 = vpop.f32.mrb[0].mxu0
        %v2679 = vadd.f32 0.0, %v2678
        %v2680 = vpop.f32.mrb[0].mxu0
        %v2681 = vpop.f32.mrb[0].mxu0
        %v2682 = vadd.f32 0.0, %v2681
        %v2683 = vpop.f32.mrb[0].mxu0
        %2684 = vmatprep.mubr.bf16.mxu0 0
        %2685 = vmatmul.mubr.bf16.gmra.mrb[0].mxu0 %v2503
        %v2686 = vpop.f32.mrb[0].mxu0
        %v2687 = vadd.f32 0.0, %v2686
        %v2688 = vpop.f32.mrb[0].mxu0
        %v2689 = vpop.f32.mrb[0].mxu0
        %v2690 = vadd.f32 0.0, %v2689
        %v2691 = vpop.f32.mrb[0].mxu0
        %2692 = vmatprep.mubr.bf16.mxu0 0
        %2693 = vmatmul.mubr.bf16.gmra.mrb[0].mxu0 %v2511
        %v2694 = vpop.f32.mrb[0].mxu0
        %v2695 = vadd.f32 0.0, %v2694
        %v2696 = vpop.f32.mrb[0].mxu0
        %v2697 = vpop.f32.mrb[0].mxu0
        %v2698 = vadd.f32 0.0, %v2697
        %v2699 = vpop.f32.mrb[0].mxu0
        %2700 = vmatprep.mubr.bf16.mxu0 0
        %2701 = vmatmul.mubr.bf16.gmra.mrb[0].mxu0 %v2519
        %v2702 = vpop.f32.mrb[0].mxu0
        %v2703 = vadd.f32 0.0, %v2702
        %v2704 = vpop.f32.mrb[0].mxu0
        %v2705 = vpop.f32.mrb[0].mxu0
        %v2706 = vadd.f32 0.0, %v2705
        %v2707 = vpop.f32.mrb[0].mxu0
        %2708 = vmatprep.mubr.bf16.mxu0 0
        %2709 = vmatmul.mubr.bf16.gmra.mrb[0].mxu0 %v2527
        %v2710 = vpop.f32.mrb[0].mxu0
        %v2711 = vadd.f32 0.0, %v2710
        %v2712 = vpop.f32.mrb[0].mxu0
        %v2713 = vpop.f32.mrb[0].mxu0
        %v2714 = vadd.f32 0.0, %v2713
        %v2715 = vpop.f32.mrb[0].mxu0
        %2716 = vmatprep.mubr.bf16.mxu0 0
        %2717 = vmatmul.mubr.bf16.gmra.mrb[0].mxu0 %v2535
        %v2718 = vpop.f32.mrb[0].mxu0
        %v2719 = vadd.f32 0.0, %v2718
        %v2720 = vpop.f32.mrb[0].mxu0
        %v2721 = vpop.f32.mrb[0].mxu0
        %v2722 = vadd.f32 0.0, %v2721
        %v2723 = vpop.f32.mrb[0].mxu0
        %2724 = vmatprep.mubr.bf16.mxu0 0
        %2725 = vmatmul.mubr.bf16.gmra.mrb[0].mxu0 %v2543
        %v2726 = vpop.f32.mrb[0].mxu0
        %v2727 = vadd.f32 0.0, %v2726
        %v2728 = vpop.f32.mrb[0].mxu0
        %v2729 = vpop.f32.mrb[0].mxu0
        %v2730 = vadd.f32 0.0, %v2729
        %v2731 = vpop.f32.mrb[0].mxu0
        %2732 = vmatprep.mubr.bf16.mxu0 0
        %2733 = vmatmul.mubr.bf16.gmra.mrb[0].mxu0 %v2551
        %v2734 = vpop.f32.mrb[0].mxu0
        %v2735 = vadd.f32 0.0, %v2734
        %v2736 = vpop.f32.mrb[0].mxu0
        %v2737 = vpop.f32.mrb[0].mxu0
        %v2738 = vadd.f32 0.0, %v2737
        %v2739 = vpop.f32.mrb[0].mxu0
        %2740 = vmatprep.mubr.bf16.mxu0 0
        %2741 = vmatmul.mubr.bf16.gmra.mrb[0].mxu0 %v2559
        %v2742 = vpop.f32.mrb[0].mxu0
        %v2743 = vadd.f32 0.0, %v2742
        %v2744 = vpop.f32.mrb[0].mxu0
        %v2745 = vpop.f32.mrb[0].mxu0
        %v2746 = vadd.f32 0.0, %v2745
        %v2747 = vpop.f32.mrb[0].mxu0
        %2748 = vmatprep.mubr.bf16.mxu0 0
        %2749 = vmatmul.mubr.bf16.gmra.mrb[0].mxu0 %v2567
        %v2750 = vpop.f32.mrb[0].mxu0
        %v2751 = vadd.f32 0.0, %v2750
        %v2752 = vpop.f32.mrb[0].mxu0
        %v2753 = vpop.f32.mrb[0].mxu0
        %v2754 = vadd.f32 0.0, %v2753
        %v2755 = vpop.f32.mrb[0].mxu0
        %2756 = vmatprep.mubr.bf16.mxu0 0
        %2757 = vmatmul.mubr.bf16.gmra.mrb[0].mxu0 %v2575
        %v2758 = vpop.f32.mrb[0].mxu0
        %v2759 = vadd.f32 0.0, %v2758
        %v2760 = vpop.f32.mrb[0].mxu0
        %v2761 = vpop.f32.mrb[0].mxu0
        %v2762 = vadd.f32 0.0, %v2761
        %v2763 = vpop.f32.mrb[0].mxu0
        %2764 = vmatprep.mubr.bf16.mxu0 0
        %2765 = vmatmul.mubr.bf16.gmra.mrb[0].mxu0 %v2583
        %v2766 = vpop.f32.mrb[0].mxu0
        %v2767 = vadd.f32 0.0, %v2766
        %v2768 = vpop.f32.mrb[0].mxu0
        %v2769 = vpop.f32.mrb[0].mxu0
        %v2770 = vadd.f32 0.0, %v2769
        %v2771 = vpop.f32.mrb[0].mxu0
        %2772 = vdwg.mxu0
        %v2773 = vadd.f32 %v2355, %v2679
        %v2774 = vadd.f32 %v2356, %v2682
        %v2775 = vadd.f32 %v2357, %v2687
        %v2776 = vadd.f32 %v2358, %v2690
        %v2777 = vadd.f32 %v2359, %v2695
        %v2778 = vadd.f32 %v2360, %v2698
        %v2779 = vadd.f32 %v2361, %v2703
        %v2780 = vadd.f32 %v2362, %v2706
        %v2781 = vadd.f32 %v2363, %v2711
        %v2782 = vadd.f32 %v2364, %v2714
        %v2783 = vadd.f32 %v2365, %v2719
        %v2784 = vadd.f32 %v2366, %v2722
        %v2785 = vadd.f32 %v2367, %v2727
        %v2786 = vadd.f32 %v2368, %v2730
        %v2787 = vadd.f32 %v2369, %v2735
        %v2788 = vadd.f32 %v2370, %v2738
        %v2789 = vadd.f32 %v2371, %v2743
        %v2790 = vadd.f32 %v2372, %v2746
        %v2791 = vadd.f32 %v2373, %v2751
        %v2792 = vadd.f32 %v2374, %v2754
        %v2793 = vadd.f32 %v2375, %v2759
        %v2794 = vadd.f32 %v2376, %v2762
        %v2795 = vadd.f32 %v2377, %v2767
        %v2796 = vadd.f32 %v2378, %v2770
        %v2797 = vld [vmem:[%s213 + $0x18] sm:$0xe]
        %s2798 = scalar_lea.vmem [#allocation4], 512
        %v2799 = vld [vmem:[%s2798] sm:$0xf]
        %v2800 = vld [vmem:[%s2798 + $0x4] sm:$0xf]
        %v2801 = vld [vmem:[%s2798 + $0x8] sm:$0xf]
        %v2802 = vld [vmem:[%s2798 + $0xc] sm:$0xf]
        %v2803 = vld [vmem:[%s2798 + $0x10] sm:$0xf]
        %v2804 = vld [vmem:[%s2798 + $0x14] sm:$0xf]
        %v2805 = vld [vmem:[%s2798 + $0x18] sm:$0xf]
        %v2806 = vld [vmem:[%s2798 + $0x1c] sm:$0xf]
        %v2807 = vld [vmem:[%s2798 + $0x20] sm:$0xf]
        %v2808 = vld [vmem:[%s2798 + $0x24] sm:$0xf]
        %v2809 = vld [vmem:[%s2798 + $0x28] sm:$0xf]
        %v2810 = vld [vmem:[%s2798 + $0x2c] sm:$0xf]
        %v2811 = vld [vmem:[%s2798 + $0x30] sm:$0xf]
        %v2812 = vld [vmem:[%s2798 + $0x34] sm:$0xf]
        %v2813 = vld [vmem:[%s2798 + $0x38] sm:$0xf]
        %v2814 = vld [vmem:[%s2798 + $0x3c] sm:$0xf]
        %v2816 = vunpack.c.l.b16 %v2797
        %v2817 = vpack.c.b16 %v2447, %v2816
        %v2818 = vrot.slane %v2817, 1
        %v2819 = vrot.slane %v2472, 1
        %v2820 = vsel %vm835, %v2818, %v2819
        %v2821 = vrot.slane %v2473, 1
        %v2822 = vsel %vm835, %v2819, %v2821
        %v2823 = vrot.slane %v2474, 1
        %v2824 = vsel %vm835, %v2821, %v2823
        %v2825 = vrot.slane %v2475, 1
        %v2826 = vsel %vm835, %v2823, %v2825
        %v2827 = vrot.slane %v2476, 1
        %v2828 = vsel %vm835, %v2825, %v2827
        %v2829 = vrot.slane %v2477, 1
        %v2830 = vsel %vm835, %v2827, %v2829
        %v2831 = vrot.slane %v2478, 1
        %v2832 = vsel %vm835, %v2829, %v2831
        %v2833 = vrot.slane %v2479, 1
        %v2834 = vsel %vm835, %v2831, %v2833
        %v2835 = vrot.slane %v2480, 1
        %v2836 = vsel %vm835, %v2833, %v2835
        %v2837 = vrot.slane %v2481, 1
        %v2838 = vsel %vm835, %v2835, %v2837
        %v2839 = vrot.slane %v2482, 1
        %v2840 = vsel %vm835, %v2837, %v2839
        %v2841 = vrot.slane %v2483, 1
        %v2842 = vsel %vm835, %v2839, %v2841
        %v2871 = vunpack.c.l.b16 %v2799
        %v2872 = vunpack.c.l.b16 %v2800
        %v2873 = vunpack.c.l.b16 %v2801
        %v2874 = vunpack.c.l.b16 %v2802
        %v2875 = vunpack.c.l.b16 %v2803
        %v2876 = vunpack.c.l.b16 %v2804
        %v2877 = vunpack.c.l.b16 %v2805
        %v2878 = vunpack.c.l.b16 %v2806
        %v2879 = vunpack.c.l.b16 %v2807
        %v2880 = vunpack.c.l.b16 %v2808
        %v2881 = vunpack.c.l.b16 %v2809
        %v2882 = vunpack.c.l.b16 %v2810
        %v2883 = vunpack.c.l.b16 %v2811
        %v2884 = vunpack.c.l.b16 %v2812
        %v2885 = vunpack.c.l.b16 %v2813
        %v2886 = vunpack.c.l.b16 %v2814
        %v2887 = vpack.c.b16 %v2872, %v2871
        %v2888 = vpack.c.b16 %v2874, %v2873
        %v2889 = vpack.c.b16 %v2876, %v2875
        %v2890 = vpack.c.b16 %v2878, %v2877
        %v2891 = vpack.c.b16 %v2880, %v2879
        %v2892 = vpack.c.b16 %v2882, %v2881
        %v2893 = vpack.c.b16 %v2884, %v2883
        %v2894 = vpack.c.b16 %v2886, %v2885
        %2903 = vmatprep.subr.bf16.mxu0 0
        %2904 = vmatpush1.bf16.msra.mxu0 %v2887
        %2905 = vmatprep.subr.bf16.mxu0 0
        %2906 = vmatpush1.bf16.msra.mxu0 %v2888
        %2907 = vmatprep.subr.bf16.mxu0 0
        %2908 = vmatpush1.bf16.msra.mxu0 %v2889
        %2909 = vmatprep.subr.bf16.mxu0 0
        %2910 = vmatpush1.bf16.msra.mxu0 %v2890
        %2911 = vmatprep.subr.bf16.mxu0 0
        %2912 = vmatpush1.bf16.msra.mxu0 %v2891
        %2913 = vmatprep.subr.bf16.mxu0 0
        %2914 = vmatpush1.bf16.msra.mxu0 %v2892
        %2915 = vmatprep.subr.bf16.mxu0 0
        %2916 = vmatpush1.bf16.msra.mxu0 %v2893
        %2917 = vmatprep.subr.bf16.mxu0 0
        %2918 = vmatpush1.bf16.msra.mxu0 %v2894
        %2919 = vmatprep.subr.bf16.mxu0 0
        %2920 = vmatpush1.bf16.msra.mxu0 0
        %2921 = vmatprep.subr.bf16.mxu0 0
        %2922 = vmatpush1.bf16.msra.mxu0 0
        %2923 = vmatprep.subr.bf16.mxu0 0
        %2924 = vmatpush1.bf16.msra.mxu0 0
        %2925 = vmatprep.subr.bf16.mxu0 0
        %2926 = vmatpush1.bf16.msra.mxu0 0
        %2927 = vmatprep.subr.bf16.mxu0 0
        %2928 = vmatpush1.bf16.msra.mxu0 0
        %2929 = vmatprep.subr.bf16.mxu0 0
        %2930 = vmatpush1.bf16.msra.mxu0 0
        %2931 = vmatprep.subr.bf16.mxu0 0
        %2932 = vmatpush1.bf16.msra.mxu0 0
        %2933 = vmatprep.subr.bf16.mxu0 0
        %2934 = vmatpush1.bf16.msra.mxu0 0
        %2935 = vmatprep.mubr.bf16.mxu0 0
        %2936 = vmatmul.mubr.bf16.gmra.mrb[0].mxu0 %v2820
        %v2937 = vpop.f32.mrb[0].mxu0
        %v2938 = vadd.f32 0.0, %v2937
        %v2939 = vpop.f32.mrb[0].mxu0
        %v2940 = vpop.f32.mrb[0].mxu0
        %v2941 = vadd.f32 0.0, %v2940
        %v2942 = vpop.f32.mrb[0].mxu0
        %2943 = vmatprep.mubr.bf16.mxu0 0
        %2944 = vmatmul.mubr.bf16.gmra.mrb[0].mxu0 %v2822
        %v2945 = vpop.f32.mrb[0].mxu0
        %v2946 = vadd.f32 0.0, %v2945
        %v2947 = vpop.f32.mrb[0].mxu0
        %v2948 = vpop.f32.mrb[0].mxu0
        %v2949 = vadd.f32 0.0, %v2948
        %v2950 = vpop.f32.mrb[0].mxu0
        %2951 = vmatprep.mubr.bf16.mxu0 0
        %2952 = vmatmul.mubr.bf16.gmra.mrb[0].mxu0 %v2824
        %v2953 = vpop.f32.mrb[0].mxu0
        %v2954 = vadd.f32 0.0, %v2953
        %v2955 = vpop.f32.mrb[0].mxu0
        %v2956 = vpop.f32.mrb[0].mxu0
        %v2957 = vadd.f32 0.0, %v2956
        %v2958 = vpop.f32.mrb[0].mxu0
        %2959 = vmatprep.mubr.bf16.mxu0 0
        %2960 = vmatmul.mubr.bf16.gmra.mrb[0].mxu0 %v2826
        %v2961 = vpop.f32.mrb[0].mxu0
        %v2962 = vadd.f32 0.0, %v2961
        %v2963 = vpop.f32.mrb[0].mxu0
        %v2964 = vpop.f32.mrb[0].mxu0
        %v2965 = vadd.f32 0.0, %v2964
        %v2966 = vpop.f32.mrb[0].mxu0
        %2967 = vmatprep.mubr.bf16.mxu0 0
        %2968 = vmatmul.mubr.bf16.gmra.mrb[0].mxu0 %v2828
        %v2969 = vpop.f32.mrb[0].mxu0
        %v2970 = vadd.f32 0.0, %v2969
        %v2971 = vpop.f32.mrb[0].mxu0
        %v2972 = vpop.f32.mrb[0].mxu0
        %v2973 = vadd.f32 0.0, %v2972
        %v2974 = vpop.f32.mrb[0].mxu0
        %2975 = vmatprep.mubr.bf16.mxu0 0
        %2976 = vmatmul.mubr.bf16.gmra.mrb[0].mxu0 %v2830
        %v2977 = vpop.f32.mrb[0].mxu0
        %v2978 = vadd.f32 0.0, %v2977
        %v2979 = vpop.f32.mrb[0].mxu0
        %v2980 = vpop.f32.mrb[0].mxu0
        %v2981 = vadd.f32 0.0, %v2980
        %v2982 = vpop.f32.mrb[0].mxu0
        %2983 = vmatprep.mubr.bf16.mxu0 0
        %2984 = vmatmul.mubr.bf16.gmra.mrb[0].mxu0 %v2832
        %v2985 = vpop.f32.mrb[0].mxu0
        %v2986 = vadd.f32 0.0, %v2985
        %v2987 = vpop.f32.mrb[0].mxu0
        %v2988 = vpop.f32.mrb[0].mxu0
        %v2989 = vadd.f32 0.0, %v2988
        %v2990 = vpop.f32.mrb[0].mxu0
        %2991 = vmatprep.mubr.bf16.mxu0 0
        %2992 = vmatmul.mubr.bf16.gmra.mrb[0].mxu0 %v2834
        %v2993 = vpop.f32.mrb[0].mxu0
        %v2994 = vadd.f32 0.0, %v2993
        %v2995 = vpop.f32.mrb[0].mxu0
        %v2996 = vpop.f32.mrb[0].mxu0
        %v2997 = vadd.f32 0.0, %v2996
        %v2998 = vpop.f32.mrb[0].mxu0
        %2999 = vmatprep.mubr.bf16.mxu0 0
        %3000 = vmatmul.mubr.bf16.gmra.mrb[0].mxu0 %v2836
        %v3001 = vpop.f32.mrb[0].mxu0
        %v3002 = vadd.f32 0.0, %v3001
        %v3003 = vpop.f32.mrb[0].mxu0
        %v3004 = vpop.f32.mrb[0].mxu0
        %v3005 = vadd.f32 0.0, %v3004
        %v3006 = vpop.f32.mrb[0].mxu0
        %3007 = vmatprep.mubr.bf16.mxu0 0
        %3008 = vmatmul.mubr.bf16.gmra.mrb[0].mxu0 %v2838
        %v3009 = vpop.f32.mrb[0].mxu0
        %v3010 = vadd.f32 0.0, %v3009
        %v3011 = vpop.f32.mrb[0].mxu0
        %v3012 = vpop.f32.mrb[0].mxu0
        %v3013 = vadd.f32 0.0, %v3012
        %v3014 = vpop.f32.mrb[0].mxu0
        %3015 = vmatprep.mubr.bf16.mxu0 0
        %3016 = vmatmul.mubr.bf16.gmra.mrb[0].mxu0 %v2840
        %v3017 = vpop.f32.mrb[0].mxu0
        %v3018 = vadd.f32 0.0, %v3017
        %v3019 = vpop.f32.mrb[0].mxu0
        %v3020 = vpop.f32.mrb[0].mxu0
        %v3021 = vadd.f32 0.0, %v3020
        %v3022 = vpop.f32.mrb[0].mxu0
        %3023 = vmatprep.mubr.bf16.mxu0 0
        %3024 = vmatmul.mubr.bf16.gmra.mrb[0].mxu0 %v2842
        %v3025 = vpop.f32.mrb[0].mxu0
        %v3026 = vadd.f32 0.0, %v3025
        %v3027 = vpop.f32.mrb[0].mxu0
        %v3028 = vpop.f32.mrb[0].mxu0
        %v3029 = vadd.f32 0.0, %v3028
        %v3030 = vpop.f32.mrb[0].mxu0
        %3031 = vdwg.mxu0
        %v3032 = vadd.f32 %v2773, %v2938
        %v3033 = vadd.f32 %v2774, %v2941
        %v3034 = vadd.f32 %v2775, %v2946
        %v3035 = vadd.f32 %v2776, %v2949
        %v3036 = vadd.f32 %v2777, %v2954
        %v3037 = vadd.f32 %v2778, %v2957
        %v3038 = vadd.f32 %v2779, %v2962
        %v3039 = vadd.f32 %v2780, %v2965
        %v3040 = vadd.f32 %v2781, %v2970
        %v3041 = vadd.f32 %v2782, %v2973
        %v3042 = vadd.f32 %v2783, %v2978
        %v3043 = vadd.f32 %v2784, %v2981
        %v3044 = vadd.f32 %v2785, %v2986
        %v3045 = vadd.f32 %v2786, %v2989
        %v3046 = vadd.f32 %v2787, %v2994
        %v3047 = vadd.f32 %v2788, %v2997
        %v3048 = vadd.f32 %v2789, %v3002
        %v3049 = vadd.f32 %v2790, %v3005
        %v3050 = vadd.f32 %v2791, %v3010
        %v3051 = vadd.f32 %v2792, %v3013
        %v3052 = vadd.f32 %v2793, %v3018
        %v3053 = vadd.f32 %v2794, %v3021
        %v3054 = vadd.f32 %v2795, %v3026
        %v3055 = vadd.f32 %v2796, %v3029
        %v3057 = vlaneseq
        %v3058 = vshrl.u32 %v3057, 7
        %v3059 = vsub.s32 0, %v3058
        %v3060 = vrot.slane %v210, %v3059
        %v3062 = vadd.f32 %v3032, %v3060
        %v3063 = vadd.f32 %v3033, %v3060
        %v3064 = vadd.f32 %v3034, %v3060
        %v3065 = vadd.f32 %v3035, %v3060
        %v3066 = vadd.f32 %v3036, %v3060
        %v3067 = vadd.f32 %v3037, %v3060
        %v3068 = vadd.f32 %v3038, %v3060
        %v3069 = vadd.f32 %v3039, %v3060
        %v3070 = vadd.f32 %v3040, %v3060
        %v3071 = vadd.f32 %v3041, %v3060
        %v3072 = vadd.f32 %v3042, %v3060
        %v3073 = vadd.f32 %v3043, %v3060
        %v3074 = vadd.f32 %v3044, %v3060
        %v3075 = vadd.f32 %v3045, %v3060
        %v3076 = vadd.f32 %v3046, %v3060
        %v3077 = vadd.f32 %v3047, %v3060
        %v3078 = vadd.f32 %v3048, %v3060
        %v3079 = vadd.f32 %v3049, %v3060
        %v3080 = vadd.f32 %v3050, %v3060
        %v3081 = vadd.f32 %v3051, %v3060
        %v3082 = vadd.f32 %v3052, %v3060
        %v3083 = vadd.f32 %v3053, %v3060
        %v3084 = vadd.f32 %v3054, %v3060
        %v3085 = vadd.f32 %v3055, %v3060
        %v3086 = vmax.f32 %v3062, 0.0
        %v3087 = vmax.f32 %v3063, 0.0
        %v3088 = vmax.f32 %v3064, 0.0
        %v3089 = vmax.f32 %v3065, 0.0
        %v3090 = vmax.f32 %v3066, 0.0
        %v3091 = vmax.f32 %v3067, 0.0
        %v3092 = vmax.f32 %v3068, 0.0
        %v3093 = vmax.f32 %v3069, 0.0
        %v3094 = vmax.f32 %v3070, 0.0
        %v3095 = vmax.f32 %v3071, 0.0
        %v3096 = vmax.f32 %v3072, 0.0
        %v3097 = vmax.f32 %v3073, 0.0
        %v3098 = vmax.f32 %v3074, 0.0
        %v3099 = vmax.f32 %v3075, 0.0
        %v3100 = vmax.f32 %v3076, 0.0
        %v3101 = vmax.f32 %v3077, 0.0
        %v3102 = vmax.f32 %v3078, 0.0
        %v3103 = vmax.f32 %v3079, 0.0
        %v3104 = vmax.f32 %v3080, 0.0
        %v3105 = vmax.f32 %v3081, 0.0
        %v3106 = vmax.f32 %v3082, 0.0
        %v3107 = vmax.f32 %v3083, 0.0
        %v3108 = vmax.f32 %v3084, 0.0
        %v3109 = vmax.f32 %v3085, 0.0
        %v3110 = vpack.c.bf16 %v3087, %v3086
        %v3111 = vpack.c.bf16 %v3089, %v3088
        %v3112 = vpack.c.bf16 %v3091, %v3090
        %v3113 = vpack.c.bf16 %v3093, %v3092
        %v3114 = vpack.c.bf16 %v3095, %v3094
        %v3115 = vpack.c.bf16 %v3097, %v3096
        %v3116 = vpack.c.bf16 %v3099, %v3098
        %v3117 = vpack.c.bf16 %v3101, %v3100
        %v3118 = vpack.c.bf16 %v3103, %v3102
        %v3119 = vpack.c.bf16 %v3105, %v3104
        %v3120 = vpack.c.bf16 %v3107, %v3106
        %v3121 = vpack.c.bf16 %v3109, %v3108
        %v3134 = vunpack.c.l.b16 %v3110
        %v3135 = vunpack.c.h.b16 %v3110
        %v3136 = vunpack.c.l.b16 %v3111
        %v3137 = vunpack.c.h.b16 %v3111
        %v3138 = vunpack.c.l.b16 %v3112
        %v3139 = vunpack.c.h.b16 %v3112
        %v3140 = vunpack.c.l.b16 %v3113
        %v3141 = vunpack.c.h.b16 %v3113
        %v3142 = vunpack.c.l.b16 %v3114
        %v3143 = vunpack.c.h.b16 %v3114
        %v3144 = vunpack.c.l.b16 %v3115
        %v3145 = vunpack.c.h.b16 %v3115
        %v3146 = vunpack.c.l.b16 %v3116
        %v3147 = vunpack.c.h.b16 %v3116
        %v3148 = vunpack.c.l.b16 %v3117
        %v3149 = vunpack.c.h.b16 %v3117
        %v3150 = vunpack.c.l.b16 %v3118
        %v3151 = vunpack.c.h.b16 %v3118
        %v3152 = vunpack.c.l.b16 %v3119
        %v3153 = vunpack.c.h.b16 %v3119
        %v3154 = vunpack.c.l.b16 %v3120
        %v3155 = vunpack.c.h.b16 %v3120
        %v3156 = vunpack.c.l.b16 %v3121
        %v3157 = vunpack.c.h.b16 %v3121
        %v3158 = vpack.c.b16 %v3134, %v3134
        %v3159 = vpack.c.b16 %v3135, %v3135
        %v3160 = vpack.c.b16 %v3136, %v3136
        %v3161 = vpack.c.b16 %v3137, %v3137
        %v3162 = vpack.c.b16 %v3138, %v3138
        %v3163 = vpack.c.b16 %v3139, %v3139
        %v3164 = vpack.c.b16 %v3140, %v3140
        %v3165 = vpack.c.b16 %v3141, %v3141
        %v3166 = vpack.c.b16 %v3142, %v3142
        %v3167 = vpack.c.b16 %v3143, %v3143
        %v3168 = vpack.c.b16 %v3144, %v3144
        %v3169 = vpack.c.b16 %v3145, %v3145
        %v3170 = vpack.c.b16 %v3146, %v3146
        %v3171 = vpack.c.b16 %v3147, %v3147
        %v3172 = vpack.c.b16 %v3148, %v3148
        %v3173 = vpack.c.b16 %v3149, %v3149
        %v3174 = vpack.c.b16 %v3150, %v3150
        %v3175 = vpack.c.b16 %v3151, %v3151
        %v3176 = vpack.c.b16 %v3152, %v3152
        %v3177 = vpack.c.b16 %v3153, %v3153
        %v3178 = vpack.c.b16 %v3154, %v3154
        %v3179 = vpack.c.b16 %v3155, %v3155
        %v3180 = vpack.c.b16 %v3156, %v3156
        %v3181 = vpack.c.b16 %v3157, %v3157
        %3206 = vst [vmem:[%s151] sm:$0xf] %v3158
        %3207 = vst [vmem:[%s151 + $0x4] sm:$0xf] %v3159
        %3208 = vst [vmem:[%s151 + $0x8] sm:$0xf] %v3160
        %3209 = vst [vmem:[%s151 + $0xc] sm:$0xf] %v3161
        %3210 = vst [vmem:[%s151 + $0x10] sm:$0xf] %v3162
        %3211 = vst [vmem:[%s151 + $0x14] sm:$0xf] %v3163
        %3212 = vst [vmem:[%s151 + $0x18] sm:$0xf] %v3164
        %3213 = vst [vmem:[%s151 + $0x1c] sm:$0xf] %v3165
        %3214 = vst [vmem:[%s151 + $0x20] sm:$0xf] %v3166
        %3215 = vst [vmem:[%s151 + $0x24] sm:$0xf] %v3167
        %3216 = vst [vmem:[%s151 + $0x28] sm:$0xf] %v3168
        %3217 = vst [vmem:[%s151 + $0x2c] sm:$0xf] %v3169
        %3218 = vst [vmem:[%s151 + $0x30] sm:$0xf] %v3170
        %3219 = vst [vmem:[%s151 + $0x34] sm:$0xf] %v3171
        %3220 = vst [vmem:[%s151 + $0x38] sm:$0xf] %v3172
        %3221 = vst [vmem:[%s151 + $0x3c] sm:$0xf] %v3173
        %3222 = vst [vmem:[%s151 + $0x40] sm:$0xf] %v3174
        %3223 = vst [vmem:[%s151 + $0x44] sm:$0xf] %v3175
        %3224 = vst [vmem:[%s151 + $0x48] sm:$0xf] %v3176
        %3225 = vst [vmem:[%s151 + $0x4c] sm:$0xf] %v3177
        %3226 = vst [vmem:[%s151 + $0x50] sm:$0xf] %v3178
        %3227 = vst [vmem:[%s151 + $0x54] sm:$0xf] %v3179
        %3228 = vst [vmem:[%s151 + $0x58] sm:$0xf] %v3180
        %3229 = vst [vmem:[%s151 + $0x5c] sm:$0xf] %v3181
        %s3230 = sand.u32 %s82, 1
        %s3231 = scalar_lea.sflag [#allocation6], %s3230
        %s3232 = sand.u32 %s82, 1
        %s3233 = smul.addr %s3232, 96
        %s3234 = scalar_lea.vmem [#allocation7], %s3233
        // Predicated region
        $region49: #{tpu_custom_call.1} parent=27 // pred_check
          %p3235 = pneg %p92
        $region50: #{tpu_custom_call.1} parent=27 // pred_check_branch
          %3237 = sbr.rel (%p3235) target = $region52
        $region51: #{tpu_custom_call.1} parent=27 // pred_region
          %s3238 = smul.u32 24, %s23
          %s3240 = ssub.s32 1536, 1536
          %3241 = vsyncadd %s3231, %s3240
          %s3242 = smul.addr %s22, 48
          %s3243 = sadd.s32 %s3238, %s3242
          %s3244 = smul.addr %s3243, 64
          %s3245 = scalar_lea.hbm %s3, %s3244
          %s3246 = sshll.u32 %s3234, 4
          %s3247 = int_to_ptr.vmem [resolvable:$true] %s3246
          %3252 = dma.vmem_to_hbm [thread:$0]  %s3247, 1536, %s3245, %s3231, 64, 64, 4
        $region52: #{tpu_custom_call.1} parent=27 // pred_fallthru
          _
      $region28: #{tpu_custom_call.1} parent=5 // pred_fallthru
        _
      %p3253 = scmp.le.s32.totalorder 2, %s13
      // Predicated region
      $region53: #{tpu_custom_call.1} parent=5 // pred_check
        %p3254 = pneg %p3253
      $region54: #{tpu_custom_call.1} parent=5 // pred_check_branch
        %3256 = sbr.rel (%p3254) target = $region56
      $region55: #{tpu_custom_call.1} parent=5 // pred_region
        %s3257 = ssub.s32 %s13, 2
        // Predicated region
        $region57: #{tpu_custom_call.1} parent=55 // pred_check
          %p3258 = pneg %p98
        $region58: #{tpu_custom_call.1} parent=55 // pred_check_branch
          %3260 = sbr.rel (%p3258) target = $region60
        $region59: #{tpu_custom_call.1} parent=55 // pred_region
          %s3261 = sand.u32 %s83, 1
          %s3262 = scalar_lea.sflag [#allocation6], %s3261
          %s3263 = sand.u32 %s83, 1
          %s3264 = smul.addr %s3263, 96
          %s3265 = scalar_lea.vmem [#allocation7], %s3264
          %3266 = dma.done %s3262, 1536
        $region60: #{tpu_custom_call.1} parent=55 // pred_fallthru
          _
      $region56: #{tpu_custom_call.1} parent=5 // pred_fallthru
        _
    $region6: #{tpu_custom_call.1} parent=1 // loop_footer
      %s17 = sadd.s32 1, %s13
    $region7: #{tpu_custom_call.1} parent=1 // loop_footer_branch
      %12 = sbr.rel target = $region3
    $region8: #{tpu_custom_call.1} parent=1 // loop_exit
      _
    %3267 = vsyncpa [#allocation5], 1
    %s3268 = scalar_lea.sflag [#allocation5], 1
    %3269 = vsyncpa %s3268, 1
    %3270 = vsyncpa [#allocation6], 1
    %s3271 = scalar_lea.sflag [#allocation6], 1
    %3272 = vsyncpa %s3271, 1
  %3273 = vsyncmov [#allocation3]
  %s3274 = vpop.sfrf %3273
  %p3275 = scmp.eq.s32.totalorder %s3274, 0
  %p3276 = pneg %p3275
  %3278 = shalt.err (%p3276)
  %s3279 = scalar_lea.sflag [#allocation3], 1
  %3280 = vsyncmov %s3279
  %s3281 = vpop.sfrf %3280
  %p3282 = scmp.eq.s32.totalorder %s3281, 0
  %p3283 = pneg %p3282
  %3285 = shalt.err (%p3283)

</llo_original>
